<compile_context>
chip_gen: v7x
topology: tpu7x:2x2x1
jax: 0.10.0
libtpu: 0.0.40
codegen_flags: <defaults>
</compile_context>

<pallas_src>
import math
import functools

import jax
import jax.numpy as jnp
from jax.experimental import pallas as pl
from jax.experimental.pallas import tpu as pltpu

_LN_EPS = 1e-5          # PyTorch TransformerEncoderLayer default
_NUM_LAYERS = 2
_DIM_FF = 2048


def _layer_norm(y, g, b, eps):
    mu = jnp.mean(y, axis=-1, keepdims=True)
    var = jnp.mean((y - mu) ** 2, axis=-1, keepdims=True)
    return (y - mu) * jax.lax.rsqrt(var + eps) * g + b


# ------------------------------------------------------------------------
# Single fused kernel: whole forward pass for one batch element per grid step
# ------------------------------------------------------------------------
def _fused_forward_kernel(x_ref, pe_ref, ffw_ref, ffb_ref,
                          wq_ref, wk_ref, wv_ref, bq_ref, bk_ref, bv_ref,
                          wo_ref, bo_ref, ln1w_ref, ln1b_ref,
                          w1_ref, b1_ref, w2_ref, b2_ref, ln2w_ref, ln2b_ref,
                          hw_ref, hb_ref, o_ref, *, scale, eps, num_layers):
    # ---- ffEncode + positional encoding ---------------------------------
    x = x_ref[0].astype(jnp.bfloat16)                          # [S, Din]
    h = jnp.dot(x, ffw_ref[...], preferred_element_type=jnp.float32)
    h = h + ffb_ref[...] + pe_ref[...]                         # [S, D] f32

    # ---- 2x TransformerEncoderLayer (post-norm, nhead=1, ReLU) ----------
    for l in range(num_layers):
        hb = h.astype(jnp.bfloat16)
        q = jnp.dot(hb, wq_ref[l], preferred_element_type=jnp.float32) + bq_ref[l]
        k = jnp.dot(hb, wk_ref[l], preferred_element_type=jnp.float32) + bk_ref[l]
        v = jnp.dot(hb, wv_ref[l], preferred_element_type=jnp.float32) + bv_ref[l]

        # q @ k^T via dot_general (contract last axes, no explicit transpose)
        s = jax.lax.dot_general(q.astype(jnp.bfloat16), k.astype(jnp.bfloat16),
                                (((1,), (1,)), ((), ())),
                                preferred_element_type=jnp.float32) * scale
        m = jnp.max(s, axis=-1, keepdims=True)
        p = jnp.exp(s - m)
        p = p * pl.reciprocal(jnp.sum(p, axis=-1, keepdims=True), approx=True)

        a = jnp.dot(p.astype(jnp.bfloat16), v.astype(jnp.bfloat16),
                    preferred_element_type=jnp.float32)
        attn = jnp.dot(a.astype(jnp.bfloat16), wo_ref[l],
                       preferred_element_type=jnp.float32) + bo_ref[l]

        # residual + LayerNorm1 (f32)
        h = _layer_norm(h + attn, ln1w_ref[l], ln1b_ref[l], eps)

        # FFN: lin1(2048) + ReLU + lin2 — one shot, no F-grid / accumulator
        hb = h.astype(jnp.bfloat16)
        f = jnp.dot(hb, w1_ref[l], preferred_element_type=jnp.float32) + b1_ref[l]
        f = jnp.maximum(f, 0.0)
        ffn = jnp.dot(f.astype(jnp.bfloat16), w2_ref[l],
                      preferred_element_type=jnp.float32) + b2_ref[l]

        # residual + LayerNorm2 (f32)
        h = _layer_norm(h + ffn, ln2w_ref[l], ln2b_ref[l], eps)

    # ---- actionHead ------------------------------------------------------
    o_ref[0] = jnp.dot(h.astype(jnp.bfloat16), hw_ref[...],
                       preferred_element_type=jnp.float32) + hb_ref[...]


def _replicated_spec(arr):
    n = arr.ndim
    return pl.BlockSpec(arr.shape, lambda b, n=n: (0,) * n)


def model_forward(x, params, eps=_LN_EPS):
    """x: [batch, seq, input_dim] -> (mean [seq, batch, output_dim], std)."""
    B, S, Din = x.shape
    D = params["ff_w"].shape[1]
    N = params["head_w"].shape[1]
    L = params["wq"].shape[0]
    pe = params["pe"][:S]                                      # [S, D]

    weight_args = (
        pe, params["ff_w"], params["ff_b"],
        params["wq"], params["wk"], params["wv"],
        params["bq"], params["bk"], params["bv"],
        params["wo"], params["bo"], params["ln1_w"], params["ln1_b"],
        params["w1"], params["b1"], params["w2"], params["b2"],
        params["ln2_w"], params["ln2_b"],
        params["head_w"], params["head_b"],
    )

    out = pl.pallas_call(
        functools.partial(_fused_forward_kernel, scale=1.0 / math.sqrt(D),
                          eps=eps, num_layers=L),
        out_shape=jax.ShapeDtypeStruct((B, S, N), jnp.float32),
        grid=(B,),
        in_specs=[pl.BlockSpec((1, S, Din), lambda b: (b, 0, 0))]
                 + [_replicated_spec(a) for a in weight_args],
        out_specs=pl.BlockSpec((1, S, N), lambda b: (b, 0, 0)),
        compiler_params=pltpu.CompilerParams(dimension_semantics=("parallel",)),
    )(x, *weight_args)

    mean = jnp.transpose(out, (1, 0, 2))                       # [S, B, out]
    # TODO(synk): torch.distributions.Normal has no tensor-op equivalent;
    # the distribution is fully determined by (mean, std=0.1) returned here.
    return mean, jnp.float32(0.1)


# ----------------------------- model params --------------------------------
def make_pe(max_len, d_model):
    # Precomputed once at init (hoisted out of the forward pass).
    # NOTE: assumes even d_model (matches the given config).
    position = jnp.arange(max_len, dtype=jnp.float32)[:, None]
    div_term = jnp.exp(jnp.arange(0, d_model, 2, dtype=jnp.float32)
                       * (-math.log(10000.0) / d_model))
    angles = position * div_term
    pe = jnp.zeros((max_len, d_model), jnp.float32)
    pe = pe.at[:, 0::2].set(jnp.sin(angles))
    pe = pe.at[:, 1::2].set(jnp.cos(angles))
    return pe


def init_params(key, d_model, output_dim, dim_ff=_DIM_FF,
                num_layers=_NUM_LAYERS, max_len=512):
    ks = iter(jax.random.split(key, 64))

    def w(shape):  # stored pre-transposed [in, out], bf16 (MXU operand dtype)
        return (0.02 * jax.random.normal(next(ks), shape, jnp.float32)
                ).astype(jnp.bfloat16)

    def b(shape):
        return 0.02 * jax.random.normal(next(ks), shape, jnp.float32)

    D, F, L = d_model, dim_ff, num_layers
    return {
        "ff_w": w((D, D)), "ff_b": b((1, D)),
        "pe": make_pe(max_len, D),
        # per-layer weights stacked on a leading layer axis (static indexing)
        "wq": w((L, D, D)), "wk": w((L, D, D)), "wv": w((L, D, D)),
        "bq": b((L, 1, D)), "bk": b((L, 1, D)), "bv": b((L, 1, D)),
        "wo": w((L, D, D)), "bo": b((L, 1, D)),
        "ln1_w": jnp.ones((L, 1, D), jnp.float32),
        "ln1_b": jnp.zeros((L, 1, D), jnp.float32),
        "w1": w((L, D, F)), "b1": b((L, 1, F)),
        "w2": w((L, F, D)), "b2": b((L, 1, D)),
        "ln2_w": jnp.ones((L, 1, D), jnp.float32),
        "ln2_b": jnp.zeros((L, 1, D), jnp.float32),
        "head_w": w((D, output_dim)), "head_b": b((1, output_dim)),
    }


# ----------------------- pure-JAX reference (f32) --------------------------
def reference_forward(x, params, eps=_LN_EPS):
    f32 = lambda a: a.astype(jnp.float32)
    S = x.shape[1]
    D = params["ff_w"].shape[1]
    h = x @ f32(params["ff_w"]) + params["ff_b"] + params["pe"][:S][None]
    scale = 1.0 / math.sqrt(D)
    for l in range(params["wq"].shape[0]):
        q = h @ f32(params["wq"][l]) + params["bq"][l]
        k = h @ f32(params["wk"][l]) + params["bk"][l]
        v = h @ f32(params["wv"][l]) + params["bv"][l]
        s = jnp.einsum("bqd,bkd->bqk", q, k) * scale
        p = jax.nn.softmax(s, axis=-1)
        a = jnp.einsum("bqk,bkd->bqd", p, v)
        attn = a @ f32(params["wo"][l]) + params["bo"][l]
        h = _layer_norm(h + attn, params["ln1_w"][l], params["ln1_b"][l], eps)
        f = jnp.maximum(h @ f32(params["w1"][l]) + params["b1"][l], 0.0)
        ffn = f @ f32(params["w2"][l]) + params["b2"][l]
        h = _layer_norm(h + ffn, params["ln2_w"][l], params["ln2_b"][l], eps)
    out = h @ f32(params["head_w"]) + params["head_b"]
    return jnp.transpose(out, (1, 0, 2))


if __name__ == "__main__":
    key = jax.random.PRNGKey(0)
    kx, kp = jax.random.split(key)

    batch, seq, input_dim, output_dim = 2, 8, 32, 4
    x = jax.random.normal(kx, (batch, seq, input_dim), jnp.float32)
    params = init_params(kp, input_dim, output_dim)

    fwd = jax.jit(model_forward)
    mean, std = fwd(x, params)
    mean = jax.block_until_ready(mean)

    assert mean.shape == (seq, batch, output_dim)
    assert jnp.all(jnp.isfinite(mean))

    # loose correctness check vs. f32 reference (kernel uses bf16 MXU operands)
    ref = reference_forward(x, params)
    assert jnp.max(jnp.abs(mean - ref)) < 0.1

    print("KERNEL_OK")
</pallas_src>

<mosaic_0001>
module attributes {stable_mosaic.version = 11 : i64} {
  func.func @_fused_forward_kernel(%arg0: i32, %arg1: memref<1x8x32xf32, #tpu.memory_space<vmem>>, %arg2: memref<8x32xf32, #tpu.memory_space<vmem>>, %arg3: memref<32x32xbf16, #tpu.memory_space<vmem>>, %arg4: memref<1x32xf32, #tpu.memory_space<vmem>>, %arg5: memref<2x32x32xbf16, #tpu.memory_space<vmem>>, %arg6: memref<2x32x32xbf16, #tpu.memory_space<vmem>>, %arg7: memref<2x32x32xbf16, #tpu.memory_space<vmem>>, %arg8: memref<2x1x32xf32, #tpu.memory_space<vmem>>, %arg9: memref<2x1x32xf32, #tpu.memory_space<vmem>>, %arg10: memref<2x1x32xf32, #tpu.memory_space<vmem>>, %arg11: memref<2x32x32xbf16, #tpu.memory_space<vmem>>, %arg12: memref<2x1x32xf32, #tpu.memory_space<vmem>>, %arg13: memref<2x1x32xf32, #tpu.memory_space<vmem>>, %arg14: memref<2x1x32xf32, #tpu.memory_space<vmem>>, %arg15: memref<2x32x2048xbf16, #tpu.memory_space<vmem>>, %arg16: memref<2x1x2048xf32, #tpu.memory_space<vmem>>, %arg17: memref<2x2048x32xbf16, #tpu.memory_space<vmem>>, %arg18: memref<2x1x32xf32, #tpu.memory_space<vmem>>, %arg19: memref<2x1x32xf32, #tpu.memory_space<vmem>>, %arg20: memref<2x1x32xf32, #tpu.memory_space<vmem>>, %arg21: memref<32x4xbf16, #tpu.memory_space<vmem>>, %arg22: memref<1x4xf32, #tpu.memory_space<vmem>>, %arg23: memref<1x8x4xf32, #tpu.memory_space<vmem>>) attributes {dimension_semantics = [#tpu.dimension_semantics<parallel>], iteration_bounds = array<i64: 2>, scalar_prefetch = 0 : i64, scratch_operands = 0 : i64, tpu.core_type = #tpu.core_type<tc>, window_params = [{transform_indices = @transform_0, window_bounds = array<i64: 1, 8, 32>}, {pipeline_mode = #tpu.pipeline_mode<synchronous>, transform_indices = @transform_1, window_bounds = array<i64: 8, 32>}, {pipeline_mode = #tpu.pipeline_mode<synchronous>, transform_indices = @transform_2, window_bounds = array<i64: 32, 32>}, {pipeline_mode = #tpu.pipeline_mode<synchronous>, transform_indices = @transform_3, window_bounds = array<i64: 1, 32>}, {pipeline_mode = #tpu.pipeline_mode<synchronous>, transform_indices = @transform_4, window_bounds = array<i64: 2, 32, 32>}, {pipeline_mode = #tpu.pipeline_mode<synchronous>, transform_indices = @transform_5, window_bounds = array<i64: 2, 32, 32>}, {pipeline_mode = #tpu.pipeline_mode<synchronous>, transform_indices = @transform_6, window_bounds = array<i64: 2, 32, 32>}, {pipeline_mode = #tpu.pipeline_mode<synchronous>, transform_indices = @transform_7, window_bounds = array<i64: 2, 1, 32>}, {pipeline_mode = #tpu.pipeline_mode<synchronous>, transform_indices = @transform_8, window_bounds = array<i64: 2, 1, 32>}, {pipeline_mode = #tpu.pipeline_mode<synchronous>, transform_indices = @transform_9, window_bounds = array<i64: 2, 1, 32>}, {pipeline_mode = #tpu.pipeline_mode<synchronous>, transform_indices = @transform_10, window_bounds = array<i64: 2, 32, 32>}, {pipeline_mode = #tpu.pipeline_mode<synchronous>, transform_indices = @transform_11, window_bounds = array<i64: 2, 1, 32>}, {pipeline_mode = #tpu.pipeline_mode<synchronous>, transform_indices = @transform_12, window_bounds = array<i64: 2, 1, 32>}, {pipeline_mode = #tpu.pipeline_mode<synchronous>, transform_indices = @transform_13, window_bounds = array<i64: 2, 1, 32>}, {pipeline_mode = #tpu.pipeline_mode<synchronous>, transform_indices = @transform_14, window_bounds = array<i64: 2, 32, 2048>}, {pipeline_mode = #tpu.pipeline_mode<synchronous>, transform_indices = @transform_15, window_bounds = array<i64: 2, 1, 2048>}, {pipeline_mode = #tpu.pipeline_mode<synchronous>, transform_indices = @transform_16, window_bounds = array<i64: 2, 2048, 32>}, {pipeline_mode = #tpu.pipeline_mode<synchronous>, transform_indices = @transform_17, window_bounds = array<i64: 2, 1, 32>}, {pipeline_mode = #tpu.pipeline_mode<synchronous>, transform_indices = @transform_18, window_bounds = array<i64: 2, 1, 32>}, {pipeline_mode = #tpu.pipeline_mode<synchronous>, transform_indices = @transform_19, window_bounds = array<i64: 2, 1, 32>}, {pipeline_mode = #tpu.pipeline_mode<synchronous>, transform_indices = @transform_20, window_bounds = array<i64: 32, 4>}, {pipeline_mode = #tpu.pipeline_mode<synchronous>, transform_indices = @transform_21, window_bounds = array<i64: 1, 4>}, {transform_indices = @transform_22, window_bounds = array<i64: 1, 8, 4>}]} {
    %c0 = arith.constant 0 : index
    %c0_0 = arith.constant 0 : index
    %c0_1 = arith.constant 0 : index
    %0 = vector.load %arg1[%c0, %c0_0, %c0_1] : memref<1x8x32xf32, #tpu.memory_space<vmem>>, vector<1x8x32xf32>
    %1 = vector.shape_cast %0 : vector<1x8x32xf32> to vector<8x32xf32>
    %2 = arith.truncf %1 : vector<8x32xf32> to vector<8x32xbf16>
    %c0_2 = arith.constant 0 : index
    %c0_3 = arith.constant 0 : index
    %3 = vector.load %arg3[%c0_2, %c0_3] : memref<32x32xbf16, #tpu.memory_space<vmem>>, vector<32x32xbf16>
    %cst = arith.constant dense<0.000000e+00> : vector<8x32xf32>
    %4 = tpu.matmul %2, %3, %cst {dimension_numbers = #tpu.dot_dimension_numbers<[1], [0], [0], [1], [0, 0, 1, 1], [], []>} : vector<8x32xbf16>, vector<32x32xbf16>, vector<8x32xf32> -> vector<8x32xf32>
    %c0_4 = arith.constant 0 : index
    %c0_5 = arith.constant 0 : index
    %5 = vector.load %arg4[%c0_4, %c0_5] : memref<1x32xf32, #tpu.memory_space<vmem>>, vector<1x32xf32>
    %6 = vector.broadcast %5 : vector<1x32xf32> to vector<8x32xf32>
    %7 = arith.addf %4, %6 : vector<8x32xf32>
    %c0_6 = arith.constant 0 : index
    %c0_7 = arith.constant 0 : index
    %8 = vector.load %arg2[%c0_6, %c0_7] : memref<8x32xf32, #tpu.memory_space<vmem>>, vector<8x32xf32>
    %9 = arith.addf %7, %8 : vector<8x32xf32>
    %10 = arith.truncf %9 : vector<8x32xf32> to vector<8x32xbf16>
    %c0_8 = arith.constant 0 : index
    %c0_9 = arith.constant 0 : index
    %c0_10 = arith.constant 0 : index
    %11 = vector.load %arg5[%c0_8, %c0_9, %c0_10] : memref<2x32x32xbf16, #tpu.memory_space<vmem>>, vector<1x32x32xbf16>
    %12 = vector.shape_cast %11 : vector<1x32x32xbf16> to vector<32x32xbf16>
    %cst_11 = arith.constant dense<0.000000e+00> : vector<8x32xf32>
    %13 = tpu.matmul %10, %12, %cst_11 {dimension_numbers = #tpu.dot_dimension_numbers<[1], [0], [0], [1], [0, 0, 1, 1], [], []>} : vector<8x32xbf16>, vector<32x32xbf16>, vector<8x32xf32> -> vector<8x32xf32>
    %c0_12 = arith.constant 0 : index
    %c0_13 = arith.constant 0 : index
    %c0_14 = arith.constant 0 : index
    %14 = vector.load %arg8[%c0_12, %c0_13, %c0_14] : memref<2x1x32xf32, #tpu.memory_space<vmem>>, vector<1x1x32xf32>
    %15 = vector.shape_cast %14 : vector<1x1x32xf32> to vector<1x32xf32>
    %16 = vector.broadcast %15 : vector<1x32xf32> to vector<8x32xf32>
    %17 = arith.addf %13, %16 : vector<8x32xf32>
    %c0_15 = arith.constant 0 : index
    %c0_16 = arith.constant 0 : index
    %c0_17 = arith.constant 0 : index
    %18 = vector.load %arg6[%c0_15, %c0_16, %c0_17] : memref<2x32x32xbf16, #tpu.memory_space<vmem>>, vector<1x32x32xbf16>
    %19 = vector.shape_cast %18 : vector<1x32x32xbf16> to vector<32x32xbf16>
    %cst_18 = arith.constant dense<0.000000e+00> : vector<8x32xf32>
    %20 = tpu.matmul %10, %19, %cst_18 {dimension_numbers = #tpu.dot_dimension_numbers<[1], [0], [0], [1], [0, 0, 1, 1], [], []>} : vector<8x32xbf16>, vector<32x32xbf16>, vector<8x32xf32> -> vector<8x32xf32>
    %c0_19 = arith.constant 0 : index
    %c0_20 = arith.constant 0 : index
    %c0_21 = arith.constant 0 : index
    %21 = vector.load %arg9[%c0_19, %c0_20, %c0_21] : memref<2x1x32xf32, #tpu.memory_space<vmem>>, vector<1x1x32xf32>
    %22 = vector.shape_cast %21 : vector<1x1x32xf32> to vector<1x32xf32>
    %23 = vector.broadcast %22 : vector<1x32xf32> to vector<8x32xf32>
    %24 = arith.addf %20, %23 : vector<8x32xf32>
    %c0_22 = arith.constant 0 : index
    %c0_23 = arith.constant 0 : index
    %c0_24 = arith.constant 0 : index
    %25 = vector.load %arg7[%c0_22, %c0_23, %c0_24] : memref<2x32x32xbf16, #tpu.memory_space<vmem>>, vector<1x32x32xbf16>
    %26 = vector.shape_cast %25 : vector<1x32x32xbf16> to vector<32x32xbf16>
    %cst_25 = arith.constant dense<0.000000e+00> : vector<8x32xf32>
    %27 = tpu.matmul %10, %26, %cst_25 {dimension_numbers = #tpu.dot_dimension_numbers<[1], [0], [0], [1], [0, 0, 1, 1], [], []>} : vector<8x32xbf16>, vector<32x32xbf16>, vector<8x32xf32> -> vector<8x32xf32>
    %c0_26 = arith.constant 0 : index
    %c0_27 = arith.constant 0 : index
    %c0_28 = arith.constant 0 : index
    %28 = vector.load %arg10[%c0_26, %c0_27, %c0_28] : memref<2x1x32xf32, #tpu.memory_space<vmem>>, vector<1x1x32xf32>
    %29 = vector.shape_cast %28 : vector<1x1x32xf32> to vector<1x32xf32>
    %30 = vector.broadcast %29 : vector<1x32xf32> to vector<8x32xf32>
    %31 = arith.addf %27, %30 : vector<8x32xf32>
    %32 = arith.truncf %17 : vector<8x32xf32> to vector<8x32xbf16>
    %33 = arith.truncf %24 : vector<8x32xf32> to vector<8x32xbf16>
    %cst_29 = arith.constant dense<0.000000e+00> : vector<8x8xf32>
    %34 = tpu.matmul %32, %33, %cst_29 {dimension_numbers = #tpu.dot_dimension_numbers<[1], [1], [0], [0], [0, 0, 1, 0], [], []>} : vector<8x32xbf16>, vector<8x32xbf16>, vector<8x8xf32> -> vector<8x8xf32>
    %cst_30 = arith.constant 0.176776692 : f32
    %35 = vector.broadcast %cst_30 : f32 to vector<8x8xf32>
    %36 = arith.mulf %34, %35 : vector<8x8xf32>
    %cst_31 = arith.constant dense<0xFF800000> : vector<8xf32>
    %37 = vector.multi_reduction <maximumf>, %36, %cst_31 [1] : vector<8x8xf32> to vector<8xf32>
    %38 = vector.shape_cast %37 : vector<8xf32> to vector<8x1xf32>
    %39 = vector.broadcast %38 : vector<8x1xf32> to vector<8x8xf32>
    %40 = arith.subf %36, %39 : vector<8x8xf32>
    %41 = math.exp %40 : vector<8x8xf32>
    %cst_32 = arith.constant dense<0.000000e+00> : vector<8xf32>
    %42 = vector.multi_reduction <add>, %41, %cst_32 [1] : vector<8x8xf32> to vector<8xf32>
    %43 = vector.shape_cast %42 : vector<8xf32> to vector<8x1xf32>
    %44 = tpu.reciprocal %43 {approx = true} : vector<8x1xf32> -> vector<8x1xf32>
    %45 = vector.broadcast %44 : vector<8x1xf32> to vector<8x8xf32>
    %46 = arith.mulf %41, %45 : vector<8x8xf32>
    %47 = arith.truncf %46 : vector<8x8xf32> to vector<8x8xbf16>
    %48 = arith.truncf %31 : vector<8x32xf32> to vector<8x32xbf16>
    %cst_33 = arith.constant dense<0.000000e+00> : vector<8x32xf32>
    %49 = tpu.matmul %47, %48, %cst_33 {dimension_numbers = #tpu.dot_dimension_numbers<[1], [0], [0], [1], [0, 0, 1, 1], [], []>} : vector<8x8xbf16>, vector<8x32xbf16>, vector<8x32xf32> -> vector<8x32xf32>
    %50 = arith.truncf %49 : vector<8x32xf32> to vector<8x32xbf16>
    %c0_34 = arith.constant 0 : index
    %c0_35 = arith.constant 0 : index
    %c0_36 = arith.constant 0 : index
    %51 = vector.load %arg11[%c0_34, %c0_35, %c0_36] : memref<2x32x32xbf16, #tpu.memory_space<vmem>>, vector<1x32x32xbf16>
    %52 = vector.shape_cast %51 : vector<1x32x32xbf16> to vector<32x32xbf16>
    %cst_37 = arith.constant dense<0.000000e+00> : vector<8x32xf32>
    %53 = tpu.matmul %50, %52, %cst_37 {dimension_numbers = #tpu.dot_dimension_numbers<[1], [0], [0], [1], [0, 0, 1, 1], [], []>} : vector<8x32xbf16>, vector<32x32xbf16>, vector<8x32xf32> -> vector<8x32xf32>
    %c0_38 = arith.constant 0 : index
    %c0_39 = arith.constant 0 : index
    %c0_40 = arith.constant 0 : index
    %54 = vector.load %arg12[%c0_38, %c0_39, %c0_40] : memref<2x1x32xf32, #tpu.memory_space<vmem>>, vector<1x1x32xf32>
    %55 = vector.shape_cast %54 : vector<1x1x32xf32> to vector<1x32xf32>
    %56 = vector.broadcast %55 : vector<1x32xf32> to vector<8x32xf32>
    %57 = arith.addf %53, %56 : vector<8x32xf32>
    %58 = arith.addf %9, %57 : vector<8x32xf32>
    %c0_41 = arith.constant 0 : index
    %c0_42 = arith.constant 0 : index
    %c0_43 = arith.constant 0 : index
    %59 = vector.load %arg13[%c0_41, %c0_42, %c0_43] : memref<2x1x32xf32, #tpu.memory_space<vmem>>, vector<1x1x32xf32>
    %60 = vector.shape_cast %59 : vector<1x1x32xf32> to vector<1x32xf32>
    %c0_44 = arith.constant 0 : index
    %c0_45 = arith.constant 0 : index
    %c0_46 = arith.constant 0 : index
    %61 = vector.load %arg14[%c0_44, %c0_45, %c0_46] : memref<2x1x32xf32, #tpu.memory_space<vmem>>, vector<1x1x32xf32>
    %62 = vector.shape_cast %61 : vector<1x1x32xf32> to vector<1x32xf32>
    %cst_47 = arith.constant dense<0.000000e+00> : vector<8xf32>
    %63 = vector.multi_reduction <add>, %58, %cst_47 [1] : vector<8x32xf32> to vector<8xf32>
    %64 = vector.shape_cast %63 : vector<8xf32> to vector<8x1xf32>
    %cst_48 = arith.constant 3.200000e+01 : f32
    %65 = vector.broadcast %cst_48 : f32 to vector<8x1xf32>
    %66 = arith.divf %64, %65 : vector<8x1xf32>
    %67 = vector.broadcast %66 : vector<8x1xf32> to vector<8x32xf32>
    %68 = arith.subf %58, %67 : vector<8x32xf32>
    %69 = arith.mulf %68, %68 : vector<8x32xf32>
    %cst_49 = arith.constant dense<0.000000e+00> : vector<8xf32>
    %70 = vector.multi_reduction <add>, %69, %cst_49 [1] : vector<8x32xf32> to vector<8xf32>
    %71 = vector.shape_cast %70 : vector<8xf32> to vector<8x1xf32>
    %cst_50 = arith.constant 3.200000e+01 : f32
    %72 = vector.broadcast %cst_50 : f32 to vector<8x1xf32>
    %73 = arith.divf %71, %72 : vector<8x1xf32>
    %74 = vector.broadcast %66 : vector<8x1xf32> to vector<8x32xf32>
    %75 = arith.subf %58, %74 : vector<8x32xf32>
    %cst_51 = arith.constant 9.99999974E-6 : f32
    %76 = vector.broadcast %cst_51 : f32 to vector<8x1xf32>
    %77 = arith.addf %73, %76 : vector<8x1xf32>
    %78 = math.rsqrt %77 : vector<8x1xf32>
    %79 = vector.broadcast %78 : vector<8x1xf32> to vector<8x32xf32>
    %80 = arith.mulf %75, %79 : vector<8x32xf32>
    %81 = vector.broadcast %60 : vector<1x32xf32> to vector<8x32xf32>
    %82 = arith.mulf %80, %81 : vector<8x32xf32>
    %83 = vector.broadcast %62 : vector<1x32xf32> to vector<8x32xf32>
    %84 = arith.addf %82, %83 : vector<8x32xf32>
    %85 = arith.truncf %84 : vector<8x32xf32> to vector<8x32xbf16>
    %c0_52 = arith.constant 0 : index
    %c0_53 = arith.constant 0 : index
    %c0_54 = arith.constant 0 : index
    %86 = vector.load %arg15[%c0_52, %c0_53, %c0_54] : memref<2x32x2048xbf16, #tpu.memory_space<vmem>>, vector<1x32x2048xbf16>
    %87 = vector.shape_cast %86 : vector<1x32x2048xbf16> to vector<32x2048xbf16>
    %cst_55 = arith.constant dense<0.000000e+00> : vector<8x2048xf32>
    %88 = tpu.matmul %85, %87, %cst_55 {dimension_numbers = #tpu.dot_dimension_numbers<[1], [0], [0], [1], [0, 0, 1, 1], [], []>} : vector<8x32xbf16>, vector<32x2048xbf16>, vector<8x2048xf32> -> vector<8x2048xf32>
    %c0_56 = arith.constant 0 : index
    %c0_57 = arith.constant 0 : index
    %c0_58 = arith.constant 0 : index
    %89 = vector.load %arg16[%c0_56, %c0_57, %c0_58] : memref<2x1x2048xf32, #tpu.memory_space<vmem>>, vector<1x1x2048xf32>
    %90 = vector.shape_cast %89 : vector<1x1x2048xf32> to vector<1x2048xf32>
    %91 = vector.broadcast %90 : vector<1x2048xf32> to vector<8x2048xf32>
    %92 = arith.addf %88, %91 : vector<8x2048xf32>
    %cst_59 = arith.constant 0.000000e+00 : f32
    %93 = vector.broadcast %cst_59 : f32 to vector<8x2048xf32>
    %94 = arith.maximumf %92, %93 : vector<8x2048xf32>
    %95 = arith.truncf %94 : vector<8x2048xf32> to vector<8x2048xbf16>
    %c0_60 = arith.constant 0 : index
    %c0_61 = arith.constant 0 : index
    %c0_62 = arith.constant 0 : index
    %96 = vector.load %arg17[%c0_60, %c0_61, %c0_62] : memref<2x2048x32xbf16, #tpu.memory_space<vmem>>, vector<1x2048x32xbf16>
    %97 = vector.shape_cast %96 : vector<1x2048x32xbf16> to vector<2048x32xbf16>
    %cst_63 = arith.constant dense<0.000000e+00> : vector<8x32xf32>
    %98 = tpu.matmul %95, %97, %cst_63 {dimension_numbers = #tpu.dot_dimension_numbers<[1], [0], [0], [1], [0, 0, 1, 1], [], []>} : vector<8x2048xbf16>, vector<2048x32xbf16>, vector<8x32xf32> -> vector<8x32xf32>
    %c0_64 = arith.constant 0 : index
    %c0_65 = arith.constant 0 : index
    %c0_66 = arith.constant 0 : index
    %99 = vector.load %arg18[%c0_64, %c0_65, %c0_66] : memref<2x1x32xf32, #tpu.memory_space<vmem>>, vector<1x1x32xf32>
    %100 = vector.shape_cast %99 : vector<1x1x32xf32> to vector<1x32xf32>
    %101 = vector.broadcast %100 : vector<1x32xf32> to vector<8x32xf32>
    %102 = arith.addf %98, %101 : vector<8x32xf32>
    %103 = arith.addf %84, %102 : vector<8x32xf32>
    %c0_67 = arith.constant 0 : index
    %c0_68 = arith.constant 0 : index
    %c0_69 = arith.constant 0 : index
    %104 = vector.load %arg19[%c0_67, %c0_68, %c0_69] : memref<2x1x32xf32, #tpu.memory_space<vmem>>, vector<1x1x32xf32>
    %105 = vector.shape_cast %104 : vector<1x1x32xf32> to vector<1x32xf32>
    %c0_70 = arith.constant 0 : index
    %c0_71 = arith.constant 0 : index
    %c0_72 = arith.constant 0 : index
    %106 = vector.load %arg20[%c0_70, %c0_71, %c0_72] : memref<2x1x32xf32, #tpu.memory_space<vmem>>, vector<1x1x32xf32>
    %107 = vector.shape_cast %106 : vector<1x1x32xf32> to vector<1x32xf32>
    %cst_73 = arith.constant dense<0.000000e+00> : vector<8xf32>
    %108 = vector.multi_reduction <add>, %103, %cst_73 [1] : vector<8x32xf32> to vector<8xf32>
    %109 = vector.shape_cast %108 : vector<8xf32> to vector<8x1xf32>
    %cst_74 = arith.constant 3.200000e+01 : f32
    %110 = vector.broadcast %cst_74 : f32 to vector<8x1xf32>
    %111 = arith.divf %109, %110 : vector<8x1xf32>
    %112 = vector.broadcast %111 : vector<8x1xf32> to vector<8x32xf32>
    %113 = arith.subf %103, %112 : vector<8x32xf32>
    %114 = arith.mulf %113, %113 : vector<8x32xf32>
    %cst_75 = arith.constant dense<0.000000e+00> : vector<8xf32>
    %115 = vector.multi_reduction <add>, %114, %cst_75 [1] : vector<8x32xf32> to vector<8xf32>
    %116 = vector.shape_cast %115 : vector<8xf32> to vector<8x1xf32>
    %cst_76 = arith.constant 3.200000e+01 : f32
    %117 = vector.broadcast %cst_76 : f32 to vector<8x1xf32>
    %118 = arith.divf %116, %117 : vector<8x1xf32>
    %119 = vector.broadcast %111 : vector<8x1xf32> to vector<8x32xf32>
    %120 = arith.subf %103, %119 : vector<8x32xf32>
    %cst_77 = arith.constant 9.99999974E-6 : f32
    %121 = vector.broadcast %cst_77 : f32 to vector<8x1xf32>
    %122 = arith.addf %118, %121 : vector<8x1xf32>
    %123 = math.rsqrt %122 : vector<8x1xf32>
    %124 = vector.broadcast %123 : vector<8x1xf32> to vector<8x32xf32>
    %125 = arith.mulf %120, %124 : vector<8x32xf32>
    %126 = vector.broadcast %105 : vector<1x32xf32> to vector<8x32xf32>
    %127 = arith.mulf %125, %126 : vector<8x32xf32>
    %128 = vector.broadcast %107 : vector<1x32xf32> to vector<8x32xf32>
    %129 = arith.addf %127, %128 : vector<8x32xf32>
    %130 = arith.truncf %129 : vector<8x32xf32> to vector<8x32xbf16>
    %c1 = arith.constant 1 : index
    %c0_78 = arith.constant 0 : index
    %c0_79 = arith.constant 0 : index
    %131 = vector.load %arg5[%c1, %c0_78, %c0_79] : memref<2x32x32xbf16, #tpu.memory_space<vmem>>, vector<1x32x32xbf16>
    %132 = vector.shape_cast %131 : vector<1x32x32xbf16> to vector<32x32xbf16>
    %cst_80 = arith.constant dense<0.000000e+00> : vector<8x32xf32>
    %133 = tpu.matmul %130, %132, %cst_80 {dimension_numbers = #tpu.dot_dimension_numbers<[1], [0], [0], [1], [0, 0, 1, 1], [], []>} : vector<8x32xbf16>, vector<32x32xbf16>, vector<8x32xf32> -> vector<8x32xf32>
    %c1_81 = arith.constant 1 : index
    %c0_82 = arith.constant 0 : index
    %c0_83 = arith.constant 0 : index
    %134 = vector.load %arg8[%c1_81, %c0_82, %c0_83] : memref<2x1x32xf32, #tpu.memory_space<vmem>>, vector<1x1x32xf32>
    %135 = vector.shape_cast %134 : vector<1x1x32xf32> to vector<1x32xf32>
    %136 = vector.broadcast %135 : vector<1x32xf32> to vector<8x32xf32>
    %137 = arith.addf %133, %136 : vector<8x32xf32>
    %c1_84 = arith.constant 1 : index
    %c0_85 = arith.constant 0 : index
    %c0_86 = arith.constant 0 : index
    %138 = vector.load %arg6[%c1_84, %c0_85, %c0_86] : memref<2x32x32xbf16, #tpu.memory_space<vmem>>, vector<1x32x32xbf16>
    %139 = vector.shape_cast %138 : vector<1x32x32xbf16> to vector<32x32xbf16>
    %cst_87 = arith.constant dense<0.000000e+00> : vector<8x32xf32>
    %140 = tpu.matmul %130, %139, %cst_87 {dimension_numbers = #tpu.dot_dimension_numbers<[1], [0], [0], [1], [0, 0, 1, 1], [], []>} : vector<8x32xbf16>, vector<32x32xbf16>, vector<8x32xf32> -> vector<8x32xf32>
    %c1_88 = arith.constant 1 : index
    %c0_89 = arith.constant 0 : index
    %c0_90 = arith.constant 0 : index
    %141 = vector.load %arg9[%c1_88, %c0_89, %c0_90] : memref<2x1x32xf32, #tpu.memory_space<vmem>>, vector<1x1x32xf32>
    %142 = vector.shape_cast %141 : vector<1x1x32xf32> to vector<1x32xf32>
    %143 = vector.broadcast %142 : vector<1x32xf32> to vector<8x32xf32>
    %144 = arith.addf %140, %143 : vector<8x32xf32>
    %c1_91 = arith.constant 1 : index
    %c0_92 = arith.constant 0 : index
    %c0_93 = arith.constant 0 : index
    %145 = vector.load %arg7[%c1_91, %c0_92, %c0_93] : memref<2x32x32xbf16, #tpu.memory_space<vmem>>, vector<1x32x32xbf16>
    %146 = vector.shape_cast %145 : vector<1x32x32xbf16> to vector<32x32xbf16>
    %cst_94 = arith.constant dense<0.000000e+00> : vector<8x32xf32>
    %147 = tpu.matmul %130, %146, %cst_94 {dimension_numbers = #tpu.dot_dimension_numbers<[1], [0], [0], [1], [0, 0, 1, 1], [], []>} : vector<8x32xbf16>, vector<32x32xbf16>, vector<8x32xf32> -> vector<8x32xf32>
    %c1_95 = arith.constant 1 : index
    %c0_96 = arith.constant 0 : index
    %c0_97 = arith.constant 0 : index
    %148 = vector.load %arg10[%c1_95, %c0_96, %c0_97] : memref<2x1x32xf32, #tpu.memory_space<vmem>>, vector<1x1x32xf32>
    %149 = vector.shape_cast %148 : vector<1x1x32xf32> to vector<1x32xf32>
    %150 = vector.broadcast %149 : vector<1x32xf32> to vector<8x32xf32>
    %151 = arith.addf %147, %150 : vector<8x32xf32>
    %152 = arith.truncf %137 : vector<8x32xf32> to vector<8x32xbf16>
    %153 = arith.truncf %144 : vector<8x32xf32> to vector<8x32xbf16>
    %cst_98 = arith.constant dense<0.000000e+00> : vector<8x8xf32>
    %154 = tpu.matmul %152, %153, %cst_98 {dimension_numbers = #tpu.dot_dimension_numbers<[1], [1], [0], [0], [0, 0, 1, 0], [], []>} : vector<8x32xbf16>, vector<8x32xbf16>, vector<8x8xf32> -> vector<8x8xf32>
    %cst_99 = arith.constant 0.176776692 : f32
    %155 = vector.broadcast %cst_99 : f32 to vector<8x8xf32>
    %156 = arith.mulf %154, %155 : vector<8x8xf32>
    %cst_100 = arith.constant dense<0xFF800000> : vector<8xf32>
    %157 = vector.multi_reduction <maximumf>, %156, %cst_100 [1] : vector<8x8xf32> to vector<8xf32>
    %158 = vector.shape_cast %157 : vector<8xf32> to vector<8x1xf32>
    %159 = vector.broadcast %158 : vector<8x1xf32> to vector<8x8xf32>
    %160 = arith.subf %156, %159 : vector<8x8xf32>
    %161 = math.exp %160 : vector<8x8xf32>
    %cst_101 = arith.constant dense<0.000000e+00> : vector<8xf32>
    %162 = vector.multi_reduction <add>, %161, %cst_101 [1] : vector<8x8xf32> to vector<8xf32>
    %163 = vector.shape_cast %162 : vector<8xf32> to vector<8x1xf32>
    %164 = tpu.reciprocal %163 {approx = true} : vector<8x1xf32> -> vector<8x1xf32>
    %165 = vector.broadcast %164 : vector<8x1xf32> to vector<8x8xf32>
    %166 = arith.mulf %161, %165 : vector<8x8xf32>
    %167 = arith.truncf %166 : vector<8x8xf32> to vector<8x8xbf16>
    %168 = arith.truncf %151 : vector<8x32xf32> to vector<8x32xbf16>
    %cst_102 = arith.constant dense<0.000000e+00> : vector<8x32xf32>
    %169 = tpu.matmul %167, %168, %cst_102 {dimension_numbers = #tpu.dot_dimension_numbers<[1], [0], [0], [1], [0, 0, 1, 1], [], []>} : vector<8x8xbf16>, vector<8x32xbf16>, vector<8x32xf32> -> vector<8x32xf32>
    %170 = arith.truncf %169 : vector<8x32xf32> to vector<8x32xbf16>
    %c1_103 = arith.constant 1 : index
    %c0_104 = arith.constant 0 : index
    %c0_105 = arith.constant 0 : index
    %171 = vector.load %arg11[%c1_103, %c0_104, %c0_105] : memref<2x32x32xbf16, #tpu.memory_space<vmem>>, vector<1x32x32xbf16>
    %172 = vector.shape_cast %171 : vector<1x32x32xbf16> to vector<32x32xbf16>
    %cst_106 = arith.constant dense<0.000000e+00> : vector<8x32xf32>
    %173 = tpu.matmul %170, %172, %cst_106 {dimension_numbers = #tpu.dot_dimension_numbers<[1], [0], [0], [1], [0, 0, 1, 1], [], []>} : vector<8x32xbf16>, vector<32x32xbf16>, vector<8x32xf32> -> vector<8x32xf32>
    %c1_107 = arith.constant 1 : index
    %c0_108 = arith.constant 0 : index
    %c0_109 = arith.constant 0 : index
    %174 = vector.load %arg12[%c1_107, %c0_108, %c0_109] : memref<2x1x32xf32, #tpu.memory_space<vmem>>, vector<1x1x32xf32>
    %175 = vector.shape_cast %174 : vector<1x1x32xf32> to vector<1x32xf32>
    %176 = vector.broadcast %175 : vector<1x32xf32> to vector<8x32xf32>
    %177 = arith.addf %173, %176 : vector<8x32xf32>
    %178 = arith.addf %129, %177 : vector<8x32xf32>
    %c1_110 = arith.constant 1 : index
    %c0_111 = arith.constant 0 : index
    %c0_112 = arith.constant 0 : index
    %179 = vector.load %arg13[%c1_110, %c0_111, %c0_112] : memref<2x1x32xf32, #tpu.memory_space<vmem>>, vector<1x1x32xf32>
    %180 = vector.shape_cast %179 : vector<1x1x32xf32> to vector<1x32xf32>
    %c1_113 = arith.constant 1 : index
    %c0_114 = arith.constant 0 : index
    %c0_115 = arith.constant 0 : index
    %181 = vector.load %arg14[%c1_113, %c0_114, %c0_115] : memref<2x1x32xf32, #tpu.memory_space<vmem>>, vector<1x1x32xf32>
    %182 = vector.shape_cast %181 : vector<1x1x32xf32> to vector<1x32xf32>
    %cst_116 = arith.constant dense<0.000000e+00> : vector<8xf32>
    %183 = vector.multi_reduction <add>, %178, %cst_116 [1] : vector<8x32xf32> to vector<8xf32>
    %184 = vector.shape_cast %183 : vector<8xf32> to vector<8x1xf32>
    %cst_117 = arith.constant 3.200000e+01 : f32
    %185 = vector.broadcast %cst_117 : f32 to vector<8x1xf32>
    %186 = arith.divf %184, %185 : vector<8x1xf32>
    %187 = vector.broadcast %186 : vector<8x1xf32> to vector<8x32xf32>
    %188 = arith.subf %178, %187 : vector<8x32xf32>
    %189 = arith.mulf %188, %188 : vector<8x32xf32>
    %cst_118 = arith.constant dense<0.000000e+00> : vector<8xf32>
    %190 = vector.multi_reduction <add>, %189, %cst_118 [1] : vector<8x32xf32> to vector<8xf32>
    %191 = vector.shape_cast %190 : vector<8xf32> to vector<8x1xf32>
    %cst_119 = arith.constant 3.200000e+01 : f32
    %192 = vector.broadcast %cst_119 : f32 to vector<8x1xf32>
    %193 = arith.divf %191, %192 : vector<8x1xf32>
    %194 = vector.broadcast %186 : vector<8x1xf32> to vector<8x32xf32>
    %195 = arith.subf %178, %194 : vector<8x32xf32>
    %cst_120 = arith.constant 9.99999974E-6 : f32
    %196 = vector.broadcast %cst_120 : f32 to vector<8x1xf32>
    %197 = arith.addf %193, %196 : vector<8x1xf32>
    %198 = math.rsqrt %197 : vector<8x1xf32>
    %199 = vector.broadcast %198 : vector<8x1xf32> to vector<8x32xf32>
    %200 = arith.mulf %195, %199 : vector<8x32xf32>
    %201 = vector.broadcast %180 : vector<1x32xf32> to vector<8x32xf32>
    %202 = arith.mulf %200, %201 : vector<8x32xf32>
    %203 = vector.broadcast %182 : vector<1x32xf32> to vector<8x32xf32>
    %204 = arith.addf %202, %203 : vector<8x32xf32>
    %205 = arith.truncf %204 : vector<8x32xf32> to vector<8x32xbf16>
    %c1_121 = arith.constant 1 : index
    %c0_122 = arith.constant 0 : index
    %c0_123 = arith.constant 0 : index
    %206 = vector.load %arg15[%c1_121, %c0_122, %c0_123] : memref<2x32x2048xbf16, #tpu.memory_space<vmem>>, vector<1x32x2048xbf16>
    %207 = vector.shape_cast %206 : vector<1x32x2048xbf16> to vector<32x2048xbf16>
    %cst_124 = arith.constant dense<0.000000e+00> : vector<8x2048xf32>
    %208 = tpu.matmul %205, %207, %cst_124 {dimension_numbers = #tpu.dot_dimension_numbers<[1], [0], [0], [1], [0, 0, 1, 1], [], []>} : vector<8x32xbf16>, vector<32x2048xbf16>, vector<8x2048xf32> -> vector<8x2048xf32>
    %c1_125 = arith.constant 1 : index
    %c0_126 = arith.constant 0 : index
    %c0_127 = arith.constant 0 : index
    %209 = vector.load %arg16[%c1_125, %c0_126, %c0_127] : memref<2x1x2048xf32, #tpu.memory_space<vmem>>, vector<1x1x2048xf32>
    %210 = vector.shape_cast %209 : vector<1x1x2048xf32> to vector<1x2048xf32>
    %211 = vector.broadcast %210 : vector<1x2048xf32> to vector<8x2048xf32>
    %212 = arith.addf %208, %211 : vector<8x2048xf32>
    %cst_128 = arith.constant 0.000000e+00 : f32
    %213 = vector.broadcast %cst_128 : f32 to vector<8x2048xf32>
    %214 = arith.maximumf %212, %213 : vector<8x2048xf32>
    %215 = arith.truncf %214 : vector<8x2048xf32> to vector<8x2048xbf16>
    %c1_129 = arith.constant 1 : index
    %c0_130 = arith.constant 0 : index
    %c0_131 = arith.constant 0 : index
    %216 = vector.load %arg17[%c1_129, %c0_130, %c0_131] : memref<2x2048x32xbf16, #tpu.memory_space<vmem>>, vector<1x2048x32xbf16>
    %217 = vector.shape_cast %216 : vector<1x2048x32xbf16> to vector<2048x32xbf16>
    %cst_132 = arith.constant dense<0.000000e+00> : vector<8x32xf32>
    %218 = tpu.matmul %215, %217, %cst_132 {dimension_numbers = #tpu.dot_dimension_numbers<[1], [0], [0], [1], [0, 0, 1, 1], [], []>} : vector<8x2048xbf16>, vector<2048x32xbf16>, vector<8x32xf32> -> vector<8x32xf32>
    %c1_133 = arith.constant 1 : index
    %c0_134 = arith.constant 0 : index
    %c0_135 = arith.constant 0 : index
    %219 = vector.load %arg18[%c1_133, %c0_134, %c0_135] : memref<2x1x32xf32, #tpu.memory_space<vmem>>, vector<1x1x32xf32>
    %220 = vector.shape_cast %219 : vector<1x1x32xf32> to vector<1x32xf32>
    %221 = vector.broadcast %220 : vector<1x32xf32> to vector<8x32xf32>
    %222 = arith.addf %218, %221 : vector<8x32xf32>
    %223 = arith.addf %204, %222 : vector<8x32xf32>
    %c1_136 = arith.constant 1 : index
    %c0_137 = arith.constant 0 : index
    %c0_138 = arith.constant 0 : index
    %224 = vector.load %arg19[%c1_136, %c0_137, %c0_138] : memref<2x1x32xf32, #tpu.memory_space<vmem>>, vector<1x1x32xf32>
    %225 = vector.shape_cast %224 : vector<1x1x32xf32> to vector<1x32xf32>
    %c1_139 = arith.constant 1 : index
    %c0_140 = arith.constant 0 : index
    %c0_141 = arith.constant 0 : index
    %226 = vector.load %arg20[%c1_139, %c0_140, %c0_141] : memref<2x1x32xf32, #tpu.memory_space<vmem>>, vector<1x1x32xf32>
    %227 = vector.shape_cast %226 : vector<1x1x32xf32> to vector<1x32xf32>
    %cst_142 = arith.constant dense<0.000000e+00> : vector<8xf32>
    %228 = vector.multi_reduction <add>, %223, %cst_142 [1] : vector<8x32xf32> to vector<8xf32>
    %229 = vector.shape_cast %228 : vector<8xf32> to vector<8x1xf32>
    %cst_143 = arith.constant 3.200000e+01 : f32
    %230 = vector.broadcast %cst_143 : f32 to vector<8x1xf32>
    %231 = arith.divf %229, %230 : vector<8x1xf32>
    %232 = vector.broadcast %231 : vector<8x1xf32> to vector<8x32xf32>
    %233 = arith.subf %223, %232 : vector<8x32xf32>
    %234 = arith.mulf %233, %233 : vector<8x32xf32>
    %cst_144 = arith.constant dense<0.000000e+00> : vector<8xf32>
    %235 = vector.multi_reduction <add>, %234, %cst_144 [1] : vector<8x32xf32> to vector<8xf32>
    %236 = vector.shape_cast %235 : vector<8xf32> to vector<8x1xf32>
    %cst_145 = arith.constant 3.200000e+01 : f32
    %237 = vector.broadcast %cst_145 : f32 to vector<8x1xf32>
    %238 = arith.divf %236, %237 : vector<8x1xf32>
    %239 = vector.broadcast %231 : vector<8x1xf32> to vector<8x32xf32>
    %240 = arith.subf %223, %239 : vector<8x32xf32>
    %cst_146 = arith.constant 9.99999974E-6 : f32
    %241 = vector.broadcast %cst_146 : f32 to vector<8x1xf32>
    %242 = arith.addf %238, %241 : vector<8x1xf32>
    %243 = math.rsqrt %242 : vector<8x1xf32>
    %244 = vector.broadcast %243 : vector<8x1xf32> to vector<8x32xf32>
    %245 = arith.mulf %240, %244 : vector<8x32xf32>
    %246 = vector.broadcast %225 : vector<1x32xf32> to vector<8x32xf32>
    %247 = arith.mulf %245, %246 : vector<8x32xf32>
    %248 = vector.broadcast %227 : vector<1x32xf32> to vector<8x32xf32>
    %249 = arith.addf %247, %248 : vector<8x32xf32>
    %250 = arith.truncf %249 : vector<8x32xf32> to vector<8x32xbf16>
    %c0_147 = arith.constant 0 : index
    %c0_148 = arith.constant 0 : index
    %251 = vector.load %arg21[%c0_147, %c0_148] : memref<32x4xbf16, #tpu.memory_space<vmem>>, vector<32x4xbf16>
    %cst_149 = arith.constant dense<0.000000e+00> : vector<8x4xf32>
    %252 = tpu.matmul %250, %251, %cst_149 {dimension_numbers = #tpu.dot_dimension_numbers<[1], [0], [0], [1], [0, 0, 1, 1], [], []>} : vector<8x32xbf16>, vector<32x4xbf16>, vector<8x4xf32> -> vector<8x4xf32>
    %c0_150 = arith.constant 0 : index
    %c0_151 = arith.constant 0 : index
    %253 = vector.load %arg22[%c0_150, %c0_151] : memref<1x4xf32, #tpu.memory_space<vmem>>, vector<1x4xf32>
    %254 = vector.broadcast %253 : vector<1x4xf32> to vector<8x4xf32>
    %255 = arith.addf %252, %254 : vector<8x4xf32>
    %c0_152 = arith.constant 0 : index
    %c0_153 = arith.constant 0 : index
    %c0_154 = arith.constant 0 : index
    %256 = vector.load %arg23[%c0_152, %c0_153, %c0_154] : memref<1x8x4xf32, #tpu.memory_space<vmem>>, vector<1x8x4xf32>
    %257 = vector.shape_cast %256 : vector<1x8x4xf32> to vector<8x4xf32>
    %258 = vector.shape_cast %255 : vector<8x4xf32> to vector<1x8x4xf32>
    tpu.vector_store %arg23[%c0_152, %c0_153, %c0_154], %258 {strides = array<i32>} : memref<1x8x4xf32, #tpu.memory_space<vmem>>, vector<1x8x4xf32>,
    return
  }
  func.func @transform_0(%arg0: i32) -> (i32, i32, i32) {
    %c0_i32 = arith.constant 0 : i32
    %c0_i32_0 = arith.constant 0 : i32
    %c0_i32_1 = arith.constant 0 : i32
    return %arg0, %c0_i32, %c0_i32_0 : i32, i32, i32
  }
  func.func @transform_1(%arg0: i32) -> (i32, i32) {
    %c0_i32 = arith.constant 0 : i32
    %c0_i32_0 = arith.constant 0 : i32
    %c0_i32_1 = arith.constant 0 : i32
    return %c0_i32, %c0_i32_0 : i32, i32
  }
  func.func @transform_2(%arg0: i32) -> (i32, i32) {
    %c0_i32 = arith.constant 0 : i32
    %c0_i32_0 = arith.constant 0 : i32
    %c0_i32_1 = arith.constant 0 : i32
    return %c0_i32, %c0_i32_0 : i32, i32
  }
  func.func @transform_3(%arg0: i32) -> (i32, i32) {
    %c0_i32 = arith.constant 0 : i32
    %c0_i32_0 = arith.constant 0 : i32
    %c0_i32_1 = arith.constant 0 : i32
    return %c0_i32, %c0_i32_0 : i32, i32
  }
  func.func @transform_4(%arg0: i32) -> (i32, i32, i32) {
    %c0_i32 = arith.constant 0 : i32
    %c0_i32_0 = arith.constant 0 : i32
    %c0_i32_1 = arith.constant 0 : i32
    %c0_i32_2 = arith.constant 0 : i32
    return %c0_i32, %c0_i32_0, %c0_i32_1 : i32, i32, i32
  }
  func.func @transform_5(%arg0: i32) -> (i32, i32, i32) {
    %c0_i32 = arith.constant 0 : i32
    %c0_i32_0 = arith.constant 0 : i32
    %c0_i32_1 = arith.constant 0 : i32
    %c0_i32_2 = arith.constant 0 : i32
    return %c0_i32, %c0_i32_0, %c0_i32_1 : i32, i32, i32
  }
  func.func @transform_6(%arg0: i32) -> (i32, i32, i32) {
    %c0_i32 = arith.constant 0 : i32
    %c0_i32_0 = arith.constant 0 : i32
    %c0_i32_1 = arith.constant 0 : i32
    %c0_i32_2 = arith.constant 0 : i32
    return %c0_i32, %c0_i32_0, %c0_i32_1 : i32, i32, i32
  }
  func.func @transform_7(%arg0: i32) -> (i32, i32, i32) {
    %c0_i32 = arith.constant 0 : i32
    %c0_i32_0 = arith.constant 0 : i32
    %c0_i32_1 = arith.constant 0 : i32
    %c0_i32_2 = arith.constant 0 : i32
    return %c0_i32, %c0_i32_0, %c0_i32_1 : i32, i32, i32
  }
  func.func @transform_8(%arg0: i32) -> (i32, i32, i32) {
    %c0_i32 = arith.constant 0 : i32
    %c0_i32_0 = arith.constant 0 : i32
    %c0_i32_1 = arith.constant 0 : i32
    %c0_i32_2 = arith.constant 0 : i32
    return %c0_i32, %c0_i32_0, %c0_i32_1 : i32, i32, i32
  }
  func.func @transform_9(%arg0: i32) -> (i32, i32, i32) {
    %c0_i32 = arith.constant 0 : i32
    %c0_i32_0 = arith.constant 0 : i32
    %c0_i32_1 = arith.constant 0 : i32
    %c0_i32_2 = arith.constant 0 : i32
    return %c0_i32, %c0_i32_0, %c0_i32_1 : i32, i32, i32
  }
  func.func @transform_10(%arg0: i32) -> (i32, i32, i32) {
    %c0_i32 = arith.constant 0 : i32
    %c0_i32_0 = arith.constant 0 : i32
    %c0_i32_1 = arith.constant 0 : i32
    %c0_i32_2 = arith.constant 0 : i32
    return %c0_i32, %c0_i32_0, %c0_i32_1 : i32, i32, i32
  }
  func.func @transform_11(%arg0: i32) -> (i32, i32, i32) {
    %c0_i32 = arith.constant 0 : i32
    %c0_i32_0 = arith.constant 0 : i32
    %c0_i32_1 = arith.constant 0 : i32
    %c0_i32_2 = arith.constant 0 : i32
    return %c0_i32, %c0_i32_0, %c0_i32_1 : i32, i32, i32
  }
  func.func @transform_12(%arg0: i32) -> (i32, i32, i32) {
    %c0_i32 = arith.constant 0 : i32
    %c0_i32_0 = arith.constant 0 : i32
    %c0_i32_1 = arith.constant 0 : i32
    %c0_i32_2 = arith.constant 0 : i32
    return %c0_i32, %c0_i32_0, %c0_i32_1 : i32, i32, i32
  }
  func.func @transform_13(%arg0: i32) -> (i32, i32, i32) {
    %c0_i32 = arith.constant 0 : i32
    %c0_i32_0 = arith.constant 0 : i32
    %c0_i32_1 = arith.constant 0 : i32
    %c0_i32_2 = arith.constant 0 : i32
    return %c0_i32, %c0_i32_0, %c0_i32_1 : i32, i32, i32
  }
  func.func @transform_14(%arg0: i32) -> (i32, i32, i32) {
    %c0_i32 = arith.constant 0 : i32
    %c0_i32_0 = arith.constant 0 : i32
    %c0_i32_1 = arith.constant 0 : i32
    %c0_i32_2 = arith.constant 0 : i32
    return %c0_i32, %c0_i32_0, %c0_i32_1 : i32, i32, i32
  }
  func.func @transform_15(%arg0: i32) -> (i32, i32, i32) {
    %c0_i32 = arith.constant 0 : i32
    %c0_i32_0 = arith.constant 0 : i32
    %c0_i32_1 = arith.constant 0 : i32
    %c0_i32_2 = arith.constant 0 : i32
    return %c0_i32, %c0_i32_0, %c0_i32_1 : i32, i32, i32
  }
  func.func @transform_16(%arg0: i32) -> (i32, i32, i32) {
    %c0_i32 = arith.constant 0 : i32
    %c0_i32_0 = arith.constant 0 : i32
    %c0_i32_1 = arith.constant 0 : i32
    %c0_i32_2 = arith.constant 0 : i32
    return %c0_i32, %c0_i32_0, %c0_i32_1 : i32, i32, i32
  }
  func.func @transform_17(%arg0: i32) -> (i32, i32, i32) {
    %c0_i32 = arith.constant 0 : i32
    %c0_i32_0 = arith.constant 0 : i32
    %c0_i32_1 = arith.constant 0 : i32
    %c0_i32_2 = arith.constant 0 : i32
    return %c0_i32, %c0_i32_0, %c0_i32_1 : i32, i32, i32
  }
  func.func @transform_18(%arg0: i32) -> (i32, i32, i32) {
    %c0_i32 = arith.constant 0 : i32
    %c0_i32_0 = arith.constant 0 : i32
    %c0_i32_1 = arith.constant 0 : i32
    %c0_i32_2 = arith.constant 0 : i32
    return %c0_i32, %c0_i32_0, %c0_i32_1 : i32, i32, i32
  }
  func.func @transform_19(%arg0: i32) -> (i32, i32, i32) {
    %c0_i32 = arith.constant 0 : i32
    %c0_i32_0 = arith.constant 0 : i32
    %c0_i32_1 = arith.constant 0 : i32
    %c0_i32_2 = arith.constant 0 : i32
    return %c0_i32, %c0_i32_0, %c0_i32_1 : i32, i32, i32
  }
  func.func @transform_20(%arg0: i32) -> (i32, i32) {
    %c0_i32 = arith.constant 0 : i32
    %c0_i32_0 = arith.constant 0 : i32
    %c0_i32_1 = arith.constant 0 : i32
    return %c0_i32, %c0_i32_0 : i32, i32
  }
  func.func @transform_21(%arg0: i32) -> (i32, i32) {
    %c0_i32 = arith.constant 0 : i32
    %c0_i32_0 = arith.constant 0 : i32
    %c0_i32_1 = arith.constant 0 : i32
    return %c0_i32, %c0_i32_0 : i32, i32
  }
  func.func @transform_22(%arg0: i32) -> (i32, i32, i32) {
    %c0_i32 = arith.constant 0 : i32
    %c0_i32_0 = arith.constant 0 : i32
    %c0_i32_1 = arith.constant 0 : i32
    return %arg0, %c0_i32, %c0_i32_0 : i32, i32, i32
  }
}

</mosaic_0001>

<llo_original>
// kernel: model_forward.1
$region0: #{model_forward.1}
  #allocation0 [shape = 'u32[]', space=smem, size = 0x4, offset = 0x4, fixed_abs, tag = 'smem constant byte address 0x4 - core index']
  #allocation1 [shape = 'u32[144,128]{1,0:T(1,128)}', space=vmem, size = 0x12000, scoped, tag = 'internal scratch']
  %s0 = inlined_call_operand.vmem [shape: f32[2,8,32], index: 0, kind: input, shape index: {}]
  %s1 = inlined_call_operand.vmem [shape: f32[8,32], index: 1, kind: input, shape index: {}]
  %s2 = inlined_call_operand.vmem [shape: bf16[32,32], index: 2, kind: input, shape index: {}]
  %s3 = inlined_call_operand.vmem [shape: f32[1,32], index: 3, kind: input, shape index: {}]
  %s4 = inlined_call_operand.vmem [shape: bf16[2,32,32], index: 4, kind: input, shape index: {}]
  %s5 = inlined_call_operand.vmem [shape: bf16[2,32,32], index: 5, kind: input, shape index: {}]
  %s6 = inlined_call_operand.vmem [shape: bf16[2,32,32], index: 6, kind: input, shape index: {}]
  %s7 = inlined_call_operand.vmem [shape: f32[2,1,32], index: 7, kind: input, shape index: {}]
  %s8 = inlined_call_operand.vmem [shape: f32[2,1,32], index: 8, kind: input, shape index: {}]
  %s9 = inlined_call_operand.vmem [shape: f32[2,1,32], index: 9, kind: input, shape index: {}]
  %s10 = inlined_call_operand.vmem [shape: bf16[2,32,32], index: 10, kind: input, shape index: {}]
  %s11 = inlined_call_operand.vmem [shape: f32[2,1,32], index: 11, kind: input, shape index: {}]
  %s12 = inlined_call_operand.vmem [shape: f32[2,1,32], index: 12, kind: input, shape index: {}]
  %s13 = inlined_call_operand.vmem [shape: f32[2,1,32], index: 13, kind: input, shape index: {}]
  %s14 = inlined_call_operand.vmem [shape: bf16[2,32,2048], index: 14, kind: input, shape index: {}]
  %s15 = inlined_call_operand.vmem [shape: f32[2,1,2048], index: 15, kind: input, shape index: {}]
  %s16 = inlined_call_operand.vmem [shape: bf16[2,2048,32], index: 16, kind: input, shape index: {}]
  %s17 = inlined_call_operand.vmem [shape: f32[2,1,32], index: 17, kind: input, shape index: {}]
  %s18 = inlined_call_operand.vmem [shape: f32[2,1,32], index: 18, kind: input, shape index: {}]
  %s19 = inlined_call_operand.vmem [shape: f32[2,1,32], index: 19, kind: input, shape index: {}]
  %s20 = inlined_call_operand.vmem [shape: bf16[32,4], index: 20, kind: input, shape index: {}]
  %s21 = inlined_call_operand.vmem [shape: f32[1,4], index: 21, kind: input, shape index: {}]
  %s22 = inlined_call_operand.vmem [shape: f32[2,8,4], index: 22, kind: output, shape index: {}]
  %s23 = sld [smem:[#allocation0]]
  $region121: #{model_forward.1} parent=0
    _
  %s25 = ssub.s32 1, %s23
  %s26 = scalar_select 0, %s25, %s23
  loop: start=0, step=1, limit=4
  $region2: #{model_forward.1} parent=0 // loop_pre_header
    _
  $region3: #{model_forward.1} parent=0 // loop_header
    %s28 = sphi 0, %s32
    %p29 = scmp.ge.s32.totalorder %s28, 4
    %s38 = sphi 0, %s40
    %s41 = sphi 0, %s38
    %s42 = sphi 0, %s41
    %s58 = sphi 0, %s42
    %s62 = sphi 0, %s62
    %s64 = sphi 0, %s62
    %s65 = sphi 0, %s64
    %s79 = sphi 0, %s65
    %s83 = sphi 0, %s83
    %s85 = sphi 0, %s83
    %s86 = sphi 0, %s85
    %s100 = sphi 0, %s86
    %s104 = sphi 0, %s104
    %s106 = sphi 0, %s104
    %s107 = sphi 0, %s106
    %s121 = sphi 0, %s107
    %s125 = sphi 0, %s125
    %s127 = sphi 0, %s125
    %s128 = sphi 0, %s127
    %s142 = sphi 0, %s128
    %s146 = sphi 0, %s146
    %s148 = sphi 0, %s146
    %s149 = sphi 0, %s148
    %s163 = sphi 0, %s149
    %s167 = sphi 0, %s167
    %s169 = sphi 0, %s167
    %s170 = sphi 0, %s169
    %s184 = sphi 0, %s170
    %s188 = sphi 0, %s188
    %s190 = sphi 0, %s188
    %s191 = sphi 0, %s190
    %s205 = sphi 0, %s191
    %s209 = sphi 0, %s209
    %s211 = sphi 0, %s209
    %s212 = sphi 0, %s211
    %s226 = sphi 0, %s212
    %s230 = sphi 0, %s230
    %s232 = sphi 0, %s230
    %s233 = sphi 0, %s232
    %s247 = sphi 0, %s233
    %s251 = sphi 0, %s251
    %s253 = sphi 0, %s251
    %s254 = sphi 0, %s253
    %s268 = sphi 0, %s254
    %s272 = sphi 0, %s272
    %s274 = sphi 0, %s272
    %s275 = sphi 0, %s274
    %s289 = sphi 0, %s275
    %s293 = sphi 0, %s293
    %s295 = sphi 0, %s293
    %s296 = sphi 0, %s295
    %s310 = sphi 0, %s296
    %s314 = sphi 0, %s314
    %s316 = sphi 0, %s314
    %s317 = sphi 0, %s316
    %s331 = sphi 0, %s317
    %s335 = sphi 0, %s335
    %s337 = sphi 0, %s335
    %s338 = sphi 0, %s337
    %s352 = sphi 0, %s338
    %s356 = sphi 0, %s356
    %s358 = sphi 0, %s356
    %s359 = sphi 0, %s358
    %s373 = sphi 0, %s359
    %s377 = sphi 0, %s377
    %s379 = sphi 0, %s377
    %s380 = sphi 0, %s379
    %s394 = sphi 0, %s380
    %s398 = sphi 0, %s398
    %s400 = sphi 0, %s398
    %s401 = sphi 0, %s400
    %s415 = sphi 0, %s401
    %s419 = sphi 0, %s419
    %s421 = sphi 0, %s419
    %s422 = sphi 0, %s421
    %s436 = sphi 0, %s422
    %s440 = sphi 0, %s440
    %s442 = sphi 0, %s440
    %s443 = sphi 0, %s442
    %s457 = sphi 0, %s443
    %s461 = sphi 0, %s461
    %s463 = sphi 0, %s461
    %s464 = sphi 0, %s463
    %s478 = sphi 0, %s464
    %s482 = sphi 0, %s482
    %s484 = sphi 0, %s482
    %s485 = sphi 0, %s484
    %s499 = sphi 0, %s485
    %s505 = sphi 0, %s507
    %s508 = sphi 0, %s505
    %s509 = sphi 0, %s508
    %s525 = sphi 0, %s509
  $region4: #{model_forward.1} parent=0 // loop_header_branch
    %31 = sbr.rel (%p29) target = $region8
  $region5: #{model_forward.1} parent=0 // loop_body
    %s33 = ssub.s32 %s28, 1
    %s34 = ssub.s32 %s28, 2
    %s35 = sadd.s32 %s28, 1
    %s36 = ssub.s32 %s28, %s35
    %p37 = scmp.eq.s32.totalorder %s36, 0
    %s39 = sadd.s32 %s38, 1
    %s40 = scalar_select %p37, %s38, %s39
    %p43 = pneg %p37
    %p44 = scmp.eq.s32.totalorder %s28, 1
    %p45 = por %p43, %p44
    %p46 = scmp.ne.s32.totalorder %s38, %s41
    %p47 = scmp.eq.s32.totalorder %s28, 0
    %p48 = por %p46, %p47
    %p49 = scmp.ne.s32.totalorder %s38, %s41
    %p50 = scmp.eq.s32.totalorder %s33, 1
    %p51 = por %p49, %p50
    %p52 = scmp.ne.s32.totalorder %s41, %s42
    %p53 = scmp.eq.s32.totalorder %s33, 0
    %p54 = por %p52, %p53
    %p55 = scmp.ne.s32.totalorder %s41, %s42
    %p56 = scmp.eq.s32.totalorder %s34, 1
    %p57 = por %p55, %p56
    %p59 = scmp.ne.s32.totalorder %s42, %s58
    %p60 = scmp.eq.s32.totalorder %s34, 0
    %p61 = por %p59, %p60
    %s63 = sadd.s32 %s62, 1
    %p66 = scmp.eq.s32.totalorder %s28, 1
    %p67 = scmp.ne.s32.totalorder %s62, %s64
    %p68 = scmp.eq.s32.totalorder %s28, 0
    %p69 = por %p67, %p68
    %p70 = scmp.ne.s32.totalorder %s62, %s64
    %p71 = scmp.eq.s32.totalorder %s33, 1
    %p72 = por %p70, %p71
    %p73 = scmp.ne.s32.totalorder %s64, %s65
    %p74 = scmp.eq.s32.totalorder %s33, 0
    %p75 = por %p73, %p74
    %p76 = scmp.ne.s32.totalorder %s64, %s65
    %p77 = scmp.eq.s32.totalorder %s34, 1
    %p78 = por %p76, %p77
    %p80 = scmp.ne.s32.totalorder %s65, %s79
    %p81 = scmp.eq.s32.totalorder %s34, 0
    %p82 = por %p80, %p81
    %s84 = sadd.s32 %s83, 1
    %p87 = scmp.eq.s32.totalorder %s28, 1
    %p88 = scmp.ne.s32.totalorder %s83, %s85
    %p89 = scmp.eq.s32.totalorder %s28, 0
    %p90 = por %p88, %p89
    %p91 = scmp.ne.s32.totalorder %s83, %s85
    %p92 = scmp.eq.s32.totalorder %s33, 1
    %p93 = por %p91, %p92
    %p94 = scmp.ne.s32.totalorder %s85, %s86
    %p95 = scmp.eq.s32.totalorder %s33, 0
    %p96 = por %p94, %p95
    %p97 = scmp.ne.s32.totalorder %s85, %s86
    %p98 = scmp.eq.s32.totalorder %s34, 1
    %p99 = por %p97, %p98
    %p101 = scmp.ne.s32.totalorder %s86, %s100
    %p102 = scmp.eq.s32.totalorder %s34, 0
    %p103 = por %p101, %p102
    %s105 = sadd.s32 %s104, 1
    %p108 = scmp.eq.s32.totalorder %s28, 1
    %p109 = scmp.ne.s32.totalorder %s104, %s106
    %p110 = scmp.eq.s32.totalorder %s28, 0
    %p111 = por %p109, %p110
    %p112 = scmp.ne.s32.totalorder %s104, %s106
    %p113 = scmp.eq.s32.totalorder %s33, 1
    %p114 = por %p112, %p113
    %p115 = scmp.ne.s32.totalorder %s106, %s107
    %p116 = scmp.eq.s32.totalorder %s33, 0
    %p117 = por %p115, %p116
    %p118 = scmp.ne.s32.totalorder %s106, %s107
    %p119 = scmp.eq.s32.totalorder %s34, 1
    %p120 = por %p118, %p119
    %p122 = scmp.ne.s32.totalorder %s107, %s121
    %p123 = scmp.eq.s32.totalorder %s34, 0
    %p124 = por %p122, %p123
    %s126 = sadd.s32 %s125, 1
    %p129 = scmp.eq.s32.totalorder %s28, 1
    %p130 = scmp.ne.s32.totalorder %s125, %s127
    %p131 = scmp.eq.s32.totalorder %s28, 0
    %p132 = por %p130, %p131
    %p133 = scmp.ne.s32.totalorder %s125, %s127
    %p134 = scmp.eq.s32.totalorder %s33, 1
    %p135 = por %p133, %p134
    %p136 = scmp.ne.s32.totalorder %s127, %s128
    %p137 = scmp.eq.s32.totalorder %s33, 0
    %p138 = por %p136, %p137
    %p139 = scmp.ne.s32.totalorder %s127, %s128
    %p140 = scmp.eq.s32.totalorder %s34, 1
    %p141 = por %p139, %p140
    %p143 = scmp.ne.s32.totalorder %s128, %s142
    %p144 = scmp.eq.s32.totalorder %s34, 0
    %p145 = por %p143, %p144
    %s147 = sadd.s32 %s146, 1
    %p150 = scmp.eq.s32.totalorder %s28, 1
    %p151 = scmp.ne.s32.totalorder %s146, %s148
    %p152 = scmp.eq.s32.totalorder %s28, 0
    %p153 = por %p151, %p152
    %p154 = scmp.ne.s32.totalorder %s146, %s148
    %p155 = scmp.eq.s32.totalorder %s33, 1
    %p156 = por %p154, %p155
    %p157 = scmp.ne.s32.totalorder %s148, %s149
    %p158 = scmp.eq.s32.totalorder %s33, 0
    %p159 = por %p157, %p158
    %p160 = scmp.ne.s32.totalorder %s148, %s149
    %p161 = scmp.eq.s32.totalorder %s34, 1
    %p162 = por %p160, %p161
    %p164 = scmp.ne.s32.totalorder %s149, %s163
    %p165 = scmp.eq.s32.totalorder %s34, 0
    %p166 = por %p164, %p165
    %s168 = sadd.s32 %s167, 1
    %p171 = scmp.eq.s32.totalorder %s28, 1
    %p172 = scmp.ne.s32.totalorder %s167, %s169
    %p173 = scmp.eq.s32.totalorder %s28, 0
    %p174 = por %p172, %p173
    %p175 = scmp.ne.s32.totalorder %s167, %s169
    %p176 = scmp.eq.s32.totalorder %s33, 1
    %p177 = por %p175, %p176
    %p178 = scmp.ne.s32.totalorder %s169, %s170
    %p179 = scmp.eq.s32.totalorder %s33, 0
    %p180 = por %p178, %p179
    %p181 = scmp.ne.s32.totalorder %s169, %s170
    %p182 = scmp.eq.s32.totalorder %s34, 1
    %p183 = por %p181, %p182
    %p185 = scmp.ne.s32.totalorder %s170, %s184
    %p186 = scmp.eq.s32.totalorder %s34, 0
    %p187 = por %p185, %p186
    %s189 = sadd.s32 %s188, 1
    %p192 = scmp.eq.s32.totalorder %s28, 1
    %p193 = scmp.ne.s32.totalorder %s188, %s190
    %p194 = scmp.eq.s32.totalorder %s28, 0
    %p195 = por %p193, %p194
    %p196 = scmp.ne.s32.totalorder %s188, %s190
    %p197 = scmp.eq.s32.totalorder %s33, 1
    %p198 = por %p196, %p197
    %p199 = scmp.ne.s32.totalorder %s190, %s191
    %p200 = scmp.eq.s32.totalorder %s33, 0
    %p201 = por %p199, %p200
    %p202 = scmp.ne.s32.totalorder %s190, %s191
    %p203 = scmp.eq.s32.totalorder %s34, 1
    %p204 = por %p202, %p203
    %p206 = scmp.ne.s32.totalorder %s191, %s205
    %p207 = scmp.eq.s32.totalorder %s34, 0
    %p208 = por %p206, %p207
    %s210 = sadd.s32 %s209, 1
    %p213 = scmp.eq.s32.totalorder %s28, 1
    %p214 = scmp.ne.s32.totalorder %s209, %s211
    %p215 = scmp.eq.s32.totalorder %s28, 0
    %p216 = por %p214, %p215
    %p217 = scmp.ne.s32.totalorder %s209, %s211
    %p218 = scmp.eq.s32.totalorder %s33, 1
    %p219 = por %p217, %p218
    %p220 = scmp.ne.s32.totalorder %s211, %s212
    %p221 = scmp.eq.s32.totalorder %s33, 0
    %p222 = por %p220, %p221
    %p223 = scmp.ne.s32.totalorder %s211, %s212
    %p224 = scmp.eq.s32.totalorder %s34, 1
    %p225 = por %p223, %p224
    %p227 = scmp.ne.s32.totalorder %s212, %s226
    %p228 = scmp.eq.s32.totalorder %s34, 0
    %p229 = por %p227, %p228
    %s231 = sadd.s32 %s230, 1
    %p234 = scmp.eq.s32.totalorder %s28, 1
    %p235 = scmp.ne.s32.totalorder %s230, %s232
    %p236 = scmp.eq.s32.totalorder %s28, 0
    %p237 = por %p235, %p236
    %p238 = scmp.ne.s32.totalorder %s230, %s232
    %p239 = scmp.eq.s32.totalorder %s33, 1
    %p240 = por %p238, %p239
    %p241 = scmp.ne.s32.totalorder %s232, %s233
    %p242 = scmp.eq.s32.totalorder %s33, 0
    %p243 = por %p241, %p242
    %p244 = scmp.ne.s32.totalorder %s232, %s233
    %p245 = scmp.eq.s32.totalorder %s34, 1
    %p246 = por %p244, %p245
    %p248 = scmp.ne.s32.totalorder %s233, %s247
    %p249 = scmp.eq.s32.totalorder %s34, 0
    %p250 = por %p248, %p249
    %s252 = sadd.s32 %s251, 1
    %p255 = scmp.eq.s32.totalorder %s28, 1
    %p256 = scmp.ne.s32.totalorder %s251, %s253
    %p257 = scmp.eq.s32.totalorder %s28, 0
    %p258 = por %p256, %p257
    %p259 = scmp.ne.s32.totalorder %s251, %s253
    %p260 = scmp.eq.s32.totalorder %s33, 1
    %p261 = por %p259, %p260
    %p262 = scmp.ne.s32.totalorder %s253, %s254
    %p263 = scmp.eq.s32.totalorder %s33, 0
    %p264 = por %p262, %p263
    %p265 = scmp.ne.s32.totalorder %s253, %s254
    %p266 = scmp.eq.s32.totalorder %s34, 1
    %p267 = por %p265, %p266
    %p269 = scmp.ne.s32.totalorder %s254, %s268
    %p270 = scmp.eq.s32.totalorder %s34, 0
    %p271 = por %p269, %p270
    %s273 = sadd.s32 %s272, 1
    %p276 = scmp.eq.s32.totalorder %s28, 1
    %p277 = scmp.ne.s32.totalorder %s272, %s274
    %p278 = scmp.eq.s32.totalorder %s28, 0
    %p279 = por %p277, %p278
    %p280 = scmp.ne.s32.totalorder %s272, %s274
    %p281 = scmp.eq.s32.totalorder %s33, 1
    %p282 = por %p280, %p281
    %p283 = scmp.ne.s32.totalorder %s274, %s275
    %p284 = scmp.eq.s32.totalorder %s33, 0
    %p285 = por %p283, %p284
    %p286 = scmp.ne.s32.totalorder %s274, %s275
    %p287 = scmp.eq.s32.totalorder %s34, 1
    %p288 = por %p286, %p287
    %p290 = scmp.ne.s32.totalorder %s275, %s289
    %p291 = scmp.eq.s32.totalorder %s34, 0
    %p292 = por %p290, %p291
    %s294 = sadd.s32 %s293, 1
    %p297 = scmp.eq.s32.totalorder %s28, 1
    %p298 = scmp.ne.s32.totalorder %s293, %s295
    %p299 = scmp.eq.s32.totalorder %s28, 0
    %p300 = por %p298, %p299
    %p301 = scmp.ne.s32.totalorder %s293, %s295
    %p302 = scmp.eq.s32.totalorder %s33, 1
    %p303 = por %p301, %p302
    %p304 = scmp.ne.s32.totalorder %s295, %s296
    %p305 = scmp.eq.s32.totalorder %s33, 0
    %p306 = por %p304, %p305
    %p307 = scmp.ne.s32.totalorder %s295, %s296
    %p308 = scmp.eq.s32.totalorder %s34, 1
    %p309 = por %p307, %p308
    %p311 = scmp.ne.s32.totalorder %s296, %s310
    %p312 = scmp.eq.s32.totalorder %s34, 0
    %p313 = por %p311, %p312
    %s315 = sadd.s32 %s314, 1
    %p318 = scmp.eq.s32.totalorder %s28, 1
    %p319 = scmp.ne.s32.totalorder %s314, %s316
    %p320 = scmp.eq.s32.totalorder %s28, 0
    %p321 = por %p319, %p320
    %p322 = scmp.ne.s32.totalorder %s314, %s316
    %p323 = scmp.eq.s32.totalorder %s33, 1
    %p324 = por %p322, %p323
    %p325 = scmp.ne.s32.totalorder %s316, %s317
    %p326 = scmp.eq.s32.totalorder %s33, 0
    %p327 = por %p325, %p326
    %p328 = scmp.ne.s32.totalorder %s316, %s317
    %p329 = scmp.eq.s32.totalorder %s34, 1
    %p330 = por %p328, %p329
    %p332 = scmp.ne.s32.totalorder %s317, %s331
    %p333 = scmp.eq.s32.totalorder %s34, 0
    %p334 = por %p332, %p333
    %s336 = sadd.s32 %s335, 1
    %p339 = scmp.eq.s32.totalorder %s28, 1
    %p340 = scmp.ne.s32.totalorder %s335, %s337
    %p341 = scmp.eq.s32.totalorder %s28, 0
    %p342 = por %p340, %p341
    %p343 = scmp.ne.s32.totalorder %s335, %s337
    %p344 = scmp.eq.s32.totalorder %s33, 1
    %p345 = por %p343, %p344
    %p346 = scmp.ne.s32.totalorder %s337, %s338
    %p347 = scmp.eq.s32.totalorder %s33, 0
    %p348 = por %p346, %p347
    %p349 = scmp.ne.s32.totalorder %s337, %s338
    %p350 = scmp.eq.s32.totalorder %s34, 1
    %p351 = por %p349, %p350
    %p353 = scmp.ne.s32.totalorder %s338, %s352
    %p354 = scmp.eq.s32.totalorder %s34, 0
    %p355 = por %p353, %p354
    %s357 = sadd.s32 %s356, 1
    %p360 = scmp.eq.s32.totalorder %s28, 1
    %p361 = scmp.ne.s32.totalorder %s356, %s358
    %p362 = scmp.eq.s32.totalorder %s28, 0
    %p363 = por %p361, %p362
    %p364 = scmp.ne.s32.totalorder %s356, %s358
    %p365 = scmp.eq.s32.totalorder %s33, 1
    %p366 = por %p364, %p365
    %p367 = scmp.ne.s32.totalorder %s358, %s359
    %p368 = scmp.eq.s32.totalorder %s33, 0
    %p369 = por %p367, %p368
    %p370 = scmp.ne.s32.totalorder %s358, %s359
    %p371 = scmp.eq.s32.totalorder %s34, 1
    %p372 = por %p370, %p371
    %p374 = scmp.ne.s32.totalorder %s359, %s373
    %p375 = scmp.eq.s32.totalorder %s34, 0
    %p376 = por %p374, %p375
    %s378 = sadd.s32 %s377, 1
    %p381 = scmp.eq.s32.totalorder %s28, 1
    %p382 = scmp.ne.s32.totalorder %s377, %s379
    %p383 = scmp.eq.s32.totalorder %s28, 0
    %p384 = por %p382, %p383
    %p385 = scmp.ne.s32.totalorder %s377, %s379
    %p386 = scmp.eq.s32.totalorder %s33, 1
    %p387 = por %p385, %p386
    %p388 = scmp.ne.s32.totalorder %s379, %s380
    %p389 = scmp.eq.s32.totalorder %s33, 0
    %p390 = por %p388, %p389
    %p391 = scmp.ne.s32.totalorder %s379, %s380
    %p392 = scmp.eq.s32.totalorder %s34, 1
    %p393 = por %p391, %p392
    %p395 = scmp.ne.s32.totalorder %s380, %s394
    %p396 = scmp.eq.s32.totalorder %s34, 0
    %p397 = por %p395, %p396
    %s399 = sadd.s32 %s398, 1
    %p402 = scmp.eq.s32.totalorder %s28, 1
    %p403 = scmp.ne.s32.totalorder %s398, %s400
    %p404 = scmp.eq.s32.totalorder %s28, 0
    %p405 = por %p403, %p404
    %p406 = scmp.ne.s32.totalorder %s398, %s400
    %p407 = scmp.eq.s32.totalorder %s33, 1
    %p408 = por %p406, %p407
    %p409 = scmp.ne.s32.totalorder %s400, %s401
    %p410 = scmp.eq.s32.totalorder %s33, 0
    %p411 = por %p409, %p410
    %p412 = scmp.ne.s32.totalorder %s400, %s401
    %p413 = scmp.eq.s32.totalorder %s34, 1
    %p414 = por %p412, %p413
    %p416 = scmp.ne.s32.totalorder %s401, %s415
    %p417 = scmp.eq.s32.totalorder %s34, 0
    %p418 = por %p416, %p417
    %s420 = sadd.s32 %s419, 1
    %p423 = scmp.eq.s32.totalorder %s28, 1
    %p424 = scmp.ne.s32.totalorder %s419, %s421
    %p425 = scmp.eq.s32.totalorder %s28, 0
    %p426 = por %p424, %p425
    %p427 = scmp.ne.s32.totalorder %s419, %s421
    %p428 = scmp.eq.s32.totalorder %s33, 1
    %p429 = por %p427, %p428
    %p430 = scmp.ne.s32.totalorder %s421, %s422
    %p431 = scmp.eq.s32.totalorder %s33, 0
    %p432 = por %p430, %p431
    %p433 = scmp.ne.s32.totalorder %s421, %s422
    %p434 = scmp.eq.s32.totalorder %s34, 1
    %p435 = por %p433, %p434
    %p437 = scmp.ne.s32.totalorder %s422, %s436
    %p438 = scmp.eq.s32.totalorder %s34, 0
    %p439 = por %p437, %p438
    %s441 = sadd.s32 %s440, 1
    %p444 = scmp.eq.s32.totalorder %s28, 1
    %p445 = scmp.ne.s32.totalorder %s440, %s442
    %p446 = scmp.eq.s32.totalorder %s28, 0
    %p447 = por %p445, %p446
    %p448 = scmp.ne.s32.totalorder %s440, %s442
    %p449 = scmp.eq.s32.totalorder %s33, 1
    %p450 = por %p448, %p449
    %p451 = scmp.ne.s32.totalorder %s442, %s443
    %p452 = scmp.eq.s32.totalorder %s33, 0
    %p453 = por %p451, %p452
    %p454 = scmp.ne.s32.totalorder %s442, %s443
    %p455 = scmp.eq.s32.totalorder %s34, 1
    %p456 = por %p454, %p455
    %p458 = scmp.ne.s32.totalorder %s443, %s457
    %p459 = scmp.eq.s32.totalorder %s34, 0
    %p460 = por %p458, %p459
    %s462 = sadd.s32 %s461, 1
    %p465 = scmp.eq.s32.totalorder %s28, 1
    %p466 = scmp.ne.s32.totalorder %s461, %s463
    %p467 = scmp.eq.s32.totalorder %s28, 0
    %p468 = por %p466, %p467
    %p469 = scmp.ne.s32.totalorder %s461, %s463
    %p470 = scmp.eq.s32.totalorder %s33, 1
    %p471 = por %p469, %p470
    %p472 = scmp.ne.s32.totalorder %s463, %s464
    %p473 = scmp.eq.s32.totalorder %s33, 0
    %p474 = por %p472, %p473
    %p475 = scmp.ne.s32.totalorder %s463, %s464
    %p476 = scmp.eq.s32.totalorder %s34, 1
    %p477 = por %p475, %p476
    %p479 = scmp.ne.s32.totalorder %s464, %s478
    %p480 = scmp.eq.s32.totalorder %s34, 0
    %p481 = por %p479, %p480
    %s483 = sadd.s32 %s482, 1
    %p486 = scmp.eq.s32.totalorder %s28, 1
    %p487 = scmp.ne.s32.totalorder %s482, %s484
    %p488 = scmp.eq.s32.totalorder %s28, 0
    %p489 = por %p487, %p488
    %p490 = scmp.ne.s32.totalorder %s482, %s484
    %p491 = scmp.eq.s32.totalorder %s33, 1
    %p492 = por %p490, %p491
    %p493 = scmp.ne.s32.totalorder %s484, %s485
    %p494 = scmp.eq.s32.totalorder %s33, 0
    %p495 = por %p493, %p494
    %p496 = scmp.ne.s32.totalorder %s484, %s485
    %p497 = scmp.eq.s32.totalorder %s34, 1
    %p498 = por %p496, %p497
    %p500 = scmp.ne.s32.totalorder %s485, %s499
    %p501 = scmp.eq.s32.totalorder %s34, 0
    %p502 = por %p500, %p501
    %s503 = ssub.s32 %s28, %s35
    %p504 = scmp.eq.s32.totalorder %s503, 0
    %s506 = sadd.s32 %s505, 1
    %s507 = scalar_select %p504, %s505, %s506
    %p510 = pneg %p504
    %p511 = scmp.eq.s32.totalorder %s28, 1
    %p512 = por %p510, %p511
    %p513 = scmp.ne.s32.totalorder %s505, %s508
    %p514 = scmp.eq.s32.totalorder %s28, 0
    %p515 = por %p513, %p514
    %p516 = scmp.ne.s32.totalorder %s505, %s508
    %p517 = scmp.eq.s32.totalorder %s33, 1
    %p518 = por %p516, %p517
    %p519 = scmp.ne.s32.totalorder %s508, %s509
    %p520 = scmp.eq.s32.totalorder %s33, 0
    %p521 = por %p519, %p520
    %p522 = scmp.ne.s32.totalorder %s508, %s509
    %p523 = scmp.eq.s32.totalorder %s34, 1
    %p524 = por %p522, %p523
    %p526 = scmp.ne.s32.totalorder %s509, %s525
    %p527 = scmp.eq.s32.totalorder %s34, 0
    %p528 = por %p526, %p527
    %p529 = scmp.le.s32.totalorder 1, %s28
    %p530 = scmp.lt.s32.totalorder %s28, 3
    %p531 = pnand %p529, %p530
    %p532 = pneg %p531
    // Predicated region
    $region9: #{model_forward.1} parent=5 // pred_check
      _
    $region10: #{model_forward.1} parent=5 // pred_check_branch
      %534 = sbr.rel (%p531) target = $region12
    $region11: #{model_forward.1} parent=5 // pred_region
      %s535 = ssub.s32 %s28, 1
      // Predicated region
      $region13: #{model_forward.1} parent=11 // pred_check
        %p536 = pneg %p75
      $region14: #{model_forward.1} parent=11 // pred_check_branch
        %538 = sbr.rel (%p536) target = $region16
      $region15: #{model_forward.1} parent=11 // pred_region
        _
      $region16: #{model_forward.1} parent=11 // pred_fallthru
        _
      // Predicated region
      $region17: #{model_forward.1} parent=11 // pred_check
        %p539 = pneg %p96
      $region18: #{model_forward.1} parent=11 // pred_check_branch
        %541 = sbr.rel (%p539) target = $region20
      $region19: #{model_forward.1} parent=11 // pred_region
        _
      $region20: #{model_forward.1} parent=11 // pred_fallthru
        _
      // Predicated region
      $region21: #{model_forward.1} parent=11 // pred_check
        %p542 = pneg %p117
      $region22: #{model_forward.1} parent=11 // pred_check_branch
        %544 = sbr.rel (%p542) target = $region24
      $region23: #{model_forward.1} parent=11 // pred_region
        _
      $region24: #{model_forward.1} parent=11 // pred_fallthru
        _
      // Predicated region
      $region25: #{model_forward.1} parent=11 // pred_check
        %p545 = pneg %p138
      $region26: #{model_forward.1} parent=11 // pred_check_branch
        %547 = sbr.rel (%p545) target = $region28
      $region27: #{model_forward.1} parent=11 // pred_region
        _
      $region28: #{model_forward.1} parent=11 // pred_fallthru
        _
      // Predicated region
      $region29: #{model_forward.1} parent=11 // pred_check
        %p548 = pneg %p159
      $region30: #{model_forward.1} parent=11 // pred_check_branch
        %550 = sbr.rel (%p548) target = $region32
      $region31: #{model_forward.1} parent=11 // pred_region
        _
      $region32: #{model_forward.1} parent=11 // pred_fallthru
        _
      // Predicated region
      $region33: #{model_forward.1} parent=11 // pred_check
        %p551 = pneg %p180
      $region34: #{model_forward.1} parent=11 // pred_check_branch
        %553 = sbr.rel (%p551) target = $region36
      $region35: #{model_forward.1} parent=11 // pred_region
        _
      $region36: #{model_forward.1} parent=11 // pred_fallthru
        _
      // Predicated region
      $region37: #{model_forward.1} parent=11 // pred_check
        %p554 = pneg %p201
      $region38: #{model_forward.1} parent=11 // pred_check_branch
        %556 = sbr.rel (%p554) target = $region40
      $region39: #{model_forward.1} parent=11 // pred_region
        _
      $region40: #{model_forward.1} parent=11 // pred_fallthru
        _
      // Predicated region
      $region41: #{model_forward.1} parent=11 // pred_check
        %p557 = pneg %p222
      $region42: #{model_forward.1} parent=11 // pred_check_branch
        %559 = sbr.rel (%p557) target = $region44
      $region43: #{model_forward.1} parent=11 // pred_region
        _
      $region44: #{model_forward.1} parent=11 // pred_fallthru
        _
      // Predicated region
      $region45: #{model_forward.1} parent=11 // pred_check
        %p560 = pneg %p243
      $region46: #{model_forward.1} parent=11 // pred_check_branch
        %562 = sbr.rel (%p560) target = $region48
      $region47: #{model_forward.1} parent=11 // pred_region
        _
      $region48: #{model_forward.1} parent=11 // pred_fallthru
        _
      // Predicated region
      $region49: #{model_forward.1} parent=11 // pred_check
        %p563 = pneg %p264
      $region50: #{model_forward.1} parent=11 // pred_check_branch
        %565 = sbr.rel (%p563) target = $region52
      $region51: #{model_forward.1} parent=11 // pred_region
        _
      $region52: #{model_forward.1} parent=11 // pred_fallthru
        _
      // Predicated region
      $region53: #{model_forward.1} parent=11 // pred_check
        %p566 = pneg %p285
      $region54: #{model_forward.1} parent=11 // pred_check_branch
        %568 = sbr.rel (%p566) target = $region56
      $region55: #{model_forward.1} parent=11 // pred_region
        _
      $region56: #{model_forward.1} parent=11 // pred_fallthru
        _
      // Predicated region
      $region57: #{model_forward.1} parent=11 // pred_check
        %p569 = pneg %p306
      $region58: #{model_forward.1} parent=11 // pred_check_branch
        %571 = sbr.rel (%p569) target = $region60
      $region59: #{model_forward.1} parent=11 // pred_region
        _
      $region60: #{model_forward.1} parent=11 // pred_fallthru
        _
      // Predicated region
      $region61: #{model_forward.1} parent=11 // pred_check
        %p572 = pneg %p327
      $region62: #{model_forward.1} parent=11 // pred_check_branch
        %574 = sbr.rel (%p572) target = $region64
      $region63: #{model_forward.1} parent=11 // pred_region
        _
      $region64: #{model_forward.1} parent=11 // pred_fallthru
        _
      // Predicated region
      $region65: #{model_forward.1} parent=11 // pred_check
        %p575 = pneg %p348
      $region66: #{model_forward.1} parent=11 // pred_check_branch
        %577 = sbr.rel (%p575) target = $region68
      $region67: #{model_forward.1} parent=11 // pred_region
        _
      $region68: #{model_forward.1} parent=11 // pred_fallthru
        _
      // Predicated region
      $region69: #{model_forward.1} parent=11 // pred_check
        %p578 = pneg %p369
      $region70: #{model_forward.1} parent=11 // pred_check_branch
        %580 = sbr.rel (%p578) target = $region72
      $region71: #{model_forward.1} parent=11 // pred_region
        _
      $region72: #{model_forward.1} parent=11 // pred_fallthru
        _
      // Predicated region
      $region73: #{model_forward.1} parent=11 // pred_check
        %p581 = pneg %p390
      $region74: #{model_forward.1} parent=11 // pred_check_branch
        %583 = sbr.rel (%p581) target = $region76
      $region75: #{model_forward.1} parent=11 // pred_region
        _
      $region76: #{model_forward.1} parent=11 // pred_fallthru
        _
      // Predicated region
      $region77: #{model_forward.1} parent=11 // pred_check
        %p584 = pneg %p411
      $region78: #{model_forward.1} parent=11 // pred_check_branch
        %586 = sbr.rel (%p584) target = $region80
      $region79: #{model_forward.1} parent=11 // pred_region
        _
      $region80: #{model_forward.1} parent=11 // pred_fallthru
        _
      // Predicated region
      $region81: #{model_forward.1} parent=11 // pred_check
        %p587 = pneg %p432
      $region82: #{model_forward.1} parent=11 // pred_check_branch
        %589 = sbr.rel (%p587) target = $region84
      $region83: #{model_forward.1} parent=11 // pred_region
        _
      $region84: #{model_forward.1} parent=11 // pred_fallthru
        _
      // Predicated region
      $region85: #{model_forward.1} parent=11 // pred_check
        %p590 = pneg %p453
      $region86: #{model_forward.1} parent=11 // pred_check_branch
        %592 = sbr.rel (%p590) target = $region88
      $region87: #{model_forward.1} parent=11 // pred_region
        _
      $region88: #{model_forward.1} parent=11 // pred_fallthru
        _
      // Predicated region
      $region89: #{model_forward.1} parent=11 // pred_check
        %p593 = pneg %p474
      $region90: #{model_forward.1} parent=11 // pred_check_branch
        %595 = sbr.rel (%p593) target = $region92
      $region91: #{model_forward.1} parent=11 // pred_region
        _
      $region92: #{model_forward.1} parent=11 // pred_fallthru
        _
      // Predicated region
      $region93: #{model_forward.1} parent=11 // pred_check
        %p596 = pneg %p495
      $region94: #{model_forward.1} parent=11 // pred_check_branch
        %598 = sbr.rel (%p596) target = $region96
      $region95: #{model_forward.1} parent=11 // pred_region
        _
      $region96: #{model_forward.1} parent=11 // pred_fallthru
        _
    $region12: #{model_forward.1} parent=5 // pred_fallthru
      _
    %p599 = scmp.lt.s32.totalorder %s28, 2
    // Predicated region
    $region97: #{model_forward.1} parent=5 // pred_check
      %p600 = pneg %p599
    $region98: #{model_forward.1} parent=5 // pred_check_branch
      %602 = sbr.rel (%p600) target = $region100
    $region99: #{model_forward.1} parent=5 // pred_region
      // Predicated region
      $region101: #{model_forward.1} parent=99 // pred_check
        %p603 = pneg %p48
      $region102: #{model_forward.1} parent=99 // pred_check_branch
        %605 = sbr.rel (%p603) target = $region104
      $region103: #{model_forward.1} parent=99 // pred_region
        %p606 = scmp.lt.s32.totalorder %s28, 1
        %s607 = scalar_select %p606, %s28, 1
        %s608 = smul.addr %s607, 8
        %s609 = scalar_lea.vmem %s0, %s608
      $region104: #{model_forward.1} parent=99 // pred_fallthru
        _
    $region100: #{model_forward.1} parent=5 // pred_fallthru
      _
    %p610 = scmp.le.s32.totalorder 1, %s28
    %p611 = scmp.lt.s32.totalorder %s28, 3
    %p612 = pnand %p610, %p611
    %p613 = pneg %p612
    // Predicated region
    $region105: #{model_forward.1} parent=5 // pred_check
      _
    $region106: #{model_forward.1} parent=5 // pred_check_branch
      %615 = sbr.rel (%p612) target = $region108
    $region107: #{model_forward.1} parent=5 // pred_region
      %s616 = ssub.s32 %s28, 1
      %p617 = scmp.lt.s32.totalorder %s33, 1
      %s618 = scalar_select %p617, %s33, 1
      %s619 = smul.addr %s618, 8
      %s620 = scalar_lea.vmem %s0, %s619
      %p621 = pneg %p54
      %p622 = pneg %p51
      %p623 = pneg %p75
      %p624 = pneg %p72
      %p625 = pneg %p96
      %p626 = pneg %p93
      %p627 = pneg %p117
      %p628 = pneg %p114
      %p629 = pneg %p138
      %p630 = pneg %p135
      %p631 = pneg %p159
      %p632 = pneg %p156
      %p633 = pneg %p180
      %p634 = pneg %p177
      %p635 = pneg %p201
      %p636 = pneg %p198
      %p637 = pneg %p222
      %p638 = pneg %p219
      %p639 = pneg %p243
      %p640 = pneg %p240
      %p641 = pneg %p264
      %p642 = pneg %p261
      %p643 = pneg %p285
      %p644 = pneg %p282
      %p645 = pneg %p306
      %p646 = pneg %p303
      %p647 = pneg %p327
      %p648 = pneg %p324
      %p649 = pneg %p348
      %p650 = pneg %p345
      %p651 = pneg %p369
      %p652 = pneg %p366
      %p653 = pneg %p390
      %p654 = pneg %p387
      %p655 = pneg %p411
      %p656 = pneg %p408
      %p657 = pneg %p432
      %p658 = pneg %p429
      %p659 = pneg %p453
      %p660 = pneg %p450
      %p661 = pneg %p474
      %p662 = pneg %p471
      %p663 = pneg %p495
      %p664 = pneg %p492
      %p665 = pneg %p521
      %p666 = pneg %p518
      %p667 = scmp.lt.s32.totalorder %s33, 1
      %s668 = scalar_select %p667, %s33, 1
      %s669 = smul.addr %s668, 8
      %s670 = scalar_lea.vmem %s22, %s669
      %p671 = scmp.lt.s32.totalorder %s33, 1
      %s672 = scalar_select %p671, %s33, 1
      %s673 = smul.addr %s672, 8
      %s674 = scalar_lea.vmem %s0, %s673
      %p675 = scmp.lt.s32.totalorder %s33, 1
      %s676 = scalar_select %p675, %s33, 1
      %s677 = smul.addr %s676, 8
      %s678 = scalar_lea.vmem %s22, %s677
      %v680 = vld [vmem:[%s674] sm:$0xff]
      %v681 = vpack.c.bf16 %v680, %v680
      %v682 = vld [vmem:[%s2] sm:$0xf]
      %v683 = vld [vmem:[%s2 + $0x4] sm:$0xf]
      %v684 = vld [vmem:[%s2 + $0x8] sm:$0xf]
      %v685 = vld [vmem:[%s2 + $0xc] sm:$0xf]
      %v686 = vld [vmem:[%s3] sm:$0x1]
      %v688 = vlaneseq
      %v689 = vshrl.u32 %v688, 7
      %v690 = vsub.s32 0, %v689
      %v691 = vrot.slane %v686, %v690
      %v697 = vunpack.c.l.b16 %v682
      %v698 = vunpack.c.l.b16 %v683
      %v699 = vunpack.c.l.b16 %v684
      %v700 = vunpack.c.l.b16 %v685
      %v701 = vpack.c.b16 %v698, %v697
      %v702 = vpack.c.b16 %v700, %v699
      %vm705 = vcmask 261120
      %v707 = vsel %vm705, %v681, 0
      %709 = vmatprep.subr.bf16.mxu0 0
      %710 = vmatpush1.bf16.msra.mxu0 %v701
      %711 = vmatprep.subr.bf16.mxu0 0
      %712 = vmatpush1.bf16.msra.mxu0 %v702
      %713 = vmatprep.subr.bf16.mxu0 0
      %714 = vmatpush1.bf16.msra.mxu0 0
      %715 = vmatprep.subr.bf16.mxu0 0
      %716 = vmatpush1.bf16.msra.mxu0 0
      %717 = vmatprep.subr.bf16.mxu0 0
      %718 = vmatpush1.bf16.msra.mxu0 0
      %719 = vmatprep.subr.bf16.mxu0 0
      %720 = vmatpush1.bf16.msra.mxu0 0
      %721 = vmatprep.subr.bf16.mxu0 0
      %722 = vmatpush1.bf16.msra.mxu0 0
      %723 = vmatprep.subr.bf16.mxu0 0
      %724 = vmatpush1.bf16.msra.mxu0 0
      %725 = vmatprep.subr.bf16.mxu0 0
      %726 = vmatpush1.bf16.msra.mxu0 0
      %727 = vmatprep.subr.bf16.mxu0 0
      %728 = vmatpush1.bf16.msra.mxu0 0
      %729 = vmatprep.subr.bf16.mxu0 0
      %730 = vmatpush1.bf16.msra.mxu0 0
      %731 = vmatprep.subr.bf16.mxu0 0
      %732 = vmatpush1.bf16.msra.mxu0 0
      %733 = vmatprep.subr.bf16.mxu0 0
      %734 = vmatpush1.bf16.msra.mxu0 0
      %735 = vmatprep.subr.bf16.mxu0 0
      %736 = vmatpush1.bf16.msra.mxu0 0
      %737 = vmatprep.subr.bf16.mxu0 0
      %738 = vmatpush1.bf16.msra.mxu0 0
      %739 = vmatprep.subr.bf16.mxu0 0
      %740 = vmatpush1.bf16.msra.mxu0 0
      %741 = vmatprep.mubr.bf16.mxu0 0
      %742 = vmatmul.mubr.bf16.gmra.mrb[0].mxu0 %v707
      %v743 = vpop.f32.mrb[0].mxu0
      %v744 = vadd.f32 %v691, %v743
      %v745 = vpop.f32.mrb[0].mxu0
      %v746 = vpop.f32.mrb[0].mxu0
      %v747 = vpop.f32.mrb[0].mxu0
      %748 = vdwg.mxu0
      %v749 = vld [vmem:[%s1] sm:$0xff]
      %v750 = vadd.f32 %v744, %v749
      %v751 = vpack.c.bf16 %v750, %v750
      %v752 = vld [vmem:[%s4] sm:$0xf]
      %v753 = vld [vmem:[%s4 + $0x4] sm:$0xf]
      %v754 = vld [vmem:[%s4 + $0x8] sm:$0xf]
      %v755 = vld [vmem:[%s4 + $0xc] sm:$0xf]
      %v756 = vld [vmem:[%s7] sm:$0x1]
      %v758 = vlaneseq
      %v759 = vshrl.u32 %v758, 7
      %v760 = vsub.s32 0, %v759
      %v761 = vrot.slane %v756, %v760
      %v767 = vunpack.c.l.b16 %v752
      %v768 = vunpack.c.l.b16 %v753
      %v769 = vunpack.c.l.b16 %v754
      %v770 = vunpack.c.l.b16 %v755
      %v771 = vpack.c.b16 %v768, %v767
      %v772 = vpack.c.b16 %v770, %v769
      %v776 = vsel %vm705, %v751, 0
      %778 = vmatprep.subr.bf16.mxu0 0
      %779 = vmatpush1.bf16.msra.mxu0 %v771
      %780 = vmatprep.subr.bf16.mxu0 0
      %781 = vmatpush1.bf16.msra.mxu0 %v772
      %782 = vmatprep.subr.bf16.mxu0 0
      %783 = vmatpush1.bf16.msra.mxu0 0
      %784 = vmatprep.subr.bf16.mxu0 0
      %785 = vmatpush1.bf16.msra.mxu0 0
      %786 = vmatprep.subr.bf16.mxu0 0
      %787 = vmatpush1.bf16.msra.mxu0 0
      %788 = vmatprep.subr.bf16.mxu0 0
      %789 = vmatpush1.bf16.msra.mxu0 0
      %790 = vmatprep.subr.bf16.mxu0 0
      %791 = vmatpush1.bf16.msra.mxu0 0
      %792 = vmatprep.subr.bf16.mxu0 0
      %793 = vmatpush1.bf16.msra.mxu0 0
      %794 = vmatprep.subr.bf16.mxu0 0
      %795 = vmatpush1.bf16.msra.mxu0 0
      %796 = vmatprep.subr.bf16.mxu0 0
      %797 = vmatpush1.bf16.msra.mxu0 0
      %798 = vmatprep.subr.bf16.mxu0 0
      %799 = vmatpush1.bf16.msra.mxu0 0
      %800 = vmatprep.subr.bf16.mxu0 0
      %801 = vmatpush1.bf16.msra.mxu0 0
      %802 = vmatprep.subr.bf16.mxu0 0
      %803 = vmatpush1.bf16.msra.mxu0 0
      %804 = vmatprep.subr.bf16.mxu0 0
      %805 = vmatpush1.bf16.msra.mxu0 0
      %806 = vmatprep.subr.bf16.mxu0 0
      %807 = vmatpush1.bf16.msra.mxu0 0
      %808 = vmatprep.subr.bf16.mxu0 0
      %809 = vmatpush1.bf16.msra.mxu0 0
      %810 = vmatprep.mubr.bf16.mxu0 0
      %811 = vmatmul.mubr.bf16.gmra.mrb[0].mxu0 %v776
      %v812 = vpop.f32.mrb[0].mxu0
      %v813 = vadd.f32 %v761, %v812
      %v814 = vpop.f32.mrb[0].mxu0
      %v815 = vpop.f32.mrb[0].mxu0
      %v816 = vpop.f32.mrb[0].mxu0
      %817 = vdwg.mxu0
      %v818 = vld [vmem:[%s5] sm:$0xf]
      %v819 = vld [vmem:[%s5 + $0x4] sm:$0xf]
      %v820 = vld [vmem:[%s5 + $0x8] sm:$0xf]
      %v821 = vld [vmem:[%s5 + $0xc] sm:$0xf]
      %v822 = vld [vmem:[%s8] sm:$0x1]
      %v824 = vlaneseq
      %v825 = vshrl.u32 %v824, 7
      %v826 = vsub.s32 0, %v825
      %v827 = vrot.slane %v822, %v826
      %v833 = vunpack.c.l.b16 %v818
      %v834 = vunpack.c.l.b16 %v819
      %v835 = vunpack.c.l.b16 %v820
      %v836 = vunpack.c.l.b16 %v821
      %v837 = vpack.c.b16 %v834, %v833
      %v838 = vpack.c.b16 %v836, %v835
      %841 = vmatprep.subr.bf16.mxu0 0
      %842 = vmatpush1.bf16.msra.mxu0 %v837
      %843 = vmatprep.subr.bf16.mxu0 0
      %844 = vmatpush1.bf16.msra.mxu0 %v838
      %845 = vmatprep.subr.bf16.mxu0 0
      %846 = vmatpush1.bf16.msra.mxu0 0
      %847 = vmatprep.subr.bf16.mxu0 0
      %848 = vmatpush1.bf16.msra.mxu0 0
      %849 = vmatprep.subr.bf16.mxu0 0
      %850 = vmatpush1.bf16.msra.mxu0 0
      %851 = vmatprep.subr.bf16.mxu0 0
      %852 = vmatpush1.bf16.msra.mxu0 0
      %853 = vmatprep.subr.bf16.mxu0 0
      %854 = vmatpush1.bf16.msra.mxu0 0
      %855 = vmatprep.subr.bf16.mxu0 0
      %856 = vmatpush1.bf16.msra.mxu0 0
      %857 = vmatprep.subr.bf16.mxu0 0
      %858 = vmatpush1.bf16.msra.mxu0 0
      %859 = vmatprep.subr.bf16.mxu0 0
      %860 = vmatpush1.bf16.msra.mxu0 0
      %861 = vmatprep.subr.bf16.mxu0 0
      %862 = vmatpush1.bf16.msra.mxu0 0
      %863 = vmatprep.subr.bf16.mxu0 0
      %864 = vmatpush1.bf16.msra.mxu0 0
      %865 = vmatprep.subr.bf16.mxu0 0
      %866 = vmatpush1.bf16.msra.mxu0 0
      %867 = vmatprep.subr.bf16.mxu0 0
      %868 = vmatpush1.bf16.msra.mxu0 0
      %869 = vmatprep.subr.bf16.mxu0 0
      %870 = vmatpush1.bf16.msra.mxu0 0
      %871 = vmatprep.subr.bf16.mxu0 0
      %872 = vmatpush1.bf16.msra.mxu0 0
      %873 = vmatprep.mubr.bf16.mxu0 0
      %874 = vmatmul.mubr.bf16.gmra.mrb[0].mxu0 %v776
      %v875 = vpop.f32.mrb[0].mxu0
      %v876 = vadd.f32 %v827, %v875
      %v877 = vpop.f32.mrb[0].mxu0
      %v878 = vpop.f32.mrb[0].mxu0
      %v879 = vpop.f32.mrb[0].mxu0
      %880 = vdwg.mxu0
      %v881 = vld [vmem:[%s6] sm:$0xf]
      %v882 = vld [vmem:[%s6 + $0x4] sm:$0xf]
      %v883 = vld [vmem:[%s6 + $0x8] sm:$0xf]
      %v884 = vld [vmem:[%s6 + $0xc] sm:$0xf]
      %v885 = vld [vmem:[%s9] sm:$0x1]
      %v887 = vlaneseq
      %v888 = vshrl.u32 %v887, 7
      %v889 = vsub.s32 0, %v888
      %v890 = vrot.slane %v885, %v889
      %v896 = vunpack.c.l.b16 %v881
      %v897 = vunpack.c.l.b16 %v882
      %v898 = vunpack.c.l.b16 %v883
      %v899 = vunpack.c.l.b16 %v884
      %v900 = vpack.c.b16 %v897, %v896
      %v901 = vpack.c.b16 %v899, %v898
      %904 = vmatprep.subr.bf16.mxu0 0
      %905 = vmatpush1.bf16.msra.mxu0 %v900
      %906 = vmatprep.subr.bf16.mxu0 0
      %907 = vmatpush1.bf16.msra.mxu0 %v901
      %908 = vmatprep.subr.bf16.mxu0 0
      %909 = vmatpush1.bf16.msra.mxu0 0
      %910 = vmatprep.subr.bf16.mxu0 0
      %911 = vmatpush1.bf16.msra.mxu0 0
      %912 = vmatprep.subr.bf16.mxu0 0
      %913 = vmatpush1.bf16.msra.mxu0 0
      %914 = vmatprep.subr.bf16.mxu0 0
      %915 = vmatpush1.bf16.msra.mxu0 0
      %916 = vmatprep.subr.bf16.mxu0 0
      %917 = vmatpush1.bf16.msra.mxu0 0
      %918 = vmatprep.subr.bf16.mxu0 0
      %919 = vmatpush1.bf16.msra.mxu0 0
      %920 = vmatprep.subr.bf16.mxu0 0
      %921 = vmatpush1.bf16.msra.mxu0 0
      %922 = vmatprep.subr.bf16.mxu0 0
      %923 = vmatpush1.bf16.msra.mxu0 0
      %924 = vmatprep.subr.bf16.mxu0 0
      %925 = vmatpush1.bf16.msra.mxu0 0
      %926 = vmatprep.subr.bf16.mxu0 0
      %927 = vmatpush1.bf16.msra.mxu0 0
      %928 = vmatprep.subr.bf16.mxu0 0
      %929 = vmatpush1.bf16.msra.mxu0 0
      %930 = vmatprep.subr.bf16.mxu0 0
      %931 = vmatpush1.bf16.msra.mxu0 0
      %932 = vmatprep.subr.bf16.mxu0 0
      %933 = vmatpush1.bf16.msra.mxu0 0
      %934 = vmatprep.subr.bf16.mxu0 0
      %935 = vmatpush1.bf16.msra.mxu0 0
      %936 = vmatprep.mubr.bf16.mxu0 0
      %937 = vmatmul.mubr.bf16.gmra.mrb[0].mxu0 %v776
      %v938 = vpop.f32.mrb[0].mxu0
      %v939 = vadd.f32 %v890, %v938
      %v940 = vpop.f32.mrb[0].mxu0
      %v941 = vpop.f32.mrb[0].mxu0
      %v942 = vpop.f32.mrb[0].mxu0
      %943 = vdwg.mxu0
      %v944 = vpack.c.bf16 %v813, %v813
      %v945 = vpack.c.bf16 %v876, %v876
      %v947 = vsel %vm705, %v944, 0
      %v950 = vsel %vm705, %v945, 0
      %952 = vmatprep.subr.bf16.mxu0 0
      %953 = vmatpush1.bf16.xpose.msra.mxu0 %v950
      %954 = vmatprep.subr.bf16.mxu0 0
      %955 = vmatpush1.bf16.xpose.msra.mxu0 0
      %956 = vmatprep.subr.bf16.mxu0 0
      %957 = vmatpush1.bf16.xpose.msra.mxu0 0
      %958 = vmatprep.subr.bf16.mxu0 0
      %959 = vmatpush1.bf16.xpose.msra.mxu0 0
      %960 = vmatprep.subr.bf16.mxu0 0
      %961 = vmatpush1.bf16.xpose.msra.mxu0 0
      %962 = vmatprep.subr.bf16.mxu0 0
      %963 = vmatpush1.bf16.xpose.msra.mxu0 0
      %964 = vmatprep.subr.bf16.mxu0 0
      %965 = vmatpush1.bf16.xpose.msra.mxu0 0
      %966 = vmatprep.subr.bf16.mxu0 0
      %967 = vmatpush1.bf16.xpose.msra.mxu0 0
      %968 = vmatprep.subr.bf16.mxu0 0
      %969 = vmatpush1.bf16.xpose.msra.mxu0 0
      %970 = vmatprep.subr.bf16.mxu0 0
      %971 = vmatpush1.bf16.xpose.msra.mxu0 0
      %972 = vmatprep.subr.bf16.mxu0 0
      %973 = vmatpush1.bf16.xpose.msra.mxu0 0
      %974 = vmatprep.subr.bf16.mxu0 0
      %975 = vmatpush1.bf16.xpose.msra.mxu0 0
      %976 = vmatprep.subr.bf16.mxu0 0
      %977 = vmatpush1.bf16.xpose.msra.mxu0 0
      %978 = vmatprep.subr.bf16.mxu0 0
      %979 = vmatpush1.bf16.xpose.msra.mxu0 0
      %980 = vmatprep.subr.bf16.mxu0 0
      %981 = vmatpush1.bf16.xpose.msra.mxu0 0
      %982 = vmatprep.subr.bf16.mxu0 0
      %983 = vmatpush1.bf16.xpose.msra.mxu0 0
      %984 = vmatprep.mubr.bf16.mxu0 0
      %985 = vmatmul.mubr.bf16.gmra.mrb[0].mxu0 %v947
      %v986 = vpop.f32.mrb[0].mxu0
      %v987 = vadd.f32 0.0, %v986
      %v988 = vpop.f32.mrb[0].mxu0
      %v989 = vpop.f32.mrb[0].mxu0
      %v990 = vpop.f32.mrb[0].mxu0
      %991 = vdwg.mxu0
      %v992 = vmul.f32 %v987, 0.17677669
      %vm993 = vcmask 64512
      %v994 = vsel %vm993, %v992, -inf
      %995 = vmax.xlane.f32.xlu0 %v994
      %v996 = vpop.xlane.xlu0 %995
      %v997 = vsub.f32 %v992, %v996
      %v998 = vmul.f32 %v997, 1.442695
      %v999 = vpow.pop %v998
      %v1000 = vsel %vm993, %v999, 0.0
      %1001 = vadd.xlane.f32.xlu0 %v1000
      %v1002 = vpop.xlane.xlu0 %1001
      %v1003 = vrcp.pop %v1002
      %v1004 = vmul.f32 %v999, %v1003
      %v1005 = vpack.c.bf16 %v1004, %v1004
      %v1006 = vpack.c.bf16 %v939, %v939
      %v1008 = vsel %vm993, %v1005, 0
      %vm1010 = vcmask 1043456
      %v1012 = vsel %vm1010, %v1006, 0
      %1014 = vmatprep.subr.bf16.mxu0 0
      %1015 = vmatpush1.bf16.msra.mxu0 %v1012
      %1016 = vmatprep.subr.bf16.mxu0 0
      %1017 = vmatpush1.bf16.msra.mxu0 0
      %1018 = vmatprep.subr.bf16.mxu0 0
      %1019 = vmatpush1.bf16.msra.mxu0 0
      %1020 = vmatprep.subr.bf16.mxu0 0
      %1021 = vmatpush1.bf16.msra.mxu0 0
      %1022 = vmatprep.subr.bf16.mxu0 0
      %1023 = vmatpush1.bf16.msra.mxu0 0
      %1024 = vmatprep.subr.bf16.mxu0 0
      %1025 = vmatpush1.bf16.msra.mxu0 0
      %1026 = vmatprep.subr.bf16.mxu0 0
      %1027 = vmatpush1.bf16.msra.mxu0 0
      %1028 = vmatprep.subr.bf16.mxu0 0
      %1029 = vmatpush1.bf16.msra.mxu0 0
      %1030 = vmatprep.subr.bf16.mxu0 0
      %1031 = vmatpush1.bf16.msra.mxu0 0
      %1032 = vmatprep.subr.bf16.mxu0 0
      %1033 = vmatpush1.bf16.msra.mxu0 0
      %1034 = vmatprep.subr.bf16.mxu0 0
      %1035 = vmatpush1.bf16.msra.mxu0 0
      %1036 = vmatprep.subr.bf16.mxu0 0
      %1037 = vmatpush1.bf16.msra.mxu0 0
      %1038 = vmatprep.subr.bf16.mxu0 0
      %1039 = vmatpush1.bf16.msra.mxu0 0
      %1040 = vmatprep.subr.bf16.mxu0 0
      %1041 = vmatpush1.bf16.msra.mxu0 0
      %1042 = vmatprep.subr.bf16.mxu0 0
      %1043 = vmatpush1.bf16.msra.mxu0 0
      %1044 = vmatprep.subr.bf16.mxu0 0
      %1045 = vmatpush1.bf16.msra.mxu0 0
      %1046 = vmatprep.mubr.bf16.mxu0 0
      %1047 = vmatmul.mubr.bf16.gmra.mrb[0].mxu0 %v1008
      %v1048 = vpop.f32.mrb[0].mxu0
      %v1049 = vadd.f32 0.0, %v1048
      %v1050 = vpop.f32.mrb[0].mxu0
      %v1051 = vpop.f32.mrb[0].mxu0
      %v1052 = vpop.f32.mrb[0].mxu0
      %1053 = vdwg.mxu0
      %v1054 = vpack.c.bf16 %v1049, %v1049
      %v1055 = vld [vmem:[%s10] sm:$0xf]
      %v1056 = vld [vmem:[%s10 + $0x4] sm:$0xf]
      %v1057 = vld [vmem:[%s10 + $0x8] sm:$0xf]
      %v1058 = vld [vmem:[%s10 + $0xc] sm:$0xf]
      %v1059 = vld [vmem:[%s11] sm:$0x1]
      %v1061 = vlaneseq
      %v1062 = vshrl.u32 %v1061, 7
      %v1063 = vsub.s32 0, %v1062
      %v1064 = vrot.slane %v1059, %v1063
      %v1070 = vunpack.c.l.b16 %v1055
      %v1071 = vunpack.c.l.b16 %v1056
      %v1072 = vunpack.c.l.b16 %v1057
      %v1073 = vunpack.c.l.b16 %v1058
      %v1074 = vpack.c.b16 %v1071, %v1070
      %v1075 = vpack.c.b16 %v1073, %v1072
      %v1079 = vsel %vm705, %v1054, 0
      %1081 = vmatprep.subr.bf16.mxu0 0
      %1082 = vmatpush1.bf16.msra.mxu0 %v1074
      %1083 = vmatprep.subr.bf16.mxu0 0
      %1084 = vmatpush1.bf16.msra.mxu0 %v1075
      %1085 = vmatprep.subr.bf16.mxu0 0
      %1086 = vmatpush1.bf16.msra.mxu0 0
      %1087 = vmatprep.subr.bf16.mxu0 0
      %1088 = vmatpush1.bf16.msra.mxu0 0
      %1089 = vmatprep.subr.bf16.mxu0 0
      %1090 = vmatpush1.bf16.msra.mxu0 0
      %1091 = vmatprep.subr.bf16.mxu0 0
      %1092 = vmatpush1.bf16.msra.mxu0 0
      %1093 = vmatprep.subr.bf16.mxu0 0
      %1094 = vmatpush1.bf16.msra.mxu0 0
      %1095 = vmatprep.subr.bf16.mxu0 0
      %1096 = vmatpush1.bf16.msra.mxu0 0
      %1097 = vmatprep.subr.bf16.mxu0 0
      %1098 = vmatpush1.bf16.msra.mxu0 0
      %1099 = vmatprep.subr.bf16.mxu0 0
      %1100 = vmatpush1.bf16.msra.mxu0 0
      %1101 = vmatprep.subr.bf16.mxu0 0
      %1102 = vmatpush1.bf16.msra.mxu0 0
      %1103 = vmatprep.subr.bf16.mxu0 0
      %1104 = vmatpush1.bf16.msra.mxu0 0
      %1105 = vmatprep.subr.bf16.mxu0 0
      %1106 = vmatpush1.bf16.msra.mxu0 0
      %1107 = vmatprep.subr.bf16.mxu0 0
      %1108 = vmatpush1.bf16.msra.mxu0 0
      %1109 = vmatprep.subr.bf16.mxu0 0
      %1110 = vmatpush1.bf16.msra.mxu0 0
      %1111 = vmatprep.subr.bf16.mxu0 0
      %1112 = vmatpush1.bf16.msra.mxu0 0
      %1113 = vmatprep.mubr.bf16.mxu0 0
      %1114 = vmatmul.mubr.bf16.gmra.mrb[0].mxu0 %v1079
      %v1115 = vpop.f32.mrb[0].mxu0
      %v1116 = vadd.f32 %v1064, %v1115
      %v1117 = vpop.f32.mrb[0].mxu0
      %v1118 = vpop.f32.mrb[0].mxu0
      %v1119 = vpop.f32.mrb[0].mxu0
      %1120 = vdwg.mxu0
      %v1121 = vadd.f32 %v750, %v1116
      %v1122 = vld [vmem:[%s12] sm:$0x1]
      %v1123 = vld [vmem:[%s13] sm:$0x1]
      %v1124 = vsel %vm705, %v1121, 0.0
      %1125 = vadd.xlane.f32.xlu0 %v1124
      %v1126 = vpop.xlane.xlu0 %1125
      %v1127 = vrcp.pop 32.0
      %v1128 = vmul.f32 %v1126, %v1127
      %v1129 = vsub.f32 %v1121, %v1128
      %v1130 = vmul.f32 %v1129, %v1129
      %v1131 = vsel %vm705, %v1130, 0.0
      %1132 = vadd.xlane.f32.xlu0 %v1131
      %v1133 = vpop.xlane.xlu0 %1132
      %v1134 = vmul.f32 %v1133, %v1127
      %v1135 = vadd.f32 %v1134, 1e-05
      %v1136 = vrsqrt.pop %v1135
      %v1137 = vmul.f32 %v1129, %v1136
      %v1139 = vlaneseq
      %v1140 = vshrl.u32 %v1139, 7
      %v1141 = vsub.s32 0, %v1140
      %v1142 = vrot.slane %v1122, %v1141
      %v1144 = vmul.f32 %v1137, %v1142
      %v1146 = vlaneseq
      %v1147 = vshrl.u32 %v1146, 7
      %v1148 = vsub.s32 0, %v1147
      %v1149 = vrot.slane %v1123, %v1148
      %v1151 = vadd.f32 %v1144, %v1149
      %v1152 = vpack.c.bf16 %v1151, %v1151
      %v1153 = vld [vmem:[%s14] sm:$0xff]
      %v1154 = vld [vmem:[%s14 + $0x8] sm:$0xff]
      %v1155 = vld [vmem:[%s14 + $0x10] sm:$0xff]
      %v1156 = vld [vmem:[%s14 + $0x18] sm:$0xff]
      %v1157 = vld [vmem:[%s14 + $0x20] sm:$0xff]
      %v1158 = vld [vmem:[%s14 + $0x28] sm:$0xff]
      %v1159 = vld [vmem:[%s14 + $0x30] sm:$0xff]
      %v1160 = vld [vmem:[%s14 + $0x38] sm:$0xff]
      %v1161 = vld [vmem:[%s14 + $0x40] sm:$0xff]
      %v1162 = vld [vmem:[%s14 + $0x48] sm:$0xff]
      %v1163 = vld [vmem:[%s14 + $0x50] sm:$0xff]
      %v1164 = vld [vmem:[%s14 + $0x58] sm:$0xff]
      %v1165 = vld [vmem:[%s14 + $0x60] sm:$0xff]
      %v1166 = vld [vmem:[%s14 + $0x68] sm:$0xff]
      %v1167 = vld [vmem:[%s14 + $0x70] sm:$0xff]
      %v1168 = vld [vmem:[%s14 + $0x78] sm:$0xff]
      %v1169 = vld [vmem:[%s14 + $0x80] sm:$0xff]
      %v1170 = vld [vmem:[%s14 + $0x88] sm:$0xff]
      %v1171 = vld [vmem:[%s14 + $0x90] sm:$0xff]
      %v1172 = vld [vmem:[%s14 + $0x98] sm:$0xff]
      %v1173 = vld [vmem:[%s14 + $0xa0] sm:$0xff]
      %v1174 = vld [vmem:[%s14 + $0xa8] sm:$0xff]
      %v1175 = vld [vmem:[%s14 + $0xb0] sm:$0xff]
      %v1176 = vld [vmem:[%s14 + $0xb8] sm:$0xff]
      %v1177 = vld [vmem:[%s14 + $0xc0] sm:$0xff]
      %v1178 = vld [vmem:[%s14 + $0xc8] sm:$0xff]
      %v1179 = vld [vmem:[%s14 + $0xd0] sm:$0xff]
      %v1180 = vld [vmem:[%s14 + $0xd8] sm:$0xff]
      %v1181 = vld [vmem:[%s14 + $0xe0] sm:$0xff]
      %v1182 = vld [vmem:[%s14 + $0xe8] sm:$0xff]
      %v1183 = vld [vmem:[%s14 + $0xf0] sm:$0xff]
      %v1184 = vld [vmem:[%s14 + $0xf8] sm:$0xff]
      %v1185 = vld [vmem:[%s15] sm:$0xff]
      %v1186 = vld [vmem:[%s15 + $0x8] sm:$0xff]
      %v1189 = vlaneseq
      %v1190 = vshrl.u32 %v1189, 7
      %v1191 = vsub.s32 0, %v1190
      %v1192 = vrot.slane %v1185, %v1191
      %v1193 = vlaneseq
      %v1194 = vshrl.u32 %v1193, 7
      %v1195 = vsub.s32 1, %v1194
      %v1196 = vrot.slane %v1185, %v1195
      %v1197 = vlaneseq
      %v1198 = vshrl.u32 %v1197, 7
      %v1199 = vsub.s32 2, %v1198
      %v1200 = vrot.slane %v1185, %v1199
      %v1201 = vlaneseq
      %v1202 = vshrl.u32 %v1201, 7
      %v1203 = vsub.s32 3, %v1202
      %v1204 = vrot.slane %v1185, %v1203
      %v1205 = vlaneseq
      %v1206 = vshrl.u32 %v1205, 7
      %v1207 = vsub.s32 4, %v1206
      %v1208 = vrot.slane %v1185, %v1207
      %v1209 = vlaneseq
      %v1210 = vshrl.u32 %v1209, 7
      %v1211 = vsub.s32 5, %v1210
      %v1212 = vrot.slane %v1185, %v1211
      %v1213 = vlaneseq
      %v1214 = vshrl.u32 %v1213, 7
      %v1215 = vsub.s32 6, %v1214
      %v1216 = vrot.slane %v1185, %v1215
      %v1217 = vlaneseq
      %v1218 = vshrl.u32 %v1217, 7
      %v1219 = vsub.s32 7, %v1218
      %v1220 = vrot.slane %v1185, %v1219
      %v1221 = vlaneseq
      %v1222 = vshrl.u32 %v1221, 7
      %v1223 = vsub.s32 0, %v1222
      %v1224 = vrot.slane %v1186, %v1223
      %v1225 = vlaneseq
      %v1226 = vshrl.u32 %v1225, 7
      %v1227 = vsub.s32 1, %v1226
      %v1228 = vrot.slane %v1186, %v1227
      %v1229 = vlaneseq
      %v1230 = vshrl.u32 %v1229, 7
      %v1231 = vsub.s32 2, %v1230
      %v1232 = vrot.slane %v1186, %v1231
      %v1233 = vlaneseq
      %v1234 = vshrl.u32 %v1233, 7
      %v1235 = vsub.s32 3, %v1234
      %v1236 = vrot.slane %v1186, %v1235
      %v1237 = vlaneseq
      %v1238 = vshrl.u32 %v1237, 7
      %v1239 = vsub.s32 4, %v1238
      %v1240 = vrot.slane %v1186, %v1239
      %v1241 = vlaneseq
      %v1242 = vshrl.u32 %v1241, 7
      %v1243 = vsub.s32 5, %v1242
      %v1244 = vrot.slane %v1186, %v1243
      %v1245 = vlaneseq
      %v1246 = vshrl.u32 %v1245, 7
      %v1247 = vsub.s32 6, %v1246
      %v1248 = vrot.slane %v1186, %v1247
      %v1249 = vlaneseq
      %v1250 = vshrl.u32 %v1249, 7
      %v1251 = vsub.s32 7, %v1250
      %v1252 = vrot.slane %v1186, %v1251
      %v1301 = vunpack.c.l.b16 %v1153
      %v1302 = vunpack.c.h.b16 %v1153
      %v1303 = vunpack.c.l.b16 %v1154
      %v1304 = vunpack.c.h.b16 %v1154
      %v1305 = vunpack.c.l.b16 %v1155
      %v1306 = vunpack.c.h.b16 %v1155
      %v1307 = vunpack.c.l.b16 %v1156
      %v1308 = vunpack.c.h.b16 %v1156
      %v1309 = vunpack.c.l.b16 %v1157
      %v1310 = vunpack.c.h.b16 %v1157
      %v1311 = vunpack.c.l.b16 %v1158
      %v1312 = vunpack.c.h.b16 %v1158
      %v1313 = vunpack.c.l.b16 %v1159
      %v1314 = vunpack.c.h.b16 %v1159
      %v1315 = vunpack.c.l.b16 %v1160
      %v1316 = vunpack.c.h.b16 %v1160
      %v1317 = vunpack.c.l.b16 %v1161
      %v1318 = vunpack.c.h.b16 %v1161
      %v1319 = vunpack.c.l.b16 %v1162
      %v1320 = vunpack.c.h.b16 %v1162
      %v1321 = vunpack.c.l.b16 %v1163
      %v1322 = vunpack.c.h.b16 %v1163
      %v1323 = vunpack.c.l.b16 %v1164
      %v1324 = vunpack.c.h.b16 %v1164
      %v1325 = vunpack.c.l.b16 %v1165
      %v1326 = vunpack.c.h.b16 %v1165
      %v1327 = vunpack.c.l.b16 %v1166
      %v1328 = vunpack.c.h.b16 %v1166
      %v1329 = vunpack.c.l.b16 %v1167
      %v1330 = vunpack.c.h.b16 %v1167
      %v1331 = vunpack.c.l.b16 %v1168
      %v1332 = vunpack.c.h.b16 %v1168
      %v1333 = vunpack.c.l.b16 %v1169
      %v1334 = vunpack.c.h.b16 %v1169
      %v1335 = vunpack.c.l.b16 %v1170
      %v1336 = vunpack.c.h.b16 %v1170
      %v1337 = vunpack.c.l.b16 %v1171
      %v1338 = vunpack.c.h.b16 %v1171
      %v1339 = vunpack.c.l.b16 %v1172
      %v1340 = vunpack.c.h.b16 %v1172
      %v1341 = vunpack.c.l.b16 %v1173
      %v1342 = vunpack.c.h.b16 %v1173
      %v1343 = vunpack.c.l.b16 %v1174
      %v1344 = vunpack.c.h.b16 %v1174
      %v1345 = vunpack.c.l.b16 %v1175
      %v1346 = vunpack.c.h.b16 %v1175
      %v1347 = vunpack.c.l.b16 %v1176
      %v1348 = vunpack.c.h.b16 %v1176
      %v1349 = vunpack.c.l.b16 %v1177
      %v1350 = vunpack.c.h.b16 %v1177
      %v1351 = vunpack.c.l.b16 %v1178
      %v1352 = vunpack.c.h.b16 %v1178
      %v1353 = vunpack.c.l.b16 %v1179
      %v1354 = vunpack.c.h.b16 %v1179
      %v1355 = vunpack.c.l.b16 %v1180
      %v1356 = vunpack.c.h.b16 %v1180
      %v1357 = vunpack.c.l.b16 %v1181
      %v1358 = vunpack.c.h.b16 %v1181
      %v1359 = vunpack.c.l.b16 %v1182
      %v1360 = vunpack.c.h.b16 %v1182
      %v1361 = vunpack.c.l.b16 %v1183
      %v1362 = vunpack.c.h.b16 %v1183
      %v1363 = vunpack.c.l.b16 %v1184
      %v1364 = vunpack.c.h.b16 %v1184
      %v1365 = vpack.c.b16 %v1317, %v1301
      %v1366 = vpack.c.b16 %v1318, %v1302
      %v1367 = vpack.c.b16 %v1319, %v1303
      %v1368 = vpack.c.b16 %v1320, %v1304
      %v1369 = vpack.c.b16 %v1321, %v1305
      %v1370 = vpack.c.b16 %v1322, %v1306
      %v1371 = vpack.c.b16 %v1323, %v1307
      %v1372 = vpack.c.b16 %v1324, %v1308
      %v1373 = vpack.c.b16 %v1325, %v1309
      %v1374 = vpack.c.b16 %v1326, %v1310
      %v1375 = vpack.c.b16 %v1327, %v1311
      %v1376 = vpack.c.b16 %v1328, %v1312
      %v1377 = vpack.c.b16 %v1329, %v1313
      %v1378 = vpack.c.b16 %v1330, %v1314
      %v1379 = vpack.c.b16 %v1331, %v1315
      %v1380 = vpack.c.b16 %v1332, %v1316
      %v1381 = vpack.c.b16 %v1349, %v1333
      %v1382 = vpack.c.b16 %v1350, %v1334
      %v1383 = vpack.c.b16 %v1351, %v1335
      %v1384 = vpack.c.b16 %v1352, %v1336
      %v1385 = vpack.c.b16 %v1353, %v1337
      %v1386 = vpack.c.b16 %v1354, %v1338
      %v1387 = vpack.c.b16 %v1355, %v1339
      %v1388 = vpack.c.b16 %v1356, %v1340
      %v1389 = vpack.c.b16 %v1357, %v1341
      %v1390 = vpack.c.b16 %v1358, %v1342
      %v1391 = vpack.c.b16 %v1359, %v1343
      %v1392 = vpack.c.b16 %v1360, %v1344
      %v1393 = vpack.c.b16 %v1361, %v1345
      %v1394 = vpack.c.b16 %v1362, %v1346
      %v1395 = vpack.c.b16 %v1363, %v1347
      %v1396 = vpack.c.b16 %v1364, %v1348
      %v1430 = vsel %vm705, %v1152, 0
      %1432 = vmatprep.subr.bf16.mxu0 %v1366
      %1433 = vmatpush1.bf16.msra.mxu0 %v1365
      %1434 = vmatprep.subr.bf16.mxu0 %v1382
      %1435 = vmatpush1.bf16.msra.mxu0 %v1381
      %1436 = vmatprep.subr.bf16.mxu0 0
      %1437 = vmatpush1.bf16.msra.mxu0 0
      %1438 = vmatprep.subr.bf16.mxu0 0
      %1439 = vmatpush1.bf16.msra.mxu0 0
      %1440 = vmatprep.subr.bf16.mxu0 0
      %1441 = vmatpush1.bf16.msra.mxu0 0
      %1442 = vmatprep.subr.bf16.mxu0 0
      %1443 = vmatpush1.bf16.msra.mxu0 0
      %1444 = vmatprep.subr.bf16.mxu0 0
      %1445 = vmatpush1.bf16.msra.mxu0 0
      %1446 = vmatprep.subr.bf16.mxu0 0
      %1447 = vmatpush1.bf16.msra.mxu0 0
      %1448 = vmatprep.subr.bf16.mxu0 0
      %1449 = vmatpush1.bf16.msra.mxu0 0
      %1450 = vmatprep.subr.bf16.mxu0 0
      %1451 = vmatpush1.bf16.msra.mxu0 0
      %1452 = vmatprep.subr.bf16.mxu0 0
      %1453 = vmatpush1.bf16.msra.mxu0 0
      %1454 = vmatprep.subr.bf16.mxu0 0
      %1455 = vmatpush1.bf16.msra.mxu0 0
      %1456 = vmatprep.subr.bf16.mxu0 0
      %1457 = vmatpush1.bf16.msra.mxu0 0
      %1458 = vmatprep.subr.bf16.mxu0 0
      %1459 = vmatpush1.bf16.msra.mxu0 0
      %1460 = vmatprep.subr.bf16.mxu0 0
      %1461 = vmatpush1.bf16.msra.mxu0 0
      %1462 = vmatprep.subr.bf16.mxu0 0
      %1463 = vmatpush1.bf16.msra.mxu0 0
      %1464 = vmatprep.mubr.bf16.mxu0 0
      %1465 = vmatmul.mubr.bf16.gmra.mrb[0].mxu0 %v1430
      %v1466 = vpop.f32.mrb[0].mxu0
      %v1467 = vadd.f32 %v1192, %v1466
      %v1468 = vpop.f32.mrb[0].mxu0
      %v1469 = vadd.f32 %v1196, %v1468
      %v1470 = vpop.f32.mrb[0].mxu0
      %v1471 = vpop.f32.mrb[0].mxu0
      %1472 = vdwg.mxu0
      %1473 = vmatprep.subr.bf16.mxu0 %v1368
      %1474 = vmatpush1.bf16.msra.mxu0 %v1367
      %1475 = vmatprep.subr.bf16.mxu0 %v1384
      %1476 = vmatpush1.bf16.msra.mxu0 %v1383
      %1477 = vmatprep.subr.bf16.mxu0 0
      %1478 = vmatpush1.bf16.msra.mxu0 0
      %1479 = vmatprep.subr.bf16.mxu0 0
      %1480 = vmatpush1.bf16.msra.mxu0 0
      %1481 = vmatprep.subr.bf16.mxu0 0
      %1482 = vmatpush1.bf16.msra.mxu0 0
      %1483 = vmatprep.subr.bf16.mxu0 0
      %1484 = vmatpush1.bf16.msra.mxu0 0
      %1485 = vmatprep.subr.bf16.mxu0 0
      %1486 = vmatpush1.bf16.msra.mxu0 0
      %1487 = vmatprep.subr.bf16.mxu0 0
      %1488 = vmatpush1.bf16.msra.mxu0 0
      %1489 = vmatprep.subr.bf16.mxu0 0
      %1490 = vmatpush1.bf16.msra.mxu0 0
      %1491 = vmatprep.subr.bf16.mxu0 0
      %1492 = vmatpush1.bf16.msra.mxu0 0
      %1493 = vmatprep.subr.bf16.mxu0 0
      %1494 = vmatpush1.bf16.msra.mxu0 0
      %1495 = vmatprep.subr.bf16.mxu0 0
      %1496 = vmatpush1.bf16.msra.mxu0 0
      %1497 = vmatprep.subr.bf16.mxu0 0
      %1498 = vmatpush1.bf16.msra.mxu0 0
      %1499 = vmatprep.subr.bf16.mxu0 0
      %1500 = vmatpush1.bf16.msra.mxu0 0
      %1501 = vmatprep.subr.bf16.mxu0 0
      %1502 = vmatpush1.bf16.msra.mxu0 0
      %1503 = vmatprep.subr.bf16.mxu0 0
      %1504 = vmatpush1.bf16.msra.mxu0 0
      %1505 = vmatprep.mubr.bf16.mxu0 0
      %1506 = vmatmul.mubr.bf16.gmra.mrb[0].mxu0 %v1430
      %v1507 = vpop.f32.mrb[0].mxu0
      %v1508 = vadd.f32 %v1200, %v1507
      %v1509 = vpop.f32.mrb[0].mxu0
      %v1510 = vadd.f32 %v1204, %v1509
      %v1511 = vpop.f32.mrb[0].mxu0
      %v1512 = vpop.f32.mrb[0].mxu0
      %1513 = vdwg.mxu0
      %1514 = vmatprep.subr.bf16.mxu0 %v1370
      %1515 = vmatpush1.bf16.msra.mxu0 %v1369
      %1516 = vmatprep.subr.bf16.mxu0 %v1386
      %1517 = vmatpush1.bf16.msra.mxu0 %v1385
      %1518 = vmatprep.subr.bf16.mxu0 0
      %1519 = vmatpush1.bf16.msra.mxu0 0
      %1520 = vmatprep.subr.bf16.mxu0 0
      %1521 = vmatpush1.bf16.msra.mxu0 0
      %1522 = vmatprep.subr.bf16.mxu0 0
      %1523 = vmatpush1.bf16.msra.mxu0 0
      %1524 = vmatprep.subr.bf16.mxu0 0
      %1525 = vmatpush1.bf16.msra.mxu0 0
      %1526 = vmatprep.subr.bf16.mxu0 0
      %1527 = vmatpush1.bf16.msra.mxu0 0
      %1528 = vmatprep.subr.bf16.mxu0 0
      %1529 = vmatpush1.bf16.msra.mxu0 0
      %1530 = vmatprep.subr.bf16.mxu0 0
      %1531 = vmatpush1.bf16.msra.mxu0 0
      %1532 = vmatprep.subr.bf16.mxu0 0
      %1533 = vmatpush1.bf16.msra.mxu0 0
      %1534 = vmatprep.subr.bf16.mxu0 0
      %1535 = vmatpush1.bf16.msra.mxu0 0
      %1536 = vmatprep.subr.bf16.mxu0 0
      %1537 = vmatpush1.bf16.msra.mxu0 0
      %1538 = vmatprep.subr.bf16.mxu0 0
      %1539 = vmatpush1.bf16.msra.mxu0 0
      %1540 = vmatprep.subr.bf16.mxu0 0
      %1541 = vmatpush1.bf16.msra.mxu0 0
      %1542 = vmatprep.subr.bf16.mxu0 0
      %1543 = vmatpush1.bf16.msra.mxu0 0
      %1544 = vmatprep.subr.bf16.mxu0 0
      %1545 = vmatpush1.bf16.msra.mxu0 0
      %1546 = vmatprep.mubr.bf16.mxu0 0
      %1547 = vmatmul.mubr.bf16.gmra.mrb[0].mxu0 %v1430
      %v1548 = vpop.f32.mrb[0].mxu0
      %v1549 = vadd.f32 %v1208, %v1548
      %v1550 = vpop.f32.mrb[0].mxu0
      %v1551 = vadd.f32 %v1212, %v1550
      %v1552 = vpop.f32.mrb[0].mxu0
      %v1553 = vpop.f32.mrb[0].mxu0
      %1554 = vdwg.mxu0
      %1555 = vmatprep.subr.bf16.mxu0 %v1372
      %1556 = vmatpush1.bf16.msra.mxu0 %v1371
      %1557 = vmatprep.subr.bf16.mxu0 %v1388
      %1558 = vmatpush1.bf16.msra.mxu0 %v1387
      %1559 = vmatprep.subr.bf16.mxu0 0
      %1560 = vmatpush1.bf16.msra.mxu0 0
      %1561 = vmatprep.subr.bf16.mxu0 0
      %1562 = vmatpush1.bf16.msra.mxu0 0
      %1563 = vmatprep.subr.bf16.mxu0 0
      %1564 = vmatpush1.bf16.msra.mxu0 0
      %1565 = vmatprep.subr.bf16.mxu0 0
      %1566 = vmatpush1.bf16.msra.mxu0 0
      %1567 = vmatprep.subr.bf16.mxu0 0
      %1568 = vmatpush1.bf16.msra.mxu0 0
      %1569 = vmatprep.subr.bf16.mxu0 0
      %1570 = vmatpush1.bf16.msra.mxu0 0
      %1571 = vmatprep.subr.bf16.mxu0 0
      %1572 = vmatpush1.bf16.msra.mxu0 0
      %1573 = vmatprep.subr.bf16.mxu0 0
      %1574 = vmatpush1.bf16.msra.mxu0 0
      %1575 = vmatprep.subr.bf16.mxu0 0
      %1576 = vmatpush1.bf16.msra.mxu0 0
      %1577 = vmatprep.subr.bf16.mxu0 0
      %1578 = vmatpush1.bf16.msra.mxu0 0
      %1579 = vmatprep.subr.bf16.mxu0 0
      %1580 = vmatpush1.bf16.msra.mxu0 0
      %1581 = vmatprep.subr.bf16.mxu0 0
      %1582 = vmatpush1.bf16.msra.mxu0 0
      %1583 = vmatprep.subr.bf16.mxu0 0
      %1584 = vmatpush1.bf16.msra.mxu0 0
      %1585 = vmatprep.subr.bf16.mxu0 0
      %1586 = vmatpush1.bf16.msra.mxu0 0
      %1587 = vmatprep.mubr.bf16.mxu0 0
      %1588 = vmatmul.mubr.bf16.gmra.mrb[0].mxu0 %v1430
      %v1589 = vpop.f32.mrb[0].mxu0
      %v1590 = vadd.f32 %v1216, %v1589
      %v1591 = vpop.f32.mrb[0].mxu0
      %v1592 = vadd.f32 %v1220, %v1591
      %v1593 = vpop.f32.mrb[0].mxu0
      %v1594 = vpop.f32.mrb[0].mxu0
      %1595 = vdwg.mxu0
      %1596 = vmatprep.subr.bf16.mxu0 %v1374
      %1597 = vmatpush1.bf16.msra.mxu0 %v1373
      %1598 = vmatprep.subr.bf16.mxu0 %v1390
      %1599 = vmatpush1.bf16.msra.mxu0 %v1389
      %1600 = vmatprep.subr.bf16.mxu0 0
      %1601 = vmatpush1.bf16.msra.mxu0 0
      %1602 = vmatprep.subr.bf16.mxu0 0
      %1603 = vmatpush1.bf16.msra.mxu0 0
      %1604 = vmatprep.subr.bf16.mxu0 0
      %1605 = vmatpush1.bf16.msra.mxu0 0
      %1606 = vmatprep.subr.bf16.mxu0 0
      %1607 = vmatpush1.bf16.msra.mxu0 0
      %1608 = vmatprep.subr.bf16.mxu0 0
      %1609 = vmatpush1.bf16.msra.mxu0 0
      %1610 = vmatprep.subr.bf16.mxu0 0
      %1611 = vmatpush1.bf16.msra.mxu0 0
      %1612 = vmatprep.subr.bf16.mxu0 0
      %1613 = vmatpush1.bf16.msra.mxu0 0
      %1614 = vmatprep.subr.bf16.mxu0 0
      %1615 = vmatpush1.bf16.msra.mxu0 0
      %1616 = vmatprep.subr.bf16.mxu0 0
      %1617 = vmatpush1.bf16.msra.mxu0 0
      %1618 = vmatprep.subr.bf16.mxu0 0
      %1619 = vmatpush1.bf16.msra.mxu0 0
      %1620 = vmatprep.subr.bf16.mxu0 0
      %1621 = vmatpush1.bf16.msra.mxu0 0
      %1622 = vmatprep.subr.bf16.mxu0 0
      %1623 = vmatpush1.bf16.msra.mxu0 0
      %1624 = vmatprep.subr.bf16.mxu0 0
      %1625 = vmatpush1.bf16.msra.mxu0 0
      %1626 = vmatprep.subr.bf16.mxu0 0
      %1627 = vmatpush1.bf16.msra.mxu0 0
      %1628 = vmatprep.mubr.bf16.mxu0 0
      %1629 = vmatmul.mubr.bf16.gmra.mrb[0].mxu0 %v1430
      %v1630 = vpop.f32.mrb[0].mxu0
      %v1631 = vadd.f32 %v1224, %v1630
      %v1632 = vpop.f32.mrb[0].mxu0
      %v1633 = vadd.f32 %v1228, %v1632
      %v1634 = vpop.f32.mrb[0].mxu0
      %v1635 = vpop.f32.mrb[0].mxu0
      %1636 = vdwg.mxu0
      %1637 = vmatprep.subr.bf16.mxu0 %v1376
      %1638 = vmatpush1.bf16.msra.mxu0 %v1375
      %1639 = vmatprep.subr.bf16.mxu0 %v1392
      %1640 = vmatpush1.bf16.msra.mxu0 %v1391
      %1641 = vmatprep.subr.bf16.mxu0 0
      %1642 = vmatpush1.bf16.msra.mxu0 0
      %1643 = vmatprep.subr.bf16.mxu0 0
      %1644 = vmatpush1.bf16.msra.mxu0 0
      %1645 = vmatprep.subr.bf16.mxu0 0
      %1646 = vmatpush1.bf16.msra.mxu0 0
      %1647 = vmatprep.subr.bf16.mxu0 0
      %1648 = vmatpush1.bf16.msra.mxu0 0
      %1649 = vmatprep.subr.bf16.mxu0 0
      %1650 = vmatpush1.bf16.msra.mxu0 0
      %1651 = vmatprep.subr.bf16.mxu0 0
      %1652 = vmatpush1.bf16.msra.mxu0 0
      %1653 = vmatprep.subr.bf16.mxu0 0
      %1654 = vmatpush1.bf16.msra.mxu0 0
      %1655 = vmatprep.subr.bf16.mxu0 0
      %1656 = vmatpush1.bf16.msra.mxu0 0
      %1657 = vmatprep.subr.bf16.mxu0 0
      %1658 = vmatpush1.bf16.msra.mxu0 0
      %1659 = vmatprep.subr.bf16.mxu0 0
      %1660 = vmatpush1.bf16.msra.mxu0 0
      %1661 = vmatprep.subr.bf16.mxu0 0
      %1662 = vmatpush1.bf16.msra.mxu0 0
      %1663 = vmatprep.subr.bf16.mxu0 0
      %1664 = vmatpush1.bf16.msra.mxu0 0
      %1665 = vmatprep.subr.bf16.mxu0 0
      %1666 = vmatpush1.bf16.msra.mxu0 0
      %1667 = vmatprep.subr.bf16.mxu0 0
      %1668 = vmatpush1.bf16.msra.mxu0 0
      %1669 = vmatprep.mubr.bf16.mxu0 0
      %1670 = vmatmul.mubr.bf16.gmra.mrb[0].mxu0 %v1430
      %v1671 = vpop.f32.mrb[0].mxu0
      %v1672 = vadd.f32 %v1232, %v1671
      %v1673 = vpop.f32.mrb[0].mxu0
      %v1674 = vadd.f32 %v1236, %v1673
      %v1675 = vpop.f32.mrb[0].mxu0
      %v1676 = vpop.f32.mrb[0].mxu0
      %1677 = vdwg.mxu0
      %1678 = vmatprep.subr.bf16.mxu0 %v1378
      %1679 = vmatpush1.bf16.msra.mxu0 %v1377
      %1680 = vmatprep.subr.bf16.mxu0 %v1394
      %1681 = vmatpush1.bf16.msra.mxu0 %v1393
      %1682 = vmatprep.subr.bf16.mxu0 0
      %1683 = vmatpush1.bf16.msra.mxu0 0
      %1684 = vmatprep.subr.bf16.mxu0 0
      %1685 = vmatpush1.bf16.msra.mxu0 0
      %1686 = vmatprep.subr.bf16.mxu0 0
      %1687 = vmatpush1.bf16.msra.mxu0 0
      %1688 = vmatprep.subr.bf16.mxu0 0
      %1689 = vmatpush1.bf16.msra.mxu0 0
      %1690 = vmatprep.subr.bf16.mxu0 0
      %1691 = vmatpush1.bf16.msra.mxu0 0
      %1692 = vmatprep.subr.bf16.mxu0 0
      %1693 = vmatpush1.bf16.msra.mxu0 0
      %1694 = vmatprep.subr.bf16.mxu0 0
      %1695 = vmatpush1.bf16.msra.mxu0 0
      %1696 = vmatprep.subr.bf16.mxu0 0
      %1697 = vmatpush1.bf16.msra.mxu0 0
      %1698 = vmatprep.subr.bf16.mxu0 0
      %1699 = vmatpush1.bf16.msra.mxu0 0
      %1700 = vmatprep.subr.bf16.mxu0 0
      %1701 = vmatpush1.bf16.msra.mxu0 0
      %1702 = vmatprep.subr.bf16.mxu0 0
      %1703 = vmatpush1.bf16.msra.mxu0 0
      %1704 = vmatprep.subr.bf16.mxu0 0
      %1705 = vmatpush1.bf16.msra.mxu0 0
      %1706 = vmatprep.subr.bf16.mxu0 0
      %1707 = vmatpush1.bf16.msra.mxu0 0
      %1708 = vmatprep.subr.bf16.mxu0 0
      %1709 = vmatpush1.bf16.msra.mxu0 0
      %1710 = vmatprep.mubr.bf16.mxu0 0
      %1711 = vmatmul.mubr.bf16.gmra.mrb[0].mxu0 %v1430
      %v1712 = vpop.f32.mrb[0].mxu0
      %v1713 = vadd.f32 %v1240, %v1712
      %v1714 = vpop.f32.mrb[0].mxu0
      %v1715 = vadd.f32 %v1244, %v1714
      %v1716 = vpop.f32.mrb[0].mxu0
      %v1717 = vpop.f32.mrb[0].mxu0
      %1718 = vdwg.mxu0
      %1719 = vmatprep.subr.bf16.mxu0 %v1380
      %1720 = vmatpush1.bf16.msra.mxu0 %v1379
      %1721 = vmatprep.subr.bf16.mxu0 %v1396
      %1722 = vmatpush1.bf16.msra.mxu0 %v1395
      %1723 = vmatprep.subr.bf16.mxu0 0
      %1724 = vmatpush1.bf16.msra.mxu0 0
      %1725 = vmatprep.subr.bf16.mxu0 0
      %1726 = vmatpush1.bf16.msra.mxu0 0
      %1727 = vmatprep.subr.bf16.mxu0 0
      %1728 = vmatpush1.bf16.msra.mxu0 0
      %1729 = vmatprep.subr.bf16.mxu0 0
      %1730 = vmatpush1.bf16.msra.mxu0 0
      %1731 = vmatprep.subr.bf16.mxu0 0
      %1732 = vmatpush1.bf16.msra.mxu0 0
      %1733 = vmatprep.subr.bf16.mxu0 0
      %1734 = vmatpush1.bf16.msra.mxu0 0
      %1735 = vmatprep.subr.bf16.mxu0 0
      %1736 = vmatpush1.bf16.msra.mxu0 0
      %1737 = vmatprep.subr.bf16.mxu0 0
      %1738 = vmatpush1.bf16.msra.mxu0 0
      %1739 = vmatprep.subr.bf16.mxu0 0
      %1740 = vmatpush1.bf16.msra.mxu0 0
      %1741 = vmatprep.subr.bf16.mxu0 0
      %1742 = vmatpush1.bf16.msra.mxu0 0
      %1743 = vmatprep.subr.bf16.mxu0 0
      %1744 = vmatpush1.bf16.msra.mxu0 0
      %1745 = vmatprep.subr.bf16.mxu0 0
      %1746 = vmatpush1.bf16.msra.mxu0 0
      %1747 = vmatprep.subr.bf16.mxu0 0
      %1748 = vmatpush1.bf16.msra.mxu0 0
      %1749 = vmatprep.subr.bf16.mxu0 0
      %1750 = vmatpush1.bf16.msra.mxu0 0
      %1751 = vmatprep.mubr.bf16.mxu0 0
      %1752 = vmatmul.mubr.bf16.gmra.mrb[0].mxu0 %v1430
      %v1753 = vpop.f32.mrb[0].mxu0
      %v1754 = vadd.f32 %v1248, %v1753
      %v1755 = vpop.f32.mrb[0].mxu0
      %v1756 = vadd.f32 %v1252, %v1755
      %v1757 = vpop.f32.mrb[0].mxu0
      %v1758 = vpop.f32.mrb[0].mxu0
      %1759 = vdwg.mxu0
      %v1760 = vmax.f32 %v1467, 0.0
      %v1761 = vmax.f32 %v1469, 0.0
      %v1762 = vmax.f32 %v1508, 0.0
      %v1763 = vmax.f32 %v1510, 0.0
      %v1764 = vmax.f32 %v1549, 0.0
      %v1765 = vmax.f32 %v1551, 0.0
      %v1766 = vmax.f32 %v1590, 0.0
      %v1767 = vmax.f32 %v1592, 0.0
      %v1768 = vmax.f32 %v1631, 0.0
      %v1769 = vmax.f32 %v1633, 0.0
      %v1770 = vmax.f32 %v1672, 0.0
      %v1771 = vmax.f32 %v1674, 0.0
      %v1772 = vmax.f32 %v1713, 0.0
      %v1773 = vmax.f32 %v1715, 0.0
      %v1774 = vmax.f32 %v1754, 0.0
      %v1775 = vmax.f32 %v1756, 0.0
      %v1776 = vpack.c.bf16 %v1760, %v1760
      %v1777 = vpack.c.bf16 %v1761, %v1761
      %v1778 = vpack.c.bf16 %v1762, %v1762
      %v1779 = vpack.c.bf16 %v1763, %v1763
      %v1780 = vpack.c.bf16 %v1764, %v1764
      %v1781 = vpack.c.bf16 %v1765, %v1765
      %v1782 = vpack.c.bf16 %v1766, %v1766
      %v1783 = vpack.c.bf16 %v1767, %v1767
      %v1784 = vpack.c.bf16 %v1768, %v1768
      %v1785 = vpack.c.bf16 %v1769, %v1769
      %v1786 = vpack.c.bf16 %v1770, %v1770
      %v1787 = vpack.c.bf16 %v1771, %v1771
      %v1788 = vpack.c.bf16 %v1772, %v1772
      %v1789 = vpack.c.bf16 %v1773, %v1773
      %v1790 = vpack.c.bf16 %v1774, %v1774
      %v1791 = vpack.c.bf16 %v1775, %v1775
      %v1792 = vld [vmem:[%s16] sm:$0xf]
      %v1793 = vld [vmem:[%s16 + $0x4] sm:$0xf]
      %v1794 = vld [vmem:[%s16 + $0x8] sm:$0xf]
      %v1795 = vld [vmem:[%s16 + $0xc] sm:$0xf]
      %v1796 = vld [vmem:[%s16 + $0x10] sm:$0xf]
      %v1797 = vld [vmem:[%s16 + $0x14] sm:$0xf]
      %v1798 = vld [vmem:[%s16 + $0x18] sm:$0xf]
      %v1799 = vld [vmem:[%s16 + $0x1c] sm:$0xf]
      %v1800 = vld [vmem:[%s16 + $0x20] sm:$0xf]
      %v1801 = vld [vmem:[%s16 + $0x24] sm:$0xf]
      %v1802 = vld [vmem:[%s16 + $0x28] sm:$0xf]
      %v1803 = vld [vmem:[%s16 + $0x2c] sm:$0xf]
      %v1804 = vld [vmem:[%s16 + $0x30] sm:$0xf]
      %v1805 = vld [vmem:[%s16 + $0x34] sm:$0xf]
      %v1806 = vld [vmem:[%s16 + $0x38] sm:$0xf]
      %v1807 = vld [vmem:[%s16 + $0x3c] sm:$0xf]
      %v1808 = vld [vmem:[%s16 + $0x40] sm:$0xf]
      %v1809 = vld [vmem:[%s16 + $0x44] sm:$0xf]
      %v1810 = vld [vmem:[%s16 + $0x48] sm:$0xf]
      %v1811 = vld [vmem:[%s16 + $0x4c] sm:$0xf]
      %v1812 = vld [vmem:[%s16 + $0x50] sm:$0xf]
      %v1813 = vld [vmem:[%s16 + $0x54] sm:$0xf]
      %v1814 = vld [vmem:[%s16 + $0x58] sm:$0xf]
      %v1815 = vld [vmem:[%s16 + $0x5c] sm:$0xf]
      %v1816 = vld [vmem:[%s16 + $0x60] sm:$0xf]
      %v1817 = vld [vmem:[%s16 + $0x64] sm:$0xf]
      %v1818 = vld [vmem:[%s16 + $0x68] sm:$0xf]
      %v1819 = vld [vmem:[%s16 + $0x6c] sm:$0xf]
      %v1820 = vld [vmem:[%s16 + $0x70] sm:$0xf]
      %v1821 = vld [vmem:[%s16 + $0x74] sm:$0xf]
      %v1822 = vld [vmem:[%s16 + $0x78] sm:$0xf]
      %v1823 = vld [vmem:[%s16 + $0x7c] sm:$0xf]
      %v1824 = vld [vmem:[%s16 + $0x80] sm:$0xf]
      %v1825 = vld [vmem:[%s16 + $0x84] sm:$0xf]
      %v1826 = vld [vmem:[%s16 + $0x88] sm:$0xf]
      %v1827 = vld [vmem:[%s16 + $0x8c] sm:$0xf]
      %v1828 = vld [vmem:[%s16 + $0x90] sm:$0xf]
      %v1829 = vld [vmem:[%s16 + $0x94] sm:$0xf]
      %v1830 = vld [vmem:[%s16 + $0x98] sm:$0xf]
      %v1831 = vld [vmem:[%s16 + $0x9c] sm:$0xf]
      %v1832 = vld [vmem:[%s16 + $0xa0] sm:$0xf]
      %v1833 = vld [vmem:[%s16 + $0xa4] sm:$0xf]
      %v1834 = vld [vmem:[%s16 + $0xa8] sm:$0xf]
      %v1835 = vld [vmem:[%s16 + $0xac] sm:$0xf]
      %v1836 = vld [vmem:[%s16 + $0xb0] sm:$0xf]
      %v1837 = vld [vmem:[%s16 + $0xb4] sm:$0xf]
      %v1838 = vld [vmem:[%s16 + $0xb8] sm:$0xf]
      %v1839 = vld [vmem:[%s16 + $0xbc] sm:$0xf]
      %v1840 = vld [vmem:[%s16 + $0xc0] sm:$0xf]
      %v1841 = vld [vmem:[%s16 + $0xc4] sm:$0xf]
      %v1842 = vld [vmem:[%s16 + $0xc8] sm:$0xf]
      %v1843 = vld [vmem:[%s16 + $0xcc] sm:$0xf]
      %v1844 = vld [vmem:[%s16 + $0xd0] sm:$0xf]
      %v1845 = vld [vmem:[%s16 + $0xd4] sm:$0xf]
      %v1846 = vld [vmem:[%s16 + $0xd8] sm:$0xf]
      %v1847 = vld [vmem:[%s16 + $0xdc] sm:$0xf]
      %v1848 = vld [vmem:[%s16 + $0xe0] sm:$0xf]
      %v1849 = vld [vmem:[%s16 + $0xe4] sm:$0xf]
      %v1850 = vld [vmem:[%s16 + $0xe8] sm:$0xf]
      %v1851 = vld [vmem:[%s16 + $0xec] sm:$0xf]
      %v1852 = vld [vmem:[%s16 + $0xf0] sm:$0xf]
      %v1853 = vld [vmem:[%s16 + $0xf4] sm:$0xf]
      %v1854 = vld [vmem:[%s16 + $0xf8] sm:$0xf]
      %v1855 = vld [vmem:[%s16 + $0xfc] sm:$0xf]
      %v1856 = vld [vmem:[%s16 + $0x100] sm:$0xf]
      %v1857 = vld [vmem:[%s16 + $0x104] sm:$0xf]
      %v1858 = vld [vmem:[%s16 + $0x108] sm:$0xf]
      %v1859 = vld [vmem:[%s16 + $0x10c] sm:$0xf]
      %v1860 = vld [vmem:[%s16 + $0x110] sm:$0xf]
      %v1861 = vld [vmem:[%s16 + $0x114] sm:$0xf]
      %v1862 = vld [vmem:[%s16 + $0x118] sm:$0xf]
      %v1863 = vld [vmem:[%s16 + $0x11c] sm:$0xf]
      %v1864 = vld [vmem:[%s16 + $0x120] sm:$0xf]
      %v1865 = vld [vmem:[%s16 + $0x124] sm:$0xf]
      %v1866 = vld [vmem:[%s16 + $0x128] sm:$0xf]
      %v1867 = vld [vmem:[%s16 + $0x12c] sm:$0xf]
      %v1868 = vld [vmem:[%s16 + $0x130] sm:$0xf]
      %v1869 = vld [vmem:[%s16 + $0x134] sm:$0xf]
      %v1870 = vld [vmem:[%s16 + $0x138] sm:$0xf]
      %v1871 = vld [vmem:[%s16 + $0x13c] sm:$0xf]
      %v1872 = vld [vmem:[%s16 + $0x140] sm:$0xf]
      %v1873 = vld [vmem:[%s16 + $0x144] sm:$0xf]
      %v1874 = vld [vmem:[%s16 + $0x148] sm:$0xf]
      %v1875 = vld [vmem:[%s16 + $0x14c] sm:$0xf]
      %v1876 = vld [vmem:[%s16 + $0x150] sm:$0xf]
      %v1877 = vld [vmem:[%s16 + $0x154] sm:$0xf]
      %v1878 = vld [vmem:[%s16 + $0x158] sm:$0xf]
      %v1879 = vld [vmem:[%s16 + $0x15c] sm:$0xf]
      %v1880 = vld [vmem:[%s16 + $0x160] sm:$0xf]
      %v1881 = vld [vmem:[%s16 + $0x164] sm:$0xf]
      %v1882 = vld [vmem:[%s16 + $0x168] sm:$0xf]
      %v1883 = vld [vmem:[%s16 + $0x16c] sm:$0xf]
      %v1884 = vld [vmem:[%s16 + $0x170] sm:$0xf]
      %v1885 = vld [vmem:[%s16 + $0x174] sm:$0xf]
      %v1886 = vld [vmem:[%s16 + $0x178] sm:$0xf]
      %v1887 = vld [vmem:[%s16 + $0x17c] sm:$0xf]
      %v1888 = vld [vmem:[%s16 + $0x180] sm:$0xf]
      %v1889 = vld [vmem:[%s16 + $0x184] sm:$0xf]
      %v1890 = vld [vmem:[%s16 + $0x188] sm:$0xf]
      %v1891 = vld [vmem:[%s16 + $0x18c] sm:$0xf]
      %v1892 = vld [vmem:[%s16 + $0x190] sm:$0xf]
      %v1893 = vld [vmem:[%s16 + $0x194] sm:$0xf]
      %v1894 = vld [vmem:[%s16 + $0x198] sm:$0xf]
      %v1895 = vld [vmem:[%s16 + $0x19c] sm:$0xf]
      %v1896 = vld [vmem:[%s16 + $0x1a0] sm:$0xf]
      %v1897 = vld [vmem:[%s16 + $0x1a4] sm:$0xf]
      %v1898 = vld [vmem:[%s16 + $0x1a8] sm:$0xf]
      %v1899 = vld [vmem:[%s16 + $0x1ac] sm:$0xf]
      %v1900 = vld [vmem:[%s16 + $0x1b0] sm:$0xf]
      %v1901 = vld [vmem:[%s16 + $0x1b4] sm:$0xf]
      %v1902 = vld [vmem:[%s16 + $0x1b8] sm:$0xf]
      %v1903 = vld [vmem:[%s16 + $0x1bc] sm:$0xf]
      %v1904 = vld [vmem:[%s16 + $0x1c0] sm:$0xf]
      %v1905 = vld [vmem:[%s16 + $0x1c4] sm:$0xf]
      %v1906 = vld [vmem:[%s16 + $0x1c8] sm:$0xf]
      %v1907 = vld [vmem:[%s16 + $0x1cc] sm:$0xf]
      %v1908 = vld [vmem:[%s16 + $0x1d0] sm:$0xf]
      %v1909 = vld [vmem:[%s16 + $0x1d4] sm:$0xf]
      %v1910 = vld [vmem:[%s16 + $0x1d8] sm:$0xf]
      %v1911 = vld [vmem:[%s16 + $0x1dc] sm:$0xf]
      %v1912 = vld [vmem:[%s16 + $0x1e0] sm:$0xf]
      %v1913 = vld [vmem:[%s16 + $0x1e4] sm:$0xf]
      %v1914 = vld [vmem:[%s16 + $0x1e8] sm:$0xf]
      %v1915 = vld [vmem:[%s16 + $0x1ec] sm:$0xf]
      %v1916 = vld [vmem:[%s16 + $0x1f0] sm:$0xf]
      %v1917 = vld [vmem:[%s16 + $0x1f4] sm:$0xf]
      %v1918 = vld [vmem:[%s16 + $0x1f8] sm:$0xf]
      %v1919 = vld [vmem:[%s16 + $0x1fc] sm:$0xf]
      %v1920 = vld [vmem:[%s16 + $0x200] sm:$0xf]
      %v1921 = vld [vmem:[%s16 + $0x204] sm:$0xf]
      %v1922 = vld [vmem:[%s16 + $0x208] sm:$0xf]
      %v1923 = vld [vmem:[%s16 + $0x20c] sm:$0xf]
      %v1924 = vld [vmem:[%s16 + $0x210] sm:$0xf]
      %v1925 = vld [vmem:[%s16 + $0x214] sm:$0xf]
      %v1926 = vld [vmem:[%s16 + $0x218] sm:$0xf]
      %v1927 = vld [vmem:[%s16 + $0x21c] sm:$0xf]
      %v1928 = vld [vmem:[%s16 + $0x220] sm:$0xf]
      %v1929 = vld [vmem:[%s16 + $0x224] sm:$0xf]
      %v1930 = vld [vmem:[%s16 + $0x228] sm:$0xf]
      %v1931 = vld [vmem:[%s16 + $0x22c] sm:$0xf]
      %v1932 = vld [vmem:[%s16 + $0x230] sm:$0xf]
      %v1933 = vld [vmem:[%s16 + $0x234] sm:$0xf]
      %v1934 = vld [vmem:[%s16 + $0x238] sm:$0xf]
      %v1935 = vld [vmem:[%s16 + $0x23c] sm:$0xf]
      %v1936 = vld [vmem:[%s16 + $0x240] sm:$0xf]
      %v1937 = vld [vmem:[%s16 + $0x244] sm:$0xf]
      %v1938 = vld [vmem:[%s16 + $0x248] sm:$0xf]
      %v1939 = vld [vmem:[%s16 + $0x24c] sm:$0xf]
      %v1940 = vld [vmem:[%s16 + $0x250] sm:$0xf]
      %v1941 = vld [vmem:[%s16 + $0x254] sm:$0xf]
      %v1942 = vld [vmem:[%s16 + $0x258] sm:$0xf]
      %v1943 = vld [vmem:[%s16 + $0x25c] sm:$0xf]
      %v1944 = vld [vmem:[%s16 + $0x260] sm:$0xf]
      %v1945 = vld [vmem:[%s16 + $0x264] sm:$0xf]
      %v1946 = vld [vmem:[%s16 + $0x268] sm:$0xf]
      %v1947 = vld [vmem:[%s16 + $0x26c] sm:$0xf]
      %v1948 = vld [vmem:[%s16 + $0x270] sm:$0xf]
      %v1949 = vld [vmem:[%s16 + $0x274] sm:$0xf]
      %v1950 = vld [vmem:[%s16 + $0x278] sm:$0xf]
      %v1951 = vld [vmem:[%s16 + $0x27c] sm:$0xf]
      %v1952 = vld [vmem:[%s16 + $0x280] sm:$0xf]
      %v1953 = vld [vmem:[%s16 + $0x284] sm:$0xf]
      %v1954 = vld [vmem:[%s16 + $0x288] sm:$0xf]
      %v1955 = vld [vmem:[%s16 + $0x28c] sm:$0xf]
      %v1956 = vld [vmem:[%s16 + $0x290] sm:$0xf]
      %v1957 = vld [vmem:[%s16 + $0x294] sm:$0xf]
      %v1958 = vld [vmem:[%s16 + $0x298] sm:$0xf]
      %v1959 = vld [vmem:[%s16 + $0x29c] sm:$0xf]
      %v1960 = vld [vmem:[%s16 + $0x2a0] sm:$0xf]
      %v1961 = vld [vmem:[%s16 + $0x2a4] sm:$0xf]
      %v1962 = vld [vmem:[%s16 + $0x2a8] sm:$0xf]
      %v1963 = vld [vmem:[%s16 + $0x2ac] sm:$0xf]
      %v1964 = vld [vmem:[%s16 + $0x2b0] sm:$0xf]
      %v1965 = vld [vmem:[%s16 + $0x2b4] sm:$0xf]
      %v1966 = vld [vmem:[%s16 + $0x2b8] sm:$0xf]
      %v1967 = vld [vmem:[%s16 + $0x2bc] sm:$0xf]
      %v1968 = vld [vmem:[%s16 + $0x2c0] sm:$0xf]
      %v1969 = vld [vmem:[%s16 + $0x2c4] sm:$0xf]
      %v1970 = vld [vmem:[%s16 + $0x2c8] sm:$0xf]
      %v1971 = vld [vmem:[%s16 + $0x2cc] sm:$0xf]
      %v1972 = vld [vmem:[%s16 + $0x2d0] sm:$0xf]
      %v1973 = vld [vmem:[%s16 + $0x2d4] sm:$0xf]
      %v1974 = vld [vmem:[%s16 + $0x2d8] sm:$0xf]
      %v1975 = vld [vmem:[%s16 + $0x2dc] sm:$0xf]
      %v1976 = vld [vmem:[%s16 + $0x2e0] sm:$0xf]
      %v1977 = vld [vmem:[%s16 + $0x2e4] sm:$0xf]
      %v1978 = vld [vmem:[%s16 + $0x2e8] sm:$0xf]
      %v1979 = vld [vmem:[%s16 + $0x2ec] sm:$0xf]
      %v1980 = vld [vmem:[%s16 + $0x2f0] sm:$0xf]
      %v1981 = vld [vmem:[%s16 + $0x2f4] sm:$0xf]
      %v1982 = vld [vmem:[%s16 + $0x2f8] sm:$0xf]
      %v1983 = vld [vmem:[%s16 + $0x2fc] sm:$0xf]
      %v1984 = vld [vmem:[%s16 + $0x300] sm:$0xf]
      %v1985 = vld [vmem:[%s16 + $0x304] sm:$0xf]
      %v1986 = vld [vmem:[%s16 + $0x308] sm:$0xf]
      %v1987 = vld [vmem:[%s16 + $0x30c] sm:$0xf]
      %v1988 = vld [vmem:[%s16 + $0x310] sm:$0xf]
      %v1989 = vld [vmem:[%s16 + $0x314] sm:$0xf]
      %v1990 = vld [vmem:[%s16 + $0x318] sm:$0xf]
      %v1991 = vld [vmem:[%s16 + $0x31c] sm:$0xf]
      %v1992 = vld [vmem:[%s16 + $0x320] sm:$0xf]
      %v1993 = vld [vmem:[%s16 + $0x324] sm:$0xf]
      %v1994 = vld [vmem:[%s16 + $0x328] sm:$0xf]
      %v1995 = vld [vmem:[%s16 + $0x32c] sm:$0xf]
      %v1996 = vld [vmem:[%s16 + $0x330] sm:$0xf]
      %v1997 = vld [vmem:[%s16 + $0x334] sm:$0xf]
      %v1998 = vld [vmem:[%s16 + $0x338] sm:$0xf]
      %v1999 = vld [vmem:[%s16 + $0x33c] sm:$0xf]
      %v2000 = vld [vmem:[%s16 + $0x340] sm:$0xf]
      %v2001 = vld [vmem:[%s16 + $0x344] sm:$0xf]
      %v2002 = vld [vmem:[%s16 + $0x348] sm:$0xf]
      %v2003 = vld [vmem:[%s16 + $0x34c] sm:$0xf]
      %v2004 = vld [vmem:[%s16 + $0x350] sm:$0xf]
      %v2005 = vld [vmem:[%s16 + $0x354] sm:$0xf]
      %v2006 = vld [vmem:[%s16 + $0x358] sm:$0xf]
      %v2007 = vld [vmem:[%s16 + $0x35c] sm:$0xf]
      %v2008 = vld [vmem:[%s16 + $0x360] sm:$0xf]
      %v2009 = vld [vmem:[%s16 + $0x364] sm:$0xf]
      %v2010 = vld [vmem:[%s16 + $0x368] sm:$0xf]
      %v2011 = vld [vmem:[%s16 + $0x36c] sm:$0xf]
      %v2012 = vld [vmem:[%s16 + $0x370] sm:$0xf]
      %v2013 = vld [vmem:[%s16 + $0x374] sm:$0xf]
      %v2014 = vld [vmem:[%s16 + $0x378] sm:$0xf]
      %v2015 = vld [vmem:[%s16 + $0x37c] sm:$0xf]
      %v2016 = vld [vmem:[%s16 + $0x380] sm:$0xf]
      %v2017 = vld [vmem:[%s16 + $0x384] sm:$0xf]
      %v2018 = vld [vmem:[%s16 + $0x388] sm:$0xf]
      %v2019 = vld [vmem:[%s16 + $0x38c] sm:$0xf]
      %v2020 = vld [vmem:[%s16 + $0x390] sm:$0xf]
      %v2021 = vld [vmem:[%s16 + $0x394] sm:$0xf]
      %v2022 = vld [vmem:[%s16 + $0x398] sm:$0xf]
      %v2023 = vld [vmem:[%s16 + $0x39c] sm:$0xf]
      %v2024 = vld [vmem:[%s16 + $0x3a0] sm:$0xf]
      %v2025 = vld [vmem:[%s16 + $0x3a4] sm:$0xf]
      %v2026 = vld [vmem:[%s16 + $0x3a8] sm:$0xf]
      %v2027 = vld [vmem:[%s16 + $0x3ac] sm:$0xf]
      %v2028 = vld [vmem:[%s16 + $0x3b0] sm:$0xf]
      %v2029 = vld [vmem:[%s16 + $0x3b4] sm:$0xf]
      %v2030 = vld [vmem:[%s16 + $0x3b8] sm:$0xf]
      %v2031 = vld [vmem:[%s16 + $0x3bc] sm:$0xf]
      %v2032 = vld [vmem:[%s16 + $0x3c0] sm:$0xf]
      %v2033 = vld [vmem:[%s16 + $0x3c4] sm:$0xf]
      %v2034 = vld [vmem:[%s16 + $0x3c8] sm:$0xf]
      %v2035 = vld [vmem:[%s16 + $0x3cc] sm:$0xf]
      %v2036 = vld [vmem:[%s16 + $0x3d0] sm:$0xf]
      %v2037 = vld [vmem:[%s16 + $0x3d4] sm:$0xf]
      %v2038 = vld [vmem:[%s16 + $0x3d8] sm:$0xf]
      %v2039 = vld [vmem:[%s16 + $0x3dc] sm:$0xf]
      %v2040 = vld [vmem:[%s16 + $0x3e0] sm:$0xf]
      %v2041 = vld [vmem:[%s16 + $0x3e4] sm:$0xf]
      %v2042 = vld [vmem:[%s16 + $0x3e8] sm:$0xf]
      %v2043 = vld [vmem:[%s16 + $0x3ec] sm:$0xf]
      %v2044 = vld [vmem:[%s16 + $0x3f0] sm:$0xf]
      %v2045 = vld [vmem:[%s16 + $0x3f4] sm:$0xf]
      %v2046 = vld [vmem:[%s16 + $0x3f8] sm:$0xf]
      %v2047 = vld [vmem:[%s16 + $0x3fc] sm:$0xf]
      %v2048 = vld [vmem:[%s17] sm:$0x1]
      %v2050 = vlaneseq
      %v2051 = vshrl.u32 %v2050, 7
      %v2052 = vsub.s32 0, %v2051
      %v2053 = vrot.slane %v2048, %v2052
      %v2311 = vunpack.c.l.b16 %v1792
      %v2312 = vunpack.c.l.b16 %v1793
      %v2313 = vunpack.c.l.b16 %v1794
      %v2314 = vunpack.c.l.b16 %v1795
      %v2315 = vunpack.c.l.b16 %v1796
      %v2316 = vunpack.c.l.b16 %v1797
      %v2317 = vunpack.c.l.b16 %v1798
      %v2318 = vunpack.c.l.b16 %v1799
      %v2319 = vunpack.c.l.b16 %v1800
      %v2320 = vunpack.c.l.b16 %v1801
      %v2321 = vunpack.c.l.b16 %v1802
      %v2322 = vunpack.c.l.b16 %v1803
      %v2323 = vunpack.c.l.b16 %v1804
      %v2324 = vunpack.c.l.b16 %v1805
      %v2325 = vunpack.c.l.b16 %v1806
      %v2326 = vunpack.c.l.b16 %v1807
      %v2327 = vunpack.c.l.b16 %v1808
      %v2328 = vunpack.c.l.b16 %v1809
      %v2329 = vunpack.c.l.b16 %v1810
      %v2330 = vunpack.c.l.b16 %v1811
      %v2331 = vunpack.c.l.b16 %v1812
      %v2332 = vunpack.c.l.b16 %v1813
      %v2333 = vunpack.c.l.b16 %v1814
      %v2334 = vunpack.c.l.b16 %v1815
      %v2335 = vunpack.c.l.b16 %v1816
      %v2336 = vunpack.c.l.b16 %v1817
      %v2337 = vunpack.c.l.b16 %v1818
      %v2338 = vunpack.c.l.b16 %v1819
      %v2339 = vunpack.c.l.b16 %v1820
      %v2340 = vunpack.c.l.b16 %v1821
      %v2341 = vunpack.c.l.b16 %v1822
      %v2342 = vunpack.c.l.b16 %v1823
      %v2343 = vunpack.c.l.b16 %v1824
      %v2344 = vunpack.c.l.b16 %v1825
      %v2345 = vunpack.c.l.b16 %v1826
      %v2346 = vunpack.c.l.b16 %v1827
      %v2347 = vunpack.c.l.b16 %v1828
      %v2348 = vunpack.c.l.b16 %v1829
      %v2349 = vunpack.c.l.b16 %v1830
      %v2350 = vunpack.c.l.b16 %v1831
      %v2351 = vunpack.c.l.b16 %v1832
      %v2352 = vunpack.c.l.b16 %v1833
      %v2353 = vunpack.c.l.b16 %v1834
      %v2354 = vunpack.c.l.b16 %v1835
      %v2355 = vunpack.c.l.b16 %v1836
      %v2356 = vunpack.c.l.b16 %v1837
      %v2357 = vunpack.c.l.b16 %v1838
      %v2358 = vunpack.c.l.b16 %v1839
      %v2359 = vunpack.c.l.b16 %v1840
      %v2360 = vunpack.c.l.b16 %v1841
      %v2361 = vunpack.c.l.b16 %v1842
      %v2362 = vunpack.c.l.b16 %v1843
      %v2363 = vunpack.c.l.b16 %v1844
      %v2364 = vunpack.c.l.b16 %v1845
      %v2365 = vunpack.c.l.b16 %v1846
      %v2366 = vunpack.c.l.b16 %v1847
      %v2367 = vunpack.c.l.b16 %v1848
      %v2368 = vunpack.c.l.b16 %v1849
      %v2369 = vunpack.c.l.b16 %v1850
      %v2370 = vunpack.c.l.b16 %v1851
      %v2371 = vunpack.c.l.b16 %v1852
      %v2372 = vunpack.c.l.b16 %v1853
      %v2373 = vunpack.c.l.b16 %v1854
      %v2374 = vunpack.c.l.b16 %v1855
      %v2375 = vunpack.c.l.b16 %v1856
      %v2376 = vunpack.c.l.b16 %v1857
      %v2377 = vunpack.c.l.b16 %v1858
      %v2378 = vunpack.c.l.b16 %v1859
      %v2379 = vunpack.c.l.b16 %v1860
      %v2380 = vunpack.c.l.b16 %v1861
      %v2381 = vunpack.c.l.b16 %v1862
      %v2382 = vunpack.c.l.b16 %v1863
      %v2383 = vunpack.c.l.b16 %v1864
      %v2384 = vunpack.c.l.b16 %v1865
      %v2385 = vunpack.c.l.b16 %v1866
      %v2386 = vunpack.c.l.b16 %v1867
      %v2387 = vunpack.c.l.b16 %v1868
      %v2388 = vunpack.c.l.b16 %v1869
      %v2389 = vunpack.c.l.b16 %v1870
      %v2390 = vunpack.c.l.b16 %v1871
      %v2391 = vunpack.c.l.b16 %v1872
      %v2392 = vunpack.c.l.b16 %v1873
      %v2393 = vunpack.c.l.b16 %v1874
      %v2394 = vunpack.c.l.b16 %v1875
      %v2395 = vunpack.c.l.b16 %v1876
      %v2396 = vunpack.c.l.b16 %v1877
      %v2397 = vunpack.c.l.b16 %v1878
      %v2398 = vunpack.c.l.b16 %v1879
      %v2399 = vunpack.c.l.b16 %v1880
      %v2400 = vunpack.c.l.b16 %v1881
      %v2401 = vunpack.c.l.b16 %v1882
      %v2402 = vunpack.c.l.b16 %v1883
      %v2403 = vunpack.c.l.b16 %v1884
      %v2404 = vunpack.c.l.b16 %v1885
      %v2405 = vunpack.c.l.b16 %v1886
      %v2406 = vunpack.c.l.b16 %v1887
      %v2407 = vunpack.c.l.b16 %v1888
      %v2408 = vunpack.c.l.b16 %v1889
      %v2409 = vunpack.c.l.b16 %v1890
      %v2410 = vunpack.c.l.b16 %v1891
      %v2411 = vunpack.c.l.b16 %v1892
      %v2412 = vunpack.c.l.b16 %v1893
      %v2413 = vunpack.c.l.b16 %v1894
      %v2414 = vunpack.c.l.b16 %v1895
      %v2415 = vunpack.c.l.b16 %v1896
      %v2416 = vunpack.c.l.b16 %v1897
      %v2417 = vunpack.c.l.b16 %v1898
      %v2418 = vunpack.c.l.b16 %v1899
      %v2419 = vunpack.c.l.b16 %v1900
      %v2420 = vunpack.c.l.b16 %v1901
      %v2421 = vunpack.c.l.b16 %v1902
      %v2422 = vunpack.c.l.b16 %v1903
      %v2423 = vunpack.c.l.b16 %v1904
      %v2424 = vunpack.c.l.b16 %v1905
      %v2425 = vunpack.c.l.b16 %v1906
      %v2426 = vunpack.c.l.b16 %v1907
      %v2427 = vunpack.c.l.b16 %v1908
      %v2428 = vunpack.c.l.b16 %v1909
      %v2429 = vunpack.c.l.b16 %v1910
      %v2430 = vunpack.c.l.b16 %v1911
      %v2431 = vunpack.c.l.b16 %v1912
      %v2432 = vunpack.c.l.b16 %v1913
      %v2433 = vunpack.c.l.b16 %v1914
      %v2434 = vunpack.c.l.b16 %v1915
      %v2435 = vunpack.c.l.b16 %v1916
      %v2436 = vunpack.c.l.b16 %v1917
      %v2437 = vunpack.c.l.b16 %v1918
      %v2438 = vunpack.c.l.b16 %v1919
      %v2439 = vunpack.c.l.b16 %v1920
      %v2440 = vunpack.c.l.b16 %v1921
      %v2441 = vunpack.c.l.b16 %v1922
      %v2442 = vunpack.c.l.b16 %v1923
      %v2443 = vunpack.c.l.b16 %v1924
      %v2444 = vunpack.c.l.b16 %v1925
      %v2445 = vunpack.c.l.b16 %v1926
      %v2446 = vunpack.c.l.b16 %v1927
      %v2447 = vunpack.c.l.b16 %v1928
      %v2448 = vunpack.c.l.b16 %v1929
      %v2449 = vunpack.c.l.b16 %v1930
      %v2450 = vunpack.c.l.b16 %v1931
      %v2451 = vunpack.c.l.b16 %v1932
      %v2452 = vunpack.c.l.b16 %v1933
      %v2453 = vunpack.c.l.b16 %v1934
      %v2454 = vunpack.c.l.b16 %v1935
      %v2455 = vunpack.c.l.b16 %v1936
      %v2456 = vunpack.c.l.b16 %v1937
      %v2457 = vunpack.c.l.b16 %v1938
      %v2458 = vunpack.c.l.b16 %v1939
      %v2459 = vunpack.c.l.b16 %v1940
      %v2460 = vunpack.c.l.b16 %v1941
      %v2461 = vunpack.c.l.b16 %v1942
      %v2462 = vunpack.c.l.b16 %v1943
      %v2463 = vunpack.c.l.b16 %v1944
      %v2464 = vunpack.c.l.b16 %v1945
      %v2465 = vunpack.c.l.b16 %v1946
      %v2466 = vunpack.c.l.b16 %v1947
      %v2467 = vunpack.c.l.b16 %v1948
      %v2468 = vunpack.c.l.b16 %v1949
      %v2469 = vunpack.c.l.b16 %v1950
      %v2470 = vunpack.c.l.b16 %v1951
      %v2471 = vunpack.c.l.b16 %v1952
      %v2472 = vunpack.c.l.b16 %v1953
      %v2473 = vunpack.c.l.b16 %v1954
      %v2474 = vunpack.c.l.b16 %v1955
      %v2475 = vunpack.c.l.b16 %v1956
      %v2476 = vunpack.c.l.b16 %v1957
      %v2477 = vunpack.c.l.b16 %v1958
      %v2478 = vunpack.c.l.b16 %v1959
      %v2479 = vunpack.c.l.b16 %v1960
      %v2480 = vunpack.c.l.b16 %v1961
      %v2481 = vunpack.c.l.b16 %v1962
      %v2482 = vunpack.c.l.b16 %v1963
      %v2483 = vunpack.c.l.b16 %v1964
      %v2484 = vunpack.c.l.b16 %v1965
      %v2485 = vunpack.c.l.b16 %v1966
      %v2486 = vunpack.c.l.b16 %v1967
      %v2487 = vunpack.c.l.b16 %v1968
      %v2488 = vunpack.c.l.b16 %v1969
      %v2489 = vunpack.c.l.b16 %v1970
      %v2490 = vunpack.c.l.b16 %v1971
      %v2491 = vunpack.c.l.b16 %v1972
      %v2492 = vunpack.c.l.b16 %v1973
      %v2493 = vunpack.c.l.b16 %v1974
      %v2494 = vunpack.c.l.b16 %v1975
      %v2495 = vunpack.c.l.b16 %v1976
      %v2496 = vunpack.c.l.b16 %v1977
      %v2497 = vunpack.c.l.b16 %v1978
      %v2498 = vunpack.c.l.b16 %v1979
      %v2499 = vunpack.c.l.b16 %v1980
      %v2500 = vunpack.c.l.b16 %v1981
      %v2501 = vunpack.c.l.b16 %v1982
      %v2502 = vunpack.c.l.b16 %v1983
      %v2503 = vunpack.c.l.b16 %v1984
      %v2504 = vunpack.c.l.b16 %v1985
      %v2505 = vunpack.c.l.b16 %v1986
      %v2506 = vunpack.c.l.b16 %v1987
      %v2507 = vunpack.c.l.b16 %v1988
      %v2508 = vunpack.c.l.b16 %v1989
      %v2509 = vunpack.c.l.b16 %v1990
      %v2510 = vunpack.c.l.b16 %v1991
      %v2511 = vunpack.c.l.b16 %v1992
      %v2512 = vunpack.c.l.b16 %v1993
      %v2513 = vunpack.c.l.b16 %v1994
      %v2514 = vunpack.c.l.b16 %v1995
      %v2515 = vunpack.c.l.b16 %v1996
      %v2516 = vunpack.c.l.b16 %v1997
      %v2517 = vunpack.c.l.b16 %v1998
      %v2518 = vunpack.c.l.b16 %v1999
      %v2519 = vunpack.c.l.b16 %v2000
      %v2520 = vunpack.c.l.b16 %v2001
      %v2521 = vunpack.c.l.b16 %v2002
      %v2522 = vunpack.c.l.b16 %v2003
      %v2523 = vunpack.c.l.b16 %v2004
      %v2524 = vunpack.c.l.b16 %v2005
      %v2525 = vunpack.c.l.b16 %v2006
      %v2526 = vunpack.c.l.b16 %v2007
      %v2527 = vunpack.c.l.b16 %v2008
      %v2528 = vunpack.c.l.b16 %v2009
      %v2529 = vunpack.c.l.b16 %v2010
      %v2530 = vunpack.c.l.b16 %v2011
      %v2531 = vunpack.c.l.b16 %v2012
      %v2532 = vunpack.c.l.b16 %v2013
      %v2533 = vunpack.c.l.b16 %v2014
      %v2534 = vunpack.c.l.b16 %v2015
      %v2535 = vunpack.c.l.b16 %v2016
      %v2536 = vunpack.c.l.b16 %v2017
      %v2537 = vunpack.c.l.b16 %v2018
      %v2538 = vunpack.c.l.b16 %v2019
      %v2539 = vunpack.c.l.b16 %v2020
      %v2540 = vunpack.c.l.b16 %v2021
      %v2541 = vunpack.c.l.b16 %v2022
      %v2542 = vunpack.c.l.b16 %v2023
      %v2543 = vunpack.c.l.b16 %v2024
      %v2544 = vunpack.c.l.b16 %v2025
      %v2545 = vunpack.c.l.b16 %v2026
      %v2546 = vunpack.c.l.b16 %v2027
      %v2547 = vunpack.c.l.b16 %v2028
      %v2548 = vunpack.c.l.b16 %v2029
      %v2549 = vunpack.c.l.b16 %v2030
      %v2550 = vunpack.c.l.b16 %v2031
      %v2551 = vunpack.c.l.b16 %v2032
      %v2552 = vunpack.c.l.b16 %v2033
      %v2553 = vunpack.c.l.b16 %v2034
      %v2554 = vunpack.c.l.b16 %v2035
      %v2555 = vunpack.c.l.b16 %v2036
      %v2556 = vunpack.c.l.b16 %v2037
      %v2557 = vunpack.c.l.b16 %v2038
      %v2558 = vunpack.c.l.b16 %v2039
      %v2559 = vunpack.c.l.b16 %v2040
      %v2560 = vunpack.c.l.b16 %v2041
      %v2561 = vunpack.c.l.b16 %v2042
      %v2562 = vunpack.c.l.b16 %v2043
      %v2563 = vunpack.c.l.b16 %v2044
      %v2564 = vunpack.c.l.b16 %v2045
      %v2565 = vunpack.c.l.b16 %v2046
      %v2566 = vunpack.c.l.b16 %v2047
      %v2567 = vpack.c.b16 %v2312, %v2311
      %v2568 = vpack.c.b16 %v2314, %v2313
      %v2569 = vpack.c.b16 %v2316, %v2315
      %v2570 = vpack.c.b16 %v2318, %v2317
      %v2571 = vpack.c.b16 %v2320, %v2319
      %v2572 = vpack.c.b16 %v2322, %v2321
      %v2573 = vpack.c.b16 %v2324, %v2323
      %v2574 = vpack.c.b16 %v2326, %v2325
      %v2575 = vpack.c.b16 %v2328, %v2327
      %v2576 = vpack.c.b16 %v2330, %v2329
      %v2577 = vpack.c.b16 %v2332, %v2331
      %v2578 = vpack.c.b16 %v2334, %v2333
      %v2579 = vpack.c.b16 %v2336, %v2335
      %v2580 = vpack.c.b16 %v2338, %v2337
      %v2581 = vpack.c.b16 %v2340, %v2339
      %v2582 = vpack.c.b16 %v2342, %v2341
      %v2583 = vpack.c.b16 %v2344, %v2343
      %v2584 = vpack.c.b16 %v2346, %v2345
      %v2585 = vpack.c.b16 %v2348, %v2347
      %v2586 = vpack.c.b16 %v2350, %v2349
      %v2587 = vpack.c.b16 %v2352, %v2351
      %v2588 = vpack.c.b16 %v2354, %v2353
      %v2589 = vpack.c.b16 %v2356, %v2355
      %v2590 = vpack.c.b16 %v2358, %v2357
      %v2591 = vpack.c.b16 %v2360, %v2359
      %v2592 = vpack.c.b16 %v2362, %v2361
      %v2593 = vpack.c.b16 %v2364, %v2363
      %v2594 = vpack.c.b16 %v2366, %v2365
      %v2595 = vpack.c.b16 %v2368, %v2367
      %v2596 = vpack.c.b16 %v2370, %v2369
      %v2597 = vpack.c.b16 %v2372, %v2371
      %v2598 = vpack.c.b16 %v2374, %v2373
      %v2599 = vpack.c.b16 %v2376, %v2375
      %v2600 = vpack.c.b16 %v2378, %v2377
      %v2601 = vpack.c.b16 %v2380, %v2379
      %v2602 = vpack.c.b16 %v2382, %v2381
      %v2603 = vpack.c.b16 %v2384, %v2383
      %v2604 = vpack.c.b16 %v2386, %v2385
      %v2605 = vpack.c.b16 %v2388, %v2387
      %v2606 = vpack.c.b16 %v2390, %v2389
      %v2607 = vpack.c.b16 %v2392, %v2391
      %v2608 = vpack.c.b16 %v2394, %v2393
      %v2609 = vpack.c.b16 %v2396, %v2395
      %v2610 = vpack.c.b16 %v2398, %v2397
      %v2611 = vpack.c.b16 %v2400, %v2399
      %v2612 = vpack.c.b16 %v2402, %v2401
      %v2613 = vpack.c.b16 %v2404, %v2403
      %v2614 = vpack.c.b16 %v2406, %v2405
      %v2615 = vpack.c.b16 %v2408, %v2407
      %v2616 = vpack.c.b16 %v2410, %v2409
      %v2617 = vpack.c.b16 %v2412, %v2411
      %v2618 = vpack.c.b16 %v2414, %v2413
      %v2619 = vpack.c.b16 %v2416, %v2415
      %v2620 = vpack.c.b16 %v2418, %v2417
      %v2621 = vpack.c.b16 %v2420, %v2419
      %v2622 = vpack.c.b16 %v2422, %v2421
      %v2623 = vpack.c.b16 %v2424, %v2423
      %v2624 = vpack.c.b16 %v2426, %v2425
      %v2625 = vpack.c.b16 %v2428, %v2427
      %v2626 = vpack.c.b16 %v2430, %v2429
      %v2627 = vpack.c.b16 %v2432, %v2431
      %v2628 = vpack.c.b16 %v2434, %v2433
      %v2629 = vpack.c.b16 %v2436, %v2435
      %v2630 = vpack.c.b16 %v2438, %v2437
      %v2631 = vpack.c.b16 %v2440, %v2439
      %v2632 = vpack.c.b16 %v2442, %v2441
      %v2633 = vpack.c.b16 %v2444, %v2443
      %v2634 = vpack.c.b16 %v2446, %v2445
      %v2635 = vpack.c.b16 %v2448, %v2447
      %v2636 = vpack.c.b16 %v2450, %v2449
      %v2637 = vpack.c.b16 %v2452, %v2451
      %v2638 = vpack.c.b16 %v2454, %v2453
      %v2639 = vpack.c.b16 %v2456, %v2455
      %v2640 = vpack.c.b16 %v2458, %v2457
      %v2641 = vpack.c.b16 %v2460, %v2459
      %v2642 = vpack.c.b16 %v2462, %v2461
      %v2643 = vpack.c.b16 %v2464, %v2463
      %v2644 = vpack.c.b16 %v2466, %v2465
      %v2645 = vpack.c.b16 %v2468, %v2467
      %v2646 = vpack.c.b16 %v2470, %v2469
      %v2647 = vpack.c.b16 %v2472, %v2471
      %v2648 = vpack.c.b16 %v2474, %v2473
      %v2649 = vpack.c.b16 %v2476, %v2475
      %v2650 = vpack.c.b16 %v2478, %v2477
      %v2651 = vpack.c.b16 %v2480, %v2479
      %v2652 = vpack.c.b16 %v2482, %v2481
      %v2653 = vpack.c.b16 %v2484, %v2483
      %v2654 = vpack.c.b16 %v2486, %v2485
      %v2655 = vpack.c.b16 %v2488, %v2487
      %v2656 = vpack.c.b16 %v2490, %v2489
      %v2657 = vpack.c.b16 %v2492, %v2491
      %v2658 = vpack.c.b16 %v2494, %v2493
      %v2659 = vpack.c.b16 %v2496, %v2495
      %v2660 = vpack.c.b16 %v2498, %v2497
      %v2661 = vpack.c.b16 %v2500, %v2499
      %v2662 = vpack.c.b16 %v2502, %v2501
      %v2663 = vpack.c.b16 %v2504, %v2503
      %v2664 = vpack.c.b16 %v2506, %v2505
      %v2665 = vpack.c.b16 %v2508, %v2507
      %v2666 = vpack.c.b16 %v2510, %v2509
      %v2667 = vpack.c.b16 %v2512, %v2511
      %v2668 = vpack.c.b16 %v2514, %v2513
      %v2669 = vpack.c.b16 %v2516, %v2515
      %v2670 = vpack.c.b16 %v2518, %v2517
      %v2671 = vpack.c.b16 %v2520, %v2519
      %v2672 = vpack.c.b16 %v2522, %v2521
      %v2673 = vpack.c.b16 %v2524, %v2523
      %v2674 = vpack.c.b16 %v2526, %v2525
      %v2675 = vpack.c.b16 %v2528, %v2527
      %v2676 = vpack.c.b16 %v2530, %v2529
      %v2677 = vpack.c.b16 %v2532, %v2531
      %v2678 = vpack.c.b16 %v2534, %v2533
      %v2679 = vpack.c.b16 %v2536, %v2535
      %v2680 = vpack.c.b16 %v2538, %v2537
      %v2681 = vpack.c.b16 %v2540, %v2539
      %v2682 = vpack.c.b16 %v2542, %v2541
      %v2683 = vpack.c.b16 %v2544, %v2543
      %v2684 = vpack.c.b16 %v2546, %v2545
      %v2685 = vpack.c.b16 %v2548, %v2547
      %v2686 = vpack.c.b16 %v2550, %v2549
      %v2687 = vpack.c.b16 %v2552, %v2551
      %v2688 = vpack.c.b16 %v2554, %v2553
      %v2689 = vpack.c.b16 %v2556, %v2555
      %v2690 = vpack.c.b16 %v2558, %v2557
      %v2691 = vpack.c.b16 %v2560, %v2559
      %v2692 = vpack.c.b16 %v2562, %v2561
      %v2693 = vpack.c.b16 %v2564, %v2563
      %v2694 = vpack.c.b16 %v2566, %v2565
      %2823 = vmatprep.subr.bf16.mxu0 0
      %2824 = vmatpush1.bf16.msra.mxu0 %v2567
      %2825 = vmatprep.subr.bf16.mxu0 0
      %2826 = vmatpush1.bf16.msra.mxu0 %v2568
      %2827 = vmatprep.subr.bf16.mxu0 0
      %2828 = vmatpush1.bf16.msra.mxu0 %v2569
      %2829 = vmatprep.subr.bf16.mxu0 0
      %2830 = vmatpush1.bf16.msra.mxu0 %v2570
      %2831 = vmatprep.subr.bf16.mxu0 0
      %2832 = vmatpush1.bf16.msra.mxu0 %v2571
      %2833 = vmatprep.subr.bf16.mxu0 0
      %2834 = vmatpush1.bf16.msra.mxu0 %v2572
      %2835 = vmatprep.subr.bf16.mxu0 0
      %2836 = vmatpush1.bf16.msra.mxu0 %v2573
      %2837 = vmatprep.subr.bf16.mxu0 0
      %2838 = vmatpush1.bf16.msra.mxu0 %v2574
      %2839 = vmatprep.subr.bf16.mxu0 0
      %2840 = vmatpush1.bf16.msra.mxu0 %v2575
      %2841 = vmatprep.subr.bf16.mxu0 0
      %2842 = vmatpush1.bf16.msra.mxu0 %v2576
      %2843 = vmatprep.subr.bf16.mxu0 0
      %2844 = vmatpush1.bf16.msra.mxu0 %v2577
      %2845 = vmatprep.subr.bf16.mxu0 0
      %2846 = vmatpush1.bf16.msra.mxu0 %v2578
      %2847 = vmatprep.subr.bf16.mxu0 0
      %2848 = vmatpush1.bf16.msra.mxu0 %v2579
      %2849 = vmatprep.subr.bf16.mxu0 0
      %2850 = vmatpush1.bf16.msra.mxu0 %v2580
      %2851 = vmatprep.subr.bf16.mxu0 0
      %2852 = vmatpush1.bf16.msra.mxu0 %v2581
      %2853 = vmatprep.subr.bf16.mxu0 0
      %2854 = vmatpush1.bf16.msra.mxu0 %v2582
      %2855 = vmatprep.mubr.bf16.mxu0 %v1777
      %2856 = vmatmul.mubr.bf16.gmra.mrb[0].mxu0 %v1776
      %v2857 = vpop.f32.mrb[0].mxu0
      %v2858 = vadd.f32 %v2053, %v2857
      %v2859 = vpop.f32.mrb[0].mxu0
      %v2860 = vpop.f32.mrb[0].mxu0
      %v2861 = vpop.f32.mrb[0].mxu0
      %2862 = vdwg.mxu0
      %2863 = vmatprep.subr.bf16.mxu0 0
      %2864 = vmatpush1.bf16.msra.mxu0 %v2583
      %2865 = vmatprep.subr.bf16.mxu0 0
      %2866 = vmatpush1.bf16.msra.mxu0 %v2584
      %2867 = vmatprep.subr.bf16.mxu0 0
      %2868 = vmatpush1.bf16.msra.mxu0 %v2585
      %2869 = vmatprep.subr.bf16.mxu0 0
      %2870 = vmatpush1.bf16.msra.mxu0 %v2586
      %2871 = vmatprep.subr.bf16.mxu0 0
      %2872 = vmatpush1.bf16.msra.mxu0 %v2587
      %2873 = vmatprep.subr.bf16.mxu0 0
      %2874 = vmatpush1.bf16.msra.mxu0 %v2588
      %2875 = vmatprep.subr.bf16.mxu0 0
      %2876 = vmatpush1.bf16.msra.mxu0 %v2589
      %2877 = vmatprep.subr.bf16.mxu0 0
      %2878 = vmatpush1.bf16.msra.mxu0 %v2590
      %2879 = vmatprep.subr.bf16.mxu0 0
      %2880 = vmatpush1.bf16.msra.mxu0 %v2591
      %2881 = vmatprep.subr.bf16.mxu0 0
      %2882 = vmatpush1.bf16.msra.mxu0 %v2592
      %2883 = vmatprep.subr.bf16.mxu0 0
      %2884 = vmatpush1.bf16.msra.mxu0 %v2593
      %2885 = vmatprep.subr.bf16.mxu0 0
      %2886 = vmatpush1.bf16.msra.mxu0 %v2594
      %2887 = vmatprep.subr.bf16.mxu0 0
      %2888 = vmatpush1.bf16.msra.mxu0 %v2595
      %2889 = vmatprep.subr.bf16.mxu0 0
      %2890 = vmatpush1.bf16.msra.mxu0 %v2596
      %2891 = vmatprep.subr.bf16.mxu0 0
      %2892 = vmatpush1.bf16.msra.mxu0 %v2597
      %2893 = vmatprep.subr.bf16.mxu0 0
      %2894 = vmatpush1.bf16.msra.mxu0 %v2598
      %2895 = vmatprep.mubr.bf16.mxu0 %v1779
      %2896 = vmatmul.mubr.bf16.gmra.mrb[0].mxu0 %v1778
      %v2897 = vpop.f32.mrb[0].mxu0
      %v2898 = vadd.f32 %v2858, %v2897
      %v2899 = vpop.f32.mrb[0].mxu0
      %v2900 = vpop.f32.mrb[0].mxu0
      %v2901 = vpop.f32.mrb[0].mxu0
      %2902 = vdwg.mxu0
      %2903 = vmatprep.subr.bf16.mxu0 0
      %2904 = vmatpush1.bf16.msra.mxu0 %v2599
      %2905 = vmatprep.subr.bf16.mxu0 0
      %2906 = vmatpush1.bf16.msra.mxu0 %v2600
      %2907 = vmatprep.subr.bf16.mxu0 0
      %2908 = vmatpush1.bf16.msra.mxu0 %v2601
      %2909 = vmatprep.subr.bf16.mxu0 0
      %2910 = vmatpush1.bf16.msra.mxu0 %v2602
      %2911 = vmatprep.subr.bf16.mxu0 0
      %2912 = vmatpush1.bf16.msra.mxu0 %v2603
      %2913 = vmatprep.subr.bf16.mxu0 0
      %2914 = vmatpush1.bf16.msra.mxu0 %v2604
      %2915 = vmatprep.subr.bf16.mxu0 0
      %2916 = vmatpush1.bf16.msra.mxu0 %v2605
      %2917 = vmatprep.subr.bf16.mxu0 0
      %2918 = vmatpush1.bf16.msra.mxu0 %v2606
      %2919 = vmatprep.subr.bf16.mxu0 0
      %2920 = vmatpush1.bf16.msra.mxu0 %v2607
      %2921 = vmatprep.subr.bf16.mxu0 0
      %2922 = vmatpush1.bf16.msra.mxu0 %v2608
      %2923 = vmatprep.subr.bf16.mxu0 0
      %2924 = vmatpush1.bf16.msra.mxu0 %v2609
      %2925 = vmatprep.subr.bf16.mxu0 0
      %2926 = vmatpush1.bf16.msra.mxu0 %v2610
      %2927 = vmatprep.subr.bf16.mxu0 0
      %2928 = vmatpush1.bf16.msra.mxu0 %v2611
      %2929 = vmatprep.subr.bf16.mxu0 0
      %2930 = vmatpush1.bf16.msra.mxu0 %v2612
      %2931 = vmatprep.subr.bf16.mxu0 0
      %2932 = vmatpush1.bf16.msra.mxu0 %v2613
      %2933 = vmatprep.subr.bf16.mxu0 0
      %2934 = vmatpush1.bf16.msra.mxu0 %v2614
      %2935 = vmatprep.mubr.bf16.mxu0 %v1781
      %2936 = vmatmul.mubr.bf16.gmra.mrb[0].mxu0 %v1780
      %v2937 = vpop.f32.mrb[0].mxu0
      %v2938 = vadd.f32 %v2898, %v2937
      %v2939 = vpop.f32.mrb[0].mxu0
      %v2940 = vpop.f32.mrb[0].mxu0
      %v2941 = vpop.f32.mrb[0].mxu0
      %2942 = vdwg.mxu0
      %2943 = vmatprep.subr.bf16.mxu0 0
      %2944 = vmatpush1.bf16.msra.mxu0 %v2615
      %2945 = vmatprep.subr.bf16.mxu0 0
      %2946 = vmatpush1.bf16.msra.mxu0 %v2616
      %2947 = vmatprep.subr.bf16.mxu0 0
      %2948 = vmatpush1.bf16.msra.mxu0 %v2617
      %2949 = vmatprep.subr.bf16.mxu0 0
      %2950 = vmatpush1.bf16.msra.mxu0 %v2618
      %2951 = vmatprep.subr.bf16.mxu0 0
      %2952 = vmatpush1.bf16.msra.mxu0 %v2619
      %2953 = vmatprep.subr.bf16.mxu0 0
      %2954 = vmatpush1.bf16.msra.mxu0 %v2620
      %2955 = vmatprep.subr.bf16.mxu0 0
      %2956 = vmatpush1.bf16.msra.mxu0 %v2621
      %2957 = vmatprep.subr.bf16.mxu0 0
      %2958 = vmatpush1.bf16.msra.mxu0 %v2622
      %2959 = vmatprep.subr.bf16.mxu0 0
      %2960 = vmatpush1.bf16.msra.mxu0 %v2623
      %2961 = vmatprep.subr.bf16.mxu0 0
      %2962 = vmatpush1.bf16.msra.mxu0 %v2624
      %2963 = vmatprep.subr.bf16.mxu0 0
      %2964 = vmatpush1.bf16.msra.mxu0 %v2625
      %2965 = vmatprep.subr.bf16.mxu0 0
      %2966 = vmatpush1.bf16.msra.mxu0 %v2626
      %2967 = vmatprep.subr.bf16.mxu0 0
      %2968 = vmatpush1.bf16.msra.mxu0 %v2627
      %2969 = vmatprep.subr.bf16.mxu0 0
      %2970 = vmatpush1.bf16.msra.mxu0 %v2628
      %2971 = vmatprep.subr.bf16.mxu0 0
      %2972 = vmatpush1.bf16.msra.mxu0 %v2629
      %2973 = vmatprep.subr.bf16.mxu0 0
      %2974 = vmatpush1.bf16.msra.mxu0 %v2630
      %2975 = vmatprep.mubr.bf16.mxu0 %v1783
      %2976 = vmatmul.mubr.bf16.gmra.mrb[0].mxu0 %v1782
      %v2977 = vpop.f32.mrb[0].mxu0
      %v2978 = vadd.f32 %v2938, %v2977
      %v2979 = vpop.f32.mrb[0].mxu0
      %v2980 = vpop.f32.mrb[0].mxu0
      %v2981 = vpop.f32.mrb[0].mxu0
      %2982 = vdwg.mxu0
      %2983 = vmatprep.subr.bf16.mxu0 0
      %2984 = vmatpush1.bf16.msra.mxu0 %v2631
      %2985 = vmatprep.subr.bf16.mxu0 0
      %2986 = vmatpush1.bf16.msra.mxu0 %v2632
      %2987 = vmatprep.subr.bf16.mxu0 0
      %2988 = vmatpush1.bf16.msra.mxu0 %v2633
      %2989 = vmatprep.subr.bf16.mxu0 0
      %2990 = vmatpush1.bf16.msra.mxu0 %v2634
      %2991 = vmatprep.subr.bf16.mxu0 0
      %2992 = vmatpush1.bf16.msra.mxu0 %v2635
      %2993 = vmatprep.subr.bf16.mxu0 0
      %2994 = vmatpush1.bf16.msra.mxu0 %v2636
      %2995 = vmatprep.subr.bf16.mxu0 0
      %2996 = vmatpush1.bf16.msra.mxu0 %v2637
      %2997 = vmatprep.subr.bf16.mxu0 0
      %2998 = vmatpush1.bf16.msra.mxu0 %v2638
      %2999 = vmatprep.subr.bf16.mxu0 0
      %3000 = vmatpush1.bf16.msra.mxu0 %v2639
      %3001 = vmatprep.subr.bf16.mxu0 0
      %3002 = vmatpush1.bf16.msra.mxu0 %v2640
      %3003 = vmatprep.subr.bf16.mxu0 0
      %3004 = vmatpush1.bf16.msra.mxu0 %v2641
      %3005 = vmatprep.subr.bf16.mxu0 0
      %3006 = vmatpush1.bf16.msra.mxu0 %v2642
      %3007 = vmatprep.subr.bf16.mxu0 0
      %3008 = vmatpush1.bf16.msra.mxu0 %v2643
      %3009 = vmatprep.subr.bf16.mxu0 0
      %3010 = vmatpush1.bf16.msra.mxu0 %v2644
      %3011 = vmatprep.subr.bf16.mxu0 0
      %3012 = vmatpush1.bf16.msra.mxu0 %v2645
      %3013 = vmatprep.subr.bf16.mxu0 0
      %3014 = vmatpush1.bf16.msra.mxu0 %v2646
      %3015 = vmatprep.mubr.bf16.mxu0 %v1785
      %3016 = vmatmul.mubr.bf16.gmra.mrb[0].mxu0 %v1784
      %v3017 = vpop.f32.mrb[0].mxu0
      %v3018 = vadd.f32 %v2978, %v3017
      %v3019 = vpop.f32.mrb[0].mxu0
      %v3020 = vpop.f32.mrb[0].mxu0
      %v3021 = vpop.f32.mrb[0].mxu0
      %3022 = vdwg.mxu0
      %3023 = vmatprep.subr.bf16.mxu0 0
      %3024 = vmatpush1.bf16.msra.mxu0 %v2647
      %3025 = vmatprep.subr.bf16.mxu0 0
      %3026 = vmatpush1.bf16.msra.mxu0 %v2648
      %3027 = vmatprep.subr.bf16.mxu0 0
      %3028 = vmatpush1.bf16.msra.mxu0 %v2649
      %3029 = vmatprep.subr.bf16.mxu0 0
      %3030 = vmatpush1.bf16.msra.mxu0 %v2650
      %3031 = vmatprep.subr.bf16.mxu0 0
      %3032 = vmatpush1.bf16.msra.mxu0 %v2651
      %3033 = vmatprep.subr.bf16.mxu0 0
      %3034 = vmatpush1.bf16.msra.mxu0 %v2652
      %3035 = vmatprep.subr.bf16.mxu0 0
      %3036 = vmatpush1.bf16.msra.mxu0 %v2653
      %3037 = vmatprep.subr.bf16.mxu0 0
      %3038 = vmatpush1.bf16.msra.mxu0 %v2654
      %3039 = vmatprep.subr.bf16.mxu0 0
      %3040 = vmatpush1.bf16.msra.mxu0 %v2655
      %3041 = vmatprep.subr.bf16.mxu0 0
      %3042 = vmatpush1.bf16.msra.mxu0 %v2656
      %3043 = vmatprep.subr.bf16.mxu0 0
      %3044 = vmatpush1.bf16.msra.mxu0 %v2657
      %3045 = vmatprep.subr.bf16.mxu0 0
      %3046 = vmatpush1.bf16.msra.mxu0 %v2658
      %3047 = vmatprep.subr.bf16.mxu0 0
      %3048 = vmatpush1.bf16.msra.mxu0 %v2659
      %3049 = vmatprep.subr.bf16.mxu0 0
      %3050 = vmatpush1.bf16.msra.mxu0 %v2660
      %3051 = vmatprep.subr.bf16.mxu0 0
      %3052 = vmatpush1.bf16.msra.mxu0 %v2661
      %3053 = vmatprep.subr.bf16.mxu0 0
      %3054 = vmatpush1.bf16.msra.mxu0 %v2662
      %3055 = vmatprep.mubr.bf16.mxu0 %v1787
      %3056 = vmatmul.mubr.bf16.gmra.mrb[0].mxu0 %v1786
      %v3057 = vpop.f32.mrb[0].mxu0
      %v3058 = vadd.f32 %v3018, %v3057
      %v3059 = vpop.f32.mrb[0].mxu0
      %v3060 = vpop.f32.mrb[0].mxu0
      %v3061 = vpop.f32.mrb[0].mxu0
      %3062 = vdwg.mxu0
      %3063 = vmatprep.subr.bf16.mxu0 0
      %3064 = vmatpush1.bf16.msra.mxu0 %v2663
      %3065 = vmatprep.subr.bf16.mxu0 0
      %3066 = vmatpush1.bf16.msra.mxu0 %v2664
      %3067 = vmatprep.subr.bf16.mxu0 0
      %3068 = vmatpush1.bf16.msra.mxu0 %v2665
      %3069 = vmatprep.subr.bf16.mxu0 0
      %3070 = vmatpush1.bf16.msra.mxu0 %v2666
      %3071 = vmatprep.subr.bf16.mxu0 0
      %3072 = vmatpush1.bf16.msra.mxu0 %v2667
      %3073 = vmatprep.subr.bf16.mxu0 0
      %3074 = vmatpush1.bf16.msra.mxu0 %v2668
      %3075 = vmatprep.subr.bf16.mxu0 0
      %3076 = vmatpush1.bf16.msra.mxu0 %v2669
      %3077 = vmatprep.subr.bf16.mxu0 0
      %3078 = vmatpush1.bf16.msra.mxu0 %v2670
      %3079 = vmatprep.subr.bf16.mxu0 0
      %3080 = vmatpush1.bf16.msra.mxu0 %v2671
      %3081 = vmatprep.subr.bf16.mxu0 0
      %3082 = vmatpush1.bf16.msra.mxu0 %v2672
      %3083 = vmatprep.subr.bf16.mxu0 0
      %3084 = vmatpush1.bf16.msra.mxu0 %v2673
      %3085 = vmatprep.subr.bf16.mxu0 0
      %3086 = vmatpush1.bf16.msra.mxu0 %v2674
      %3087 = vmatprep.subr.bf16.mxu0 0
      %3088 = vmatpush1.bf16.msra.mxu0 %v2675
      %3089 = vmatprep.subr.bf16.mxu0 0
      %3090 = vmatpush1.bf16.msra.mxu0 %v2676
      %3091 = vmatprep.subr.bf16.mxu0 0
      %3092 = vmatpush1.bf16.msra.mxu0 %v2677
      %3093 = vmatprep.subr.bf16.mxu0 0
      %3094 = vmatpush1.bf16.msra.mxu0 %v2678
      %3095 = vmatprep.mubr.bf16.mxu0 %v1789
      %3096 = vmatmul.mubr.bf16.gmra.mrb[0].mxu0 %v1788
      %v3097 = vpop.f32.mrb[0].mxu0
      %v3098 = vadd.f32 %v3058, %v3097
      %v3099 = vpop.f32.mrb[0].mxu0
      %v3100 = vpop.f32.mrb[0].mxu0
      %v3101 = vpop.f32.mrb[0].mxu0
      %3102 = vdwg.mxu0
      %3103 = vmatprep.subr.bf16.mxu0 0
      %3104 = vmatpush1.bf16.msra.mxu0 %v2679
      %3105 = vmatprep.subr.bf16.mxu0 0
      %3106 = vmatpush1.bf16.msra.mxu0 %v2680
      %3107 = vmatprep.subr.bf16.mxu0 0
      %3108 = vmatpush1.bf16.msra.mxu0 %v2681
      %3109 = vmatprep.subr.bf16.mxu0 0
      %3110 = vmatpush1.bf16.msra.mxu0 %v2682
      %3111 = vmatprep.subr.bf16.mxu0 0
      %3112 = vmatpush1.bf16.msra.mxu0 %v2683
      %3113 = vmatprep.subr.bf16.mxu0 0
      %3114 = vmatpush1.bf16.msra.mxu0 %v2684
      %3115 = vmatprep.subr.bf16.mxu0 0
      %3116 = vmatpush1.bf16.msra.mxu0 %v2685
      %3117 = vmatprep.subr.bf16.mxu0 0
      %3118 = vmatpush1.bf16.msra.mxu0 %v2686
      %3119 = vmatprep.subr.bf16.mxu0 0
      %3120 = vmatpush1.bf16.msra.mxu0 %v2687
      %3121 = vmatprep.subr.bf16.mxu0 0
      %3122 = vmatpush1.bf16.msra.mxu0 %v2688
      %3123 = vmatprep.subr.bf16.mxu0 0
      %3124 = vmatpush1.bf16.msra.mxu0 %v2689
      %3125 = vmatprep.subr.bf16.mxu0 0
      %3126 = vmatpush1.bf16.msra.mxu0 %v2690
      %3127 = vmatprep.subr.bf16.mxu0 0
      %3128 = vmatpush1.bf16.msra.mxu0 %v2691
      %3129 = vmatprep.subr.bf16.mxu0 0
      %3130 = vmatpush1.bf16.msra.mxu0 %v2692
      %3131 = vmatprep.subr.bf16.mxu0 0
      %3132 = vmatpush1.bf16.msra.mxu0 %v2693
      %3133 = vmatprep.subr.bf16.mxu0 0
      %3134 = vmatpush1.bf16.msra.mxu0 %v2694
      %3135 = vmatprep.mubr.bf16.mxu0 %v1791
      %3136 = vmatmul.mubr.bf16.gmra.mrb[0].mxu0 %v1790
      %v3137 = vpop.f32.mrb[0].mxu0
      %v3138 = vadd.f32 %v3098, %v3137
      %v3139 = vpop.f32.mrb[0].mxu0
      %v3140 = vpop.f32.mrb[0].mxu0
      %v3141 = vpop.f32.mrb[0].mxu0
      %3142 = vdwg.mxu0
      %v3143 = vadd.f32 %v1151, %v3138
      %v3144 = vld [vmem:[%s18] sm:$0x1]
      %v3145 = vld [vmem:[%s19] sm:$0x1]
      %v3146 = vsel %vm705, %v3143, 0.0
      %3147 = vadd.xlane.f32.xlu0 %v3146
      %v3148 = vpop.xlane.xlu0 %3147
      %v3149 = vmul.f32 %v3148, %v1127
      %v3150 = vsub.f32 %v3143, %v3149
      %v3151 = vmul.f32 %v3150, %v3150
      %v3152 = vsel %vm705, %v3151, 0.0
      %3153 = vadd.xlane.f32.xlu0 %v3152
      %v3154 = vpop.xlane.xlu0 %3153
      %v3155 = vmul.f32 %v3154, %v1127
      %v3156 = vadd.f32 %v3155, 1e-05
      %v3157 = vrsqrt.pop %v3156
      %v3158 = vmul.f32 %v3150, %v3157
      %v3160 = vlaneseq
      %v3161 = vshrl.u32 %v3160, 7
      %v3162 = vsub.s32 0, %v3161
      %v3163 = vrot.slane %v3144, %v3162
      %v3165 = vmul.f32 %v3158, %v3163
      %v3167 = vlaneseq
      %v3168 = vshrl.u32 %v3167, 7
      %v3169 = vsub.s32 0, %v3168
      %v3170 = vrot.slane %v3145, %v3169
      %v3172 = vadd.f32 %v3165, %v3170
      %v3173 = vpack.c.bf16 %v3172, %v3172
      %s3174 = scalar_lea.vmem %s4, 16
      %v3175 = vld [vmem:[%s3174] sm:$0xf]
      %v3176 = vld [vmem:[%s3174 + $0x4] sm:$0xf]
      %v3177 = vld [vmem:[%s3174 + $0x8] sm:$0xf]
      %v3178 = vld [vmem:[%s3174 + $0xc] sm:$0xf]
      %s3179 = scalar_lea.vmem %s7, 1
      %v3180 = vld [vmem:[%s3179] sm:$0x1]
      %v3182 = vlaneseq
      %v3183 = vshrl.u32 %v3182, 7
      %v3184 = vsub.s32 0, %v3183
      %v3185 = vrot.slane %v3180, %v3184
      %v3191 = vunpack.c.l.b16 %v3175
      %v3192 = vunpack.c.l.b16 %v3176
      %v3193 = vunpack.c.l.b16 %v3177
      %v3194 = vunpack.c.l.b16 %v3178
      %v3195 = vpack.c.b16 %v3192, %v3191
      %v3196 = vpack.c.b16 %v3194, %v3193
      %v3200 = vsel %vm705, %v3173, 0
      %3202 = vmatprep.subr.bf16.mxu0 0
      %3203 = vmatpush1.bf16.msra.mxu0 %v3195
      %3204 = vmatprep.subr.bf16.mxu0 0
      %3205 = vmatpush1.bf16.msra.mxu0 %v3196
      %3206 = vmatprep.subr.bf16.mxu0 0
      %3207 = vmatpush1.bf16.msra.mxu0 0
      %3208 = vmatprep.subr.bf16.mxu0 0
      %3209 = vmatpush1.bf16.msra.mxu0 0
      %3210 = vmatprep.subr.bf16.mxu0 0
      %3211 = vmatpush1.bf16.msra.mxu0 0
      %3212 = vmatprep.subr.bf16.mxu0 0
      %3213 = vmatpush1.bf16.msra.mxu0 0
      %3214 = vmatprep.subr.bf16.mxu0 0
      %3215 = vmatpush1.bf16.msra.mxu0 0
      %3216 = vmatprep.subr.bf16.mxu0 0
      %3217 = vmatpush1.bf16.msra.mxu0 0
      %3218 = vmatprep.subr.bf16.mxu0 0
      %3219 = vmatpush1.bf16.msra.mxu0 0
      %3220 = vmatprep.subr.bf16.mxu0 0
      %3221 = vmatpush1.bf16.msra.mxu0 0
      %3222 = vmatprep.subr.bf16.mxu0 0
      %3223 = vmatpush1.bf16.msra.mxu0 0
      %3224 = vmatprep.subr.bf16.mxu0 0
      %3225 = vmatpush1.bf16.msra.mxu0 0
      %3226 = vmatprep.subr.bf16.mxu0 0
      %3227 = vmatpush1.bf16.msra.mxu0 0
      %3228 = vmatprep.subr.bf16.mxu0 0
      %3229 = vmatpush1.bf16.msra.mxu0 0
      %3230 = vmatprep.subr.bf16.mxu0 0
      %3231 = vmatpush1.bf16.msra.mxu0 0
      %3232 = vmatprep.subr.bf16.mxu0 0
      %3233 = vmatpush1.bf16.msra.mxu0 0
      %3234 = vmatprep.mubr.bf16.mxu0 0
      %3235 = vmatmul.mubr.bf16.gmra.mrb[0].mxu0 %v3200
      %v3236 = vpop.f32.mrb[0].mxu0
      %v3237 = vadd.f32 %v3185, %v3236
      %v3238 = vpop.f32.mrb[0].mxu0
      %v3239 = vpop.f32.mrb[0].mxu0
      %v3240 = vpop.f32.mrb[0].mxu0
      %3241 = vdwg.mxu0
      %s3242 = scalar_lea.vmem %s5, 16
      %v3243 = vld [vmem:[%s3242] sm:$0xf]
      %v3244 = vld [vmem:[%s3242 + $0x4] sm:$0xf]
      %v3245 = vld [vmem:[%s3242 + $0x8] sm:$0xf]
      %v3246 = vld [vmem:[%s3242 + $0xc] sm:$0xf]
      %s3247 = scalar_lea.vmem %s8, 1
      %v3248 = vld [vmem:[%s3247] sm:$0x1]
      %v3250 = vlaneseq
      %v3251 = vshrl.u32 %v3250, 7
      %v3252 = vsub.s32 0, %v3251
      %v3253 = vrot.slane %v3248, %v3252
      %v3259 = vunpack.c.l.b16 %v3243
      %v3260 = vunpack.c.l.b16 %v3244
      %v3261 = vunpack.c.l.b16 %v3245
      %v3262 = vunpack.c.l.b16 %v3246
      %v3263 = vpack.c.b16 %v3260, %v3259
      %v3264 = vpack.c.b16 %v3262, %v3261
      %3267 = vmatprep.subr.bf16.mxu0 0
      %3268 = vmatpush1.bf16.msra.mxu0 %v3263
      %3269 = vmatprep.subr.bf16.mxu0 0
      %3270 = vmatpush1.bf16.msra.mxu0 %v3264
      %3271 = vmatprep.subr.bf16.mxu0 0
      %3272 = vmatpush1.bf16.msra.mxu0 0
      %3273 = vmatprep.subr.bf16.mxu0 0
      %3274 = vmatpush1.bf16.msra.mxu0 0
      %3275 = vmatprep.subr.bf16.mxu0 0
      %3276 = vmatpush1.bf16.msra.mxu0 0
      %3277 = vmatprep.subr.bf16.mxu0 0
      %3278 = vmatpush1.bf16.msra.mxu0 0
      %3279 = vmatprep.subr.bf16.mxu0 0
      %3280 = vmatpush1.bf16.msra.mxu0 0
      %3281 = vmatprep.subr.bf16.mxu0 0
      %3282 = vmatpush1.bf16.msra.mxu0 0
      %3283 = vmatprep.subr.bf16.mxu0 0
      %3284 = vmatpush1.bf16.msra.mxu0 0
      %3285 = vmatprep.subr.bf16.mxu0 0
      %3286 = vmatpush1.bf16.msra.mxu0 0
      %3287 = vmatprep.subr.bf16.mxu0 0
      %3288 = vmatpush1.bf16.msra.mxu0 0
      %3289 = vmatprep.subr.bf16.mxu0 0
      %3290 = vmatpush1.bf16.msra.mxu0 0
      %3291 = vmatprep.subr.bf16.mxu0 0
      %3292 = vmatpush1.bf16.msra.mxu0 0
      %3293 = vmatprep.subr.bf16.mxu0 0
      %3294 = vmatpush1.bf16.msra.mxu0 0
      %3295 = vmatprep.subr.bf16.mxu0 0
      %3296 = vmatpush1.bf16.msra.mxu0 0
      %3297 = vmatprep.subr.bf16.mxu0 0
      %3298 = vmatpush1.bf16.msra.mxu0 0
      %3299 = vmatprep.mubr.bf16.mxu0 0
      %3300 = vmatmul.mubr.bf16.gmra.mrb[0].mxu0 %v3200
      %v3301 = vpop.f32.mrb[0].mxu0
      %v3302 = vadd.f32 %v3253, %v3301
      %v3303 = vpop.f32.mrb[0].mxu0
      %v3304 = vpop.f32.mrb[0].mxu0
      %v3305 = vpop.f32.mrb[0].mxu0
      %3306 = vdwg.mxu0
      %s3307 = scalar_lea.vmem %s6, 16
      %v3308 = vld [vmem:[%s3307] sm:$0xf]
      %v3309 = vld [vmem:[%s3307 + $0x4] sm:$0xf]
      %v3310 = vld [vmem:[%s3307 + $0x8] sm:$0xf]
      %v3311 = vld [vmem:[%s3307 + $0xc] sm:$0xf]
      %s3312 = scalar_lea.vmem %s9, 1
      %v3313 = vld [vmem:[%s3312] sm:$0x1]
      %v3315 = vlaneseq
      %v3316 = vshrl.u32 %v3315, 7
      %v3317 = vsub.s32 0, %v3316
      %v3318 = vrot.slane %v3313, %v3317
      %v3324 = vunpack.c.l.b16 %v3308
      %v3325 = vunpack.c.l.b16 %v3309
      %v3326 = vunpack.c.l.b16 %v3310
      %v3327 = vunpack.c.l.b16 %v3311
      %v3328 = vpack.c.b16 %v3325, %v3324
      %v3329 = vpack.c.b16 %v3327, %v3326
      %3332 = vmatprep.subr.bf16.mxu0 0
      %3333 = vmatpush1.bf16.msra.mxu0 %v3328
      %3334 = vmatprep.subr.bf16.mxu0 0
      %3335 = vmatpush1.bf16.msra.mxu0 %v3329
      %3336 = vmatprep.subr.bf16.mxu0 0
      %3337 = vmatpush1.bf16.msra.mxu0 0
      %3338 = vmatprep.subr.bf16.mxu0 0
      %3339 = vmatpush1.bf16.msra.mxu0 0
      %3340 = vmatprep.subr.bf16.mxu0 0
      %3341 = vmatpush1.bf16.msra.mxu0 0
      %3342 = vmatprep.subr.bf16.mxu0 0
      %3343 = vmatpush1.bf16.msra.mxu0 0
      %3344 = vmatprep.subr.bf16.mxu0 0
      %3345 = vmatpush1.bf16.msra.mxu0 0
      %3346 = vmatprep.subr.bf16.mxu0 0
      %3347 = vmatpush1.bf16.msra.mxu0 0
      %3348 = vmatprep.subr.bf16.mxu0 0
      %3349 = vmatpush1.bf16.msra.mxu0 0
      %3350 = vmatprep.subr.bf16.mxu0 0
      %3351 = vmatpush1.bf16.msra.mxu0 0
      %3352 = vmatprep.subr.bf16.mxu0 0
      %3353 = vmatpush1.bf16.msra.mxu0 0
      %3354 = vmatprep.subr.bf16.mxu0 0
      %3355 = vmatpush1.bf16.msra.mxu0 0
      %3356 = vmatprep.subr.bf16.mxu0 0
      %3357 = vmatpush1.bf16.msra.mxu0 0
      %3358 = vmatprep.subr.bf16.mxu0 0
      %3359 = vmatpush1.bf16.msra.mxu0 0
      %3360 = vmatprep.subr.bf16.mxu0 0
      %3361 = vmatpush1.bf16.msra.mxu0 0
      %3362 = vmatprep.subr.bf16.mxu0 0
      %3363 = vmatpush1.bf16.msra.mxu0 0
      %3364 = vmatprep.mubr.bf16.mxu0 0
      %3365 = vmatmul.mubr.bf16.gmra.mrb[0].mxu0 %v3200
      %v3366 = vpop.f32.mrb[0].mxu0
      %v3367 = vadd.f32 %v3318, %v3366
      %v3368 = vpop.f32.mrb[0].mxu0
      %v3369 = vpop.f32.mrb[0].mxu0
      %v3370 = vpop.f32.mrb[0].mxu0
      %3371 = vdwg.mxu0
      %v3372 = vpack.c.bf16 %v3237, %v3237
      %v3373 = vpack.c.bf16 %v3302, %v3302
      %v3375 = vsel %vm705, %v3372, 0
      %v3378 = vsel %vm705, %v3373, 0
      %3380 = vmatprep.subr.bf16.mxu0 0
      %3381 = vmatpush1.bf16.xpose.msra.mxu0 %v3378
      %3382 = vmatprep.subr.bf16.mxu0 0
      %3383 = vmatpush1.bf16.xpose.msra.mxu0 0
      %3384 = vmatprep.subr.bf16.mxu0 0
      %3385 = vmatpush1.bf16.xpose.msra.mxu0 0
      %3386 = vmatprep.subr.bf16.mxu0 0
      %3387 = vmatpush1.bf16.xpose.msra.mxu0 0
      %3388 = vmatprep.subr.bf16.mxu0 0
      %3389 = vmatpush1.bf16.xpose.msra.mxu0 0
      %3390 = vmatprep.subr.bf16.mxu0 0
      %3391 = vmatpush1.bf16.xpose.msra.mxu0 0
      %3392 = vmatprep.subr.bf16.mxu0 0
      %3393 = vmatpush1.bf16.xpose.msra.mxu0 0
      %3394 = vmatprep.subr.bf16.mxu0 0
      %3395 = vmatpush1.bf16.xpose.msra.mxu0 0
      %3396 = vmatprep.subr.bf16.mxu0 0
      %3397 = vmatpush1.bf16.xpose.msra.mxu0 0
      %3398 = vmatprep.subr.bf16.mxu0 0
      %3399 = vmatpush1.bf16.xpose.msra.mxu0 0
      %3400 = vmatprep.subr.bf16.mxu0 0
      %3401 = vmatpush1.bf16.xpose.msra.mxu0 0
      %3402 = vmatprep.subr.bf16.mxu0 0
      %3403 = vmatpush1.bf16.xpose.msra.mxu0 0
      %3404 = vmatprep.subr.bf16.mxu0 0
      %3405 = vmatpush1.bf16.xpose.msra.mxu0 0
      %3406 = vmatprep.subr.bf16.mxu0 0
      %3407 = vmatpush1.bf16.xpose.msra.mxu0 0
      %3408 = vmatprep.subr.bf16.mxu0 0
      %3409 = vmatpush1.bf16.xpose.msra.mxu0 0
      %3410 = vmatprep.subr.bf16.mxu0 0
      %3411 = vmatpush1.bf16.xpose.msra.mxu0 0
      %3412 = vmatprep.mubr.bf16.mxu0 0
      %3413 = vmatmul.mubr.bf16.gmra.mrb[0].mxu0 %v3375
      %v3414 = vpop.f32.mrb[0].mxu0
      %v3415 = vadd.f32 0.0, %v3414
      %v3416 = vpop.f32.mrb[0].mxu0
      %v3417 = vpop.f32.mrb[0].mxu0
      %v3418 = vpop.f32.mrb[0].mxu0
      %3419 = vdwg.mxu0
      %v3420 = vmul.f32 %v3415, 0.17677669
      %v3421 = vsel %vm993, %v3420, -inf
      %3422 = vmax.xlane.f32.xlu0 %v3421
      %v3423 = vpop.xlane.xlu0 %3422
      %v3424 = vsub.f32 %v3420, %v3423
      %v3425 = vmul.f32 %v3424, 1.442695
      %v3426 = vpow.pop %v3425
      %v3427 = vsel %vm993, %v3426, 0.0
      %3428 = vadd.xlane.f32.xlu0 %v3427
      %v3429 = vpop.xlane.xlu0 %3428
      %v3430 = vrcp.pop %v3429
      %v3431 = vmul.f32 %v3426, %v3430
      %v3432 = vpack.c.bf16 %v3431, %v3431
      %v3433 = vpack.c.bf16 %v3367, %v3367
      %v3435 = vsel %vm993, %v3432, 0
      %v3438 = vsel %vm1010, %v3433, 0
      %3440 = vmatprep.subr.bf16.mxu0 0
      %3441 = vmatpush1.bf16.msra.mxu0 %v3438
      %3442 = vmatprep.subr.bf16.mxu0 0
      %3443 = vmatpush1.bf16.msra.mxu0 0
      %3444 = vmatprep.subr.bf16.mxu0 0
      %3445 = vmatpush1.bf16.msra.mxu0 0
      %3446 = vmatprep.subr.bf16.mxu0 0
      %3447 = vmatpush1.bf16.msra.mxu0 0
      %3448 = vmatprep.subr.bf16.mxu0 0
      %3449 = vmatpush1.bf16.msra.mxu0 0
      %3450 = vmatprep.subr.bf16.mxu0 0
      %3451 = vmatpush1.bf16.msra.mxu0 0
      %3452 = vmatprep.subr.bf16.mxu0 0
      %3453 = vmatpush1.bf16.msra.mxu0 0
      %3454 = vmatprep.subr.bf16.mxu0 0
      %3455 = vmatpush1.bf16.msra.mxu0 0
      %3456 = vmatprep.subr.bf16.mxu0 0
      %3457 = vmatpush1.bf16.msra.mxu0 0
      %3458 = vmatprep.subr.bf16.mxu0 0
      %3459 = vmatpush1.bf16.msra.mxu0 0
      %3460 = vmatprep.subr.bf16.mxu0 0
      %3461 = vmatpush1.bf16.msra.mxu0 0
      %3462 = vmatprep.subr.bf16.mxu0 0
      %3463 = vmatpush1.bf16.msra.mxu0 0
      %3464 = vmatprep.subr.bf16.mxu0 0
      %3465 = vmatpush1.bf16.msra.mxu0 0
      %3466 = vmatprep.subr.bf16.mxu0 0
      %3467 = vmatpush1.bf16.msra.mxu0 0
      %3468 = vmatprep.subr.bf16.mxu0 0
      %3469 = vmatpush1.bf16.msra.mxu0 0
      %3470 = vmatprep.subr.bf16.mxu0 0
      %3471 = vmatpush1.bf16.msra.mxu0 0
      %3472 = vmatprep.mubr.bf16.mxu0 0
      %3473 = vmatmul.mubr.bf16.gmra.mrb[0].mxu0 %v3435
      %v3474 = vpop.f32.mrb[0].mxu0
      %v3475 = vadd.f32 0.0, %v3474
      %v3476 = vpop.f32.mrb[0].mxu0
      %v3477 = vpop.f32.mrb[0].mxu0
      %v3478 = vpop.f32.mrb[0].mxu0
      %3479 = vdwg.mxu0
      %v3480 = vpack.c.bf16 %v3475, %v3475
      %s3481 = scalar_lea.vmem %s10, 16
      %v3482 = vld [vmem:[%s3481] sm:$0xf]
      %v3483 = vld [vmem:[%s3481 + $0x4] sm:$0xf]
      %v3484 = vld [vmem:[%s3481 + $0x8] sm:$0xf]
      %v3485 = vld [vmem:[%s3481 + $0xc] sm:$0xf]
      %s3486 = scalar_lea.vmem %s11, 1
      %v3487 = vld [vmem:[%s3486] sm:$0x1]
      %v3489 = vlaneseq
      %v3490 = vshrl.u32 %v3489, 7
      %v3491 = vsub.s32 0, %v3490
      %v3492 = vrot.slane %v3487, %v3491
      %v3498 = vunpack.c.l.b16 %v3482
      %v3499 = vunpack.c.l.b16 %v3483
      %v3500 = vunpack.c.l.b16 %v3484
      %v3501 = vunpack.c.l.b16 %v3485
      %v3502 = vpack.c.b16 %v3499, %v3498
      %v3503 = vpack.c.b16 %v3501, %v3500
      %v3507 = vsel %vm705, %v3480, 0
      %3509 = vmatprep.subr.bf16.mxu0 0
      %3510 = vmatpush1.bf16.msra.mxu0 %v3502
      %3511 = vmatprep.subr.bf16.mxu0 0
      %3512 = vmatpush1.bf16.msra.mxu0 %v3503
      %3513 = vmatprep.subr.bf16.mxu0 0
      %3514 = vmatpush1.bf16.msra.mxu0 0
      %3515 = vmatprep.subr.bf16.mxu0 0
      %3516 = vmatpush1.bf16.msra.mxu0 0
      %3517 = vmatprep.subr.bf16.mxu0 0
      %3518 = vmatpush1.bf16.msra.mxu0 0
      %3519 = vmatprep.subr.bf16.mxu0 0
      %3520 = vmatpush1.bf16.msra.mxu0 0
      %3521 = vmatprep.subr.bf16.mxu0 0
      %3522 = vmatpush1.bf16.msra.mxu0 0
      %3523 = vmatprep.subr.bf16.mxu0 0
      %3524 = vmatpush1.bf16.msra.mxu0 0
      %3525 = vmatprep.subr.bf16.mxu0 0
      %3526 = vmatpush1.bf16.msra.mxu0 0
      %3527 = vmatprep.subr.bf16.mxu0 0
      %3528 = vmatpush1.bf16.msra.mxu0 0
      %3529 = vmatprep.subr.bf16.mxu0 0
      %3530 = vmatpush1.bf16.msra.mxu0 0
      %3531 = vmatprep.subr.bf16.mxu0 0
      %3532 = vmatpush1.bf16.msra.mxu0 0
      %3533 = vmatprep.subr.bf16.mxu0 0
      %3534 = vmatpush1.bf16.msra.mxu0 0
      %3535 = vmatprep.subr.bf16.mxu0 0
      %3536 = vmatpush1.bf16.msra.mxu0 0
      %3537 = vmatprep.subr.bf16.mxu0 0
      %3538 = vmatpush1.bf16.msra.mxu0 0
      %3539 = vmatprep.subr.bf16.mxu0 0
      %3540 = vmatpush1.bf16.msra.mxu0 0
      %3541 = vmatprep.mubr.bf16.mxu0 0
      %3542 = vmatmul.mubr.bf16.gmra.mrb[0].mxu0 %v3507
      %v3543 = vpop.f32.mrb[0].mxu0
      %v3544 = vadd.f32 %v3492, %v3543
      %v3545 = vpop.f32.mrb[0].mxu0
      %v3546 = vpop.f32.mrb[0].mxu0
      %v3547 = vpop.f32.mrb[0].mxu0
      %3548 = vdwg.mxu0
      %v3549 = vadd.f32 %v3172, %v3544
      %s3550 = scalar_lea.vmem %s12, 1
      %v3551 = vld [vmem:[%s3550] sm:$0x1]
      %s3552 = scalar_lea.vmem %s13, 1
      %v3553 = vld [vmem:[%s3552] sm:$0x1]
      %v3554 = vsel %vm705, %v3549, 0.0
      %3555 = vadd.xlane.f32.xlu0 %v3554
      %v3556 = vpop.xlane.xlu0 %3555
      %v3557 = vmul.f32 %v3556, %v1127
      %v3558 = vsub.f32 %v3549, %v3557
      %v3559 = vmul.f32 %v3558, %v3558
      %v3560 = vsel %vm705, %v3559, 0.0
      %3561 = vadd.xlane.f32.xlu0 %v3560
      %v3562 = vpop.xlane.xlu0 %3561
      %v3563 = vmul.f32 %v3562, %v1127
      %v3564 = vadd.f32 %v3563, 1e-05
      %v3565 = vrsqrt.pop %v3564
      %v3566 = vmul.f32 %v3558, %v3565
      %v3568 = vlaneseq
      %v3569 = vshrl.u32 %v3568, 7
      %v3570 = vsub.s32 0, %v3569
      %v3571 = vrot.slane %v3551, %v3570
      %v3573 = vmul.f32 %v3566, %v3571
      %v3575 = vlaneseq
      %v3576 = vshrl.u32 %v3575, 7
      %v3577 = vsub.s32 0, %v3576
      %v3578 = vrot.slane %v3553, %v3577
      %v3580 = vadd.f32 %v3573, %v3578
      %v3581 = vpack.c.bf16 %v3580, %v3580
      %s3582 = scalar_lea.vmem %s14, 256
      %v3583 = vld [vmem:[%s3582] sm:$0xff]
      %v3584 = vld [vmem:[%s3582 + $0x8] sm:$0xff]
      %v3585 = vld [vmem:[%s3582 + $0x10] sm:$0xff]
      %v3586 = vld [vmem:[%s3582 + $0x18] sm:$0xff]
      %v3587 = vld [vmem:[%s3582 + $0x20] sm:$0xff]
      %v3588 = vld [vmem:[%s3582 + $0x28] sm:$0xff]
      %v3589 = vld [vmem:[%s3582 + $0x30] sm:$0xff]
      %v3590 = vld [vmem:[%s3582 + $0x38] sm:$0xff]
      %v3591 = vld [vmem:[%s3582 + $0x40] sm:$0xff]
      %v3592 = vld [vmem:[%s3582 + $0x48] sm:$0xff]
      %v3593 = vld [vmem:[%s3582 + $0x50] sm:$0xff]
      %v3594 = vld [vmem:[%s3582 + $0x58] sm:$0xff]
      %v3595 = vld [vmem:[%s3582 + $0x60] sm:$0xff]
      %v3596 = vld [vmem:[%s3582 + $0x68] sm:$0xff]
      %v3597 = vld [vmem:[%s3582 + $0x70] sm:$0xff]
      %v3598 = vld [vmem:[%s3582 + $0x78] sm:$0xff]
      %v3599 = vld [vmem:[%s3582 + $0x80] sm:$0xff]
      %v3600 = vld [vmem:[%s3582 + $0x88] sm:$0xff]
      %v3601 = vld [vmem:[%s3582 + $0x90] sm:$0xff]
      %v3602 = vld [vmem:[%s3582 + $0x98] sm:$0xff]
      %v3603 = vld [vmem:[%s3582 + $0xa0] sm:$0xff]
      %v3604 = vld [vmem:[%s3582 + $0xa8] sm:$0xff]
      %v3605 = vld [vmem:[%s3582 + $0xb0] sm:$0xff]
      %v3606 = vld [vmem:[%s3582 + $0xb8] sm:$0xff]
      %v3607 = vld [vmem:[%s3582 + $0xc0] sm:$0xff]
      %v3608 = vld [vmem:[%s3582 + $0xc8] sm:$0xff]
      %v3609 = vld [vmem:[%s3582 + $0xd0] sm:$0xff]
      %v3610 = vld [vmem:[%s3582 + $0xd8] sm:$0xff]
      %v3611 = vld [vmem:[%s3582 + $0xe0] sm:$0xff]
      %v3612 = vld [vmem:[%s3582 + $0xe8] sm:$0xff]
      %v3613 = vld [vmem:[%s3582 + $0xf0] sm:$0xff]
      %v3614 = vld [vmem:[%s3582 + $0xf8] sm:$0xff]
      %s3615 = scalar_lea.vmem %s15, 16
      %v3616 = vld [vmem:[%s3615] sm:$0xff]
      %v3617 = vld [vmem:[%s3615 + $0x8] sm:$0xff]
      %v3620 = vlaneseq
      %v3621 = vshrl.u32 %v3620, 7
      %v3622 = vsub.s32 0, %v3621
      %v3623 = vrot.slane %v3616, %v3622
      %v3624 = vlaneseq
      %v3625 = vshrl.u32 %v3624, 7
      %v3626 = vsub.s32 1, %v3625
      %v3627 = vrot.slane %v3616, %v3626
      %v3628 = vlaneseq
      %v3629 = vshrl.u32 %v3628, 7
      %v3630 = vsub.s32 2, %v3629
      %v3631 = vrot.slane %v3616, %v3630
      %v3632 = vlaneseq
      %v3633 = vshrl.u32 %v3632, 7
      %v3634 = vsub.s32 3, %v3633
      %v3635 = vrot.slane %v3616, %v3634
      %v3636 = vlaneseq
      %v3637 = vshrl.u32 %v3636, 7
      %v3638 = vsub.s32 4, %v3637
      %v3639 = vrot.slane %v3616, %v3638
      %v3640 = vlaneseq
      %v3641 = vshrl.u32 %v3640, 7
      %v3642 = vsub.s32 5, %v3641
      %v3643 = vrot.slane %v3616, %v3642
      %v3644 = vlaneseq
      %v3645 = vshrl.u32 %v3644, 7
      %v3646 = vsub.s32 6, %v3645
      %v3647 = vrot.slane %v3616, %v3646
      %v3648 = vlaneseq
      %v3649 = vshrl.u32 %v3648, 7
      %v3650 = vsub.s32 7, %v3649
      %v3651 = vrot.slane %v3616, %v3650
      %v3652 = vlaneseq
      %v3653 = vshrl.u32 %v3652, 7
      %v3654 = vsub.s32 0, %v3653
      %v3655 = vrot.slane %v3617, %v3654
      %v3656 = vlaneseq
      %v3657 = vshrl.u32 %v3656, 7
      %v3658 = vsub.s32 1, %v3657
      %v3659 = vrot.slane %v3617, %v3658
      %v3660 = vlaneseq
      %v3661 = vshrl.u32 %v3660, 7
      %v3662 = vsub.s32 2, %v3661
      %v3663 = vrot.slane %v3617, %v3662
      %v3664 = vlaneseq
      %v3665 = vshrl.u32 %v3664, 7
      %v3666 = vsub.s32 3, %v3665
      %v3667 = vrot.slane %v3617, %v3666
      %v3668 = vlaneseq
      %v3669 = vshrl.u32 %v3668, 7
      %v3670 = vsub.s32 4, %v3669
      %v3671 = vrot.slane %v3617, %v3670
      %v3672 = vlaneseq
      %v3673 = vshrl.u32 %v3672, 7
      %v3674 = vsub.s32 5, %v3673
      %v3675 = vrot.slane %v3617, %v3674
      %v3676 = vlaneseq
      %v3677 = vshrl.u32 %v3676, 7
      %v3678 = vsub.s32 6, %v3677
      %v3679 = vrot.slane %v3617, %v3678
      %v3680 = vlaneseq
      %v3681 = vshrl.u32 %v3680, 7
      %v3682 = vsub.s32 7, %v3681
      %v3683 = vrot.slane %v3617, %v3682
      %v3732 = vunpack.c.l.b16 %v3583
      %v3733 = vunpack.c.h.b16 %v3583
      %v3734 = vunpack.c.l.b16 %v3584
      %v3735 = vunpack.c.h.b16 %v3584
      %v3736 = vunpack.c.l.b16 %v3585
      %v3737 = vunpack.c.h.b16 %v3585
      %v3738 = vunpack.c.l.b16 %v3586
      %v3739 = vunpack.c.h.b16 %v3586
      %v3740 = vunpack.c.l.b16 %v3587
      %v3741 = vunpack.c.h.b16 %v3587
      %v3742 = vunpack.c.l.b16 %v3588
      %v3743 = vunpack.c.h.b16 %v3588
      %v3744 = vunpack.c.l.b16 %v3589
      %v3745 = vunpack.c.h.b16 %v3589
      %v3746 = vunpack.c.l.b16 %v3590
      %v3747 = vunpack.c.h.b16 %v3590
      %v3748 = vunpack.c.l.b16 %v3591
      %v3749 = vunpack.c.h.b16 %v3591
      %v3750 = vunpack.c.l.b16 %v3592
      %v3751 = vunpack.c.h.b16 %v3592
      %v3752 = vunpack.c.l.b16 %v3593
      %v3753 = vunpack.c.h.b16 %v3593
      %v3754 = vunpack.c.l.b16 %v3594
      %v3755 = vunpack.c.h.b16 %v3594
      %v3756 = vunpack.c.l.b16 %v3595
      %v3757 = vunpack.c.h.b16 %v3595
      %v3758 = vunpack.c.l.b16 %v3596
      %v3759 = vunpack.c.h.b16 %v3596
      %v3760 = vunpack.c.l.b16 %v3597
      %v3761 = vunpack.c.h.b16 %v3597
      %v3762 = vunpack.c.l.b16 %v3598
      %v3763 = vunpack.c.h.b16 %v3598
      %v3764 = vunpack.c.l.b16 %v3599
      %v3765 = vunpack.c.h.b16 %v3599
      %v3766 = vunpack.c.l.b16 %v3600
      %v3767 = vunpack.c.h.b16 %v3600
      %v3768 = vunpack.c.l.b16 %v3601
      %v3769 = vunpack.c.h.b16 %v3601
      %v3770 = vunpack.c.l.b16 %v3602
      %v3771 = vunpack.c.h.b16 %v3602
      %v3772 = vunpack.c.l.b16 %v3603
      %v3773 = vunpack.c.h.b16 %v3603
      %v3774 = vunpack.c.l.b16 %v3604
      %v3775 = vunpack.c.h.b16 %v3604
      %v3776 = vunpack.c.l.b16 %v3605
      %v3777 = vunpack.c.h.b16 %v3605
      %v3778 = vunpack.c.l.b16 %v3606
      %v3779 = vunpack.c.h.b16 %v3606
      %v3780 = vunpack.c.l.b16 %v3607
      %v3781 = vunpack.c.h.b16 %v3607
      %v3782 = vunpack.c.l.b16 %v3608
      %v3783 = vunpack.c.h.b16 %v3608
      %v3784 = vunpack.c.l.b16 %v3609
      %v3785 = vunpack.c.h.b16 %v3609
      %v3786 = vunpack.c.l.b16 %v3610
      %v3787 = vunpack.c.h.b16 %v3610
      %v3788 = vunpack.c.l.b16 %v3611
      %v3789 = vunpack.c.h.b16 %v3611
      %v3790 = vunpack.c.l.b16 %v3612
      %v3791 = vunpack.c.h.b16 %v3612
      %v3792 = vunpack.c.l.b16 %v3613
      %v3793 = vunpack.c.h.b16 %v3613
      %v3794 = vunpack.c.l.b16 %v3614
      %v3795 = vunpack.c.h.b16 %v3614
      %v3796 = vpack.c.b16 %v3748, %v3732
      %v3797 = vpack.c.b16 %v3749, %v3733
      %v3798 = vpack.c.b16 %v3750, %v3734
      %v3799 = vpack.c.b16 %v3751, %v3735
      %v3800 = vpack.c.b16 %v3752, %v3736
      %v3801 = vpack.c.b16 %v3753, %v3737
      %v3802 = vpack.c.b16 %v3754, %v3738
      %v3803 = vpack.c.b16 %v3755, %v3739
      %v3804 = vpack.c.b16 %v3756, %v3740
      %v3805 = vpack.c.b16 %v3757, %v3741
      %v3806 = vpack.c.b16 %v3758, %v3742
      %v3807 = vpack.c.b16 %v3759, %v3743
      %v3808 = vpack.c.b16 %v3760, %v3744
      %v3809 = vpack.c.b16 %v3761, %v3745
      %v3810 = vpack.c.b16 %v3762, %v3746
      %v3811 = vpack.c.b16 %v3763, %v3747
      %v3812 = vpack.c.b16 %v3780, %v3764
      %v3813 = vpack.c.b16 %v3781, %v3765
      %v3814 = vpack.c.b16 %v3782, %v3766
      %v3815 = vpack.c.b16 %v3783, %v3767
      %v3816 = vpack.c.b16 %v3784, %v3768
      %v3817 = vpack.c.b16 %v3785, %v3769
      %v3818 = vpack.c.b16 %v3786, %v3770
      %v3819 = vpack.c.b16 %v3787, %v3771
      %v3820 = vpack.c.b16 %v3788, %v3772
      %v3821 = vpack.c.b16 %v3789, %v3773
      %v3822 = vpack.c.b16 %v3790, %v3774
      %v3823 = vpack.c.b16 %v3791, %v3775
      %v3824 = vpack.c.b16 %v3792, %v3776
      %v3825 = vpack.c.b16 %v3793, %v3777
      %v3826 = vpack.c.b16 %v3794, %v3778
      %v3827 = vpack.c.b16 %v3795, %v3779
      %v3861 = vsel %vm705, %v3581, 0
      %3863 = vmatprep.subr.bf16.mxu0 %v3797
      %3864 = vmatpush1.bf16.msra.mxu0 %v3796
      %3865 = vmatprep.subr.bf16.mxu0 %v3813
      %3866 = vmatpush1.bf16.msra.mxu0 %v3812
      %3867 = vmatprep.subr.bf16.mxu0 0
      %3868 = vmatpush1.bf16.msra.mxu0 0
      %3869 = vmatprep.subr.bf16.mxu0 0
      %3870 = vmatpush1.bf16.msra.mxu0 0
      %3871 = vmatprep.subr.bf16.mxu0 0
      %3872 = vmatpush1.bf16.msra.mxu0 0
      %3873 = vmatprep.subr.bf16.mxu0 0
      %3874 = vmatpush1.bf16.msra.mxu0 0
      %3875 = vmatprep.subr.bf16.mxu0 0
      %3876 = vmatpush1.bf16.msra.mxu0 0
      %3877 = vmatprep.subr.bf16.mxu0 0
      %3878 = vmatpush1.bf16.msra.mxu0 0
      %3879 = vmatprep.subr.bf16.mxu0 0
      %3880 = vmatpush1.bf16.msra.mxu0 0
      %3881 = vmatprep.subr.bf16.mxu0 0
      %3882 = vmatpush1.bf16.msra.mxu0 0
      %3883 = vmatprep.subr.bf16.mxu0 0
      %3884 = vmatpush1.bf16.msra.mxu0 0
      %3885 = vmatprep.subr.bf16.mxu0 0
      %3886 = vmatpush1.bf16.msra.mxu0 0
      %3887 = vmatprep.subr.bf16.mxu0 0
      %3888 = vmatpush1.bf16.msra.mxu0 0
      %3889 = vmatprep.subr.bf16.mxu0 0
      %3890 = vmatpush1.bf16.msra.mxu0 0
      %3891 = vmatprep.subr.bf16.mxu0 0
      %3892 = vmatpush1.bf16.msra.mxu0 0
      %3893 = vmatprep.subr.bf16.mxu0 0
      %3894 = vmatpush1.bf16.msra.mxu0 0
      %3895 = vmatprep.mubr.bf16.mxu0 0
      %3896 = vmatmul.mubr.bf16.gmra.mrb[0].mxu0 %v3861
      %v3897 = vpop.f32.mrb[0].mxu0
      %v3898 = vadd.f32 %v3623, %v3897
      %v3899 = vpop.f32.mrb[0].mxu0
      %v3900 = vadd.f32 %v3627, %v3899
      %v3901 = vpop.f32.mrb[0].mxu0
      %v3902 = vpop.f32.mrb[0].mxu0
      %3903 = vdwg.mxu0
      %3904 = vmatprep.subr.bf16.mxu0 %v3799
      %3905 = vmatpush1.bf16.msra.mxu0 %v3798
      %3906 = vmatprep.subr.bf16.mxu0 %v3815
      %3907 = vmatpush1.bf16.msra.mxu0 %v3814
      %3908 = vmatprep.subr.bf16.mxu0 0
      %3909 = vmatpush1.bf16.msra.mxu0 0
      %3910 = vmatprep.subr.bf16.mxu0 0
      %3911 = vmatpush1.bf16.msra.mxu0 0
      %3912 = vmatprep.subr.bf16.mxu0 0
      %3913 = vmatpush1.bf16.msra.mxu0 0
      %3914 = vmatprep.subr.bf16.mxu0 0
      %3915 = vmatpush1.bf16.msra.mxu0 0
      %3916 = vmatprep.subr.bf16.mxu0 0
      %3917 = vmatpush1.bf16.msra.mxu0 0
      %3918 = vmatprep.subr.bf16.mxu0 0
      %3919 = vmatpush1.bf16.msra.mxu0 0
      %3920 = vmatprep.subr.bf16.mxu0 0
      %3921 = vmatpush1.bf16.msra.mxu0 0
      %3922 = vmatprep.subr.bf16.mxu0 0
      %3923 = vmatpush1.bf16.msra.mxu0 0
      %3924 = vmatprep.subr.bf16.mxu0 0
      %3925 = vmatpush1.bf16.msra.mxu0 0
      %3926 = vmatprep.subr.bf16.mxu0 0
      %3927 = vmatpush1.bf16.msra.mxu0 0
      %3928 = vmatprep.subr.bf16.mxu0 0
      %3929 = vmatpush1.bf16.msra.mxu0 0
      %3930 = vmatprep.subr.bf16.mxu0 0
      %3931 = vmatpush1.bf16.msra.mxu0 0
      %3932 = vmatprep.subr.bf16.mxu0 0
      %3933 = vmatpush1.bf16.msra.mxu0 0
      %3934 = vmatprep.subr.bf16.mxu0 0
      %3935 = vmatpush1.bf16.msra.mxu0 0
      %3936 = vmatprep.mubr.bf16.mxu0 0
      %3937 = vmatmul.mubr.bf16.gmra.mrb[0].mxu0 %v3861
      %v3938 = vpop.f32.mrb[0].mxu0
      %v3939 = vadd.f32 %v3631, %v3938
      %v3940 = vpop.f32.mrb[0].mxu0
      %v3941 = vadd.f32 %v3635, %v3940
      %v3942 = vpop.f32.mrb[0].mxu0
      %v3943 = vpop.f32.mrb[0].mxu0
      %3944 = vdwg.mxu0
      %3945 = vmatprep.subr.bf16.mxu0 %v3801
      %3946 = vmatpush1.bf16.msra.mxu0 %v3800
      %3947 = vmatprep.subr.bf16.mxu0 %v3817
      %3948 = vmatpush1.bf16.msra.mxu0 %v3816
      %3949 = vmatprep.subr.bf16.mxu0 0
      %3950 = vmatpush1.bf16.msra.mxu0 0
      %3951 = vmatprep.subr.bf16.mxu0 0
      %3952 = vmatpush1.bf16.msra.mxu0 0
      %3953 = vmatprep.subr.bf16.mxu0 0
      %3954 = vmatpush1.bf16.msra.mxu0 0
      %3955 = vmatprep.subr.bf16.mxu0 0
      %3956 = vmatpush1.bf16.msra.mxu0 0
      %3957 = vmatprep.subr.bf16.mxu0 0
      %3958 = vmatpush1.bf16.msra.mxu0 0
      %3959 = vmatprep.subr.bf16.mxu0 0
      %3960 = vmatpush1.bf16.msra.mxu0 0
      %3961 = vmatprep.subr.bf16.mxu0 0
      %3962 = vmatpush1.bf16.msra.mxu0 0
      %3963 = vmatprep.subr.bf16.mxu0 0
      %3964 = vmatpush1.bf16.msra.mxu0 0
      %3965 = vmatprep.subr.bf16.mxu0 0
      %3966 = vmatpush1.bf16.msra.mxu0 0
      %3967 = vmatprep.subr.bf16.mxu0 0
      %3968 = vmatpush1.bf16.msra.mxu0 0
      %3969 = vmatprep.subr.bf16.mxu0 0
      %3970 = vmatpush1.bf16.msra.mxu0 0
      %3971 = vmatprep.subr.bf16.mxu0 0
      %3972 = vmatpush1.bf16.msra.mxu0 0
      %3973 = vmatprep.subr.bf16.mxu0 0
      %3974 = vmatpush1.bf16.msra.mxu0 0
      %3975 = vmatprep.subr.bf16.mxu0 0
      %3976 = vmatpush1.bf16.msra.mxu0 0
      %3977 = vmatprep.mubr.bf16.mxu0 0
      %3978 = vmatmul.mubr.bf16.gmra.mrb[0].mxu0 %v3861
      %v3979 = vpop.f32.mrb[0].mxu0
      %v3980 = vadd.f32 %v3639, %v3979
      %v3981 = vpop.f32.mrb[0].mxu0
      %v3982 = vadd.f32 %v3643, %v3981
      %v3983 = vpop.f32.mrb[0].mxu0
      %v3984 = vpop.f32.mrb[0].mxu0
      %3985 = vdwg.mxu0
      %3986 = vmatprep.subr.bf16.mxu0 %v3803
      %3987 = vmatpush1.bf16.msra.mxu0 %v3802
      %3988 = vmatprep.subr.bf16.mxu0 %v3819
      %3989 = vmatpush1.bf16.msra.mxu0 %v3818
      %3990 = vmatprep.subr.bf16.mxu0 0
      %3991 = vmatpush1.bf16.msra.mxu0 0
      %3992 = vmatprep.subr.bf16.mxu0 0
      %3993 = vmatpush1.bf16.msra.mxu0 0
      %3994 = vmatprep.subr.bf16.mxu0 0
      %3995 = vmatpush1.bf16.msra.mxu0 0
      %3996 = vmatprep.subr.bf16.mxu0 0
      %3997 = vmatpush1.bf16.msra.mxu0 0
      %3998 = vmatprep.subr.bf16.mxu0 0
      %3999 = vmatpush1.bf16.msra.mxu0 0
      %4000 = vmatprep.subr.bf16.mxu0 0
      %4001 = vmatpush1.bf16.msra.mxu0 0
      %4002 = vmatprep.subr.bf16.mxu0 0
      %4003 = vmatpush1.bf16.msra.mxu0 0
      %4004 = vmatprep.subr.bf16.mxu0 0
      %4005 = vmatpush1.bf16.msra.mxu0 0
      %4006 = vmatprep.subr.bf16.mxu0 0
      %4007 = vmatpush1.bf16.msra.mxu0 0
      %4008 = vmatprep.subr.bf16.mxu0 0
      %4009 = vmatpush1.bf16.msra.mxu0 0
      %4010 = vmatprep.subr.bf16.mxu0 0
      %4011 = vmatpush1.bf16.msra.mxu0 0
      %4012 = vmatprep.subr.bf16.mxu0 0
      %4013 = vmatpush1.bf16.msra.mxu0 0
      %4014 = vmatprep.subr.bf16.mxu0 0
      %4015 = vmatpush1.bf16.msra.mxu0 0
      %4016 = vmatprep.subr.bf16.mxu0 0
      %4017 = vmatpush1.bf16.msra.mxu0 0
      %4018 = vmatprep.mubr.bf16.mxu0 0
      %4019 = vmatmul.mubr.bf16.gmra.mrb[0].mxu0 %v3861
      %v4020 = vpop.f32.mrb[0].mxu0
      %v4021 = vadd.f32 %v3647, %v4020
      %v4022 = vpop.f32.mrb[0].mxu0
      %v4023 = vadd.f32 %v3651, %v4022
      %v4024 = vpop.f32.mrb[0].mxu0
      %v4025 = vpop.f32.mrb[0].mxu0
      %4026 = vdwg.mxu0
      %4027 = vmatprep.subr.bf16.mxu0 %v3805
      %4028 = vmatpush1.bf16.msra.mxu0 %v3804
      %4029 = vmatprep.subr.bf16.mxu0 %v3821
      %4030 = vmatpush1.bf16.msra.mxu0 %v3820
      %4031 = vmatprep.subr.bf16.mxu0 0
      %4032 = vmatpush1.bf16.msra.mxu0 0
      %4033 = vmatprep.subr.bf16.mxu0 0
      %4034 = vmatpush1.bf16.msra.mxu0 0
      %4035 = vmatprep.subr.bf16.mxu0 0
      %4036 = vmatpush1.bf16.msra.mxu0 0
      %4037 = vmatprep.subr.bf16.mxu0 0
      %4038 = vmatpush1.bf16.msra.mxu0 0
      %4039 = vmatprep.subr.bf16.mxu0 0
      %4040 = vmatpush1.bf16.msra.mxu0 0
      %4041 = vmatprep.subr.bf16.mxu0 0
      %4042 = vmatpush1.bf16.msra.mxu0 0
      %4043 = vmatprep.subr.bf16.mxu0 0
      %4044 = vmatpush1.bf16.msra.mxu0 0
      %4045 = vmatprep.subr.bf16.mxu0 0
      %4046 = vmatpush1.bf16.msra.mxu0 0
      %4047 = vmatprep.subr.bf16.mxu0 0
      %4048 = vmatpush1.bf16.msra.mxu0 0
      %4049 = vmatprep.subr.bf16.mxu0 0
      %4050 = vmatpush1.bf16.msra.mxu0 0
      %4051 = vmatprep.subr.bf16.mxu0 0
      %4052 = vmatpush1.bf16.msra.mxu0 0
      %4053 = vmatprep.subr.bf16.mxu0 0
      %4054 = vmatpush1.bf16.msra.mxu0 0
      %4055 = vmatprep.subr.bf16.mxu0 0
      %4056 = vmatpush1.bf16.msra.mxu0 0
      %4057 = vmatprep.subr.bf16.mxu0 0
      %4058 = vmatpush1.bf16.msra.mxu0 0
      %4059 = vmatprep.mubr.bf16.mxu0 0
      %4060 = vmatmul.mubr.bf16.gmra.mrb[0].mxu0 %v3861
      %v4061 = vpop.f32.mrb[0].mxu0
      %v4062 = vadd.f32 %v3655, %v4061
      %v4063 = vpop.f32.mrb[0].mxu0
      %v4064 = vadd.f32 %v3659, %v4063
      %v4065 = vpop.f32.mrb[0].mxu0
      %v4066 = vpop.f32.mrb[0].mxu0
      %4067 = vdwg.mxu0
      %4068 = vmatprep.subr.bf16.mxu0 %v3807
      %4069 = vmatpush1.bf16.msra.mxu0 %v3806
      %4070 = vmatprep.subr.bf16.mxu0 %v3823
      %4071 = vmatpush1.bf16.msra.mxu0 %v3822
      %4072 = vmatprep.subr.bf16.mxu0 0
      %4073 = vmatpush1.bf16.msra.mxu0 0
      %4074 = vmatprep.subr.bf16.mxu0 0
      %4075 = vmatpush1.bf16.msra.mxu0 0
      %4076 = vmatprep.subr.bf16.mxu0 0
      %4077 = vmatpush1.bf16.msra.mxu0 0
      %4078 = vmatprep.subr.bf16.mxu0 0
      %4079 = vmatpush1.bf16.msra.mxu0 0
      %4080 = vmatprep.subr.bf16.mxu0 0
      %4081 = vmatpush1.bf16.msra.mxu0 0
      %4082 = vmatprep.subr.bf16.mxu0 0
      %4083 = vmatpush1.bf16.msra.mxu0 0
      %4084 = vmatprep.subr.bf16.mxu0 0
      %4085 = vmatpush1.bf16.msra.mxu0 0
      %4086 = vmatprep.subr.bf16.mxu0 0
      %4087 = vmatpush1.bf16.msra.mxu0 0
      %4088 = vmatprep.subr.bf16.mxu0 0
      %4089 = vmatpush1.bf16.msra.mxu0 0
      %4090 = vmatprep.subr.bf16.mxu0 0
      %4091 = vmatpush1.bf16.msra.mxu0 0
      %4092 = vmatprep.subr.bf16.mxu0 0
      %4093 = vmatpush1.bf16.msra.mxu0 0
      %4094 = vmatprep.subr.bf16.mxu0 0
      %4095 = vmatpush1.bf16.msra.mxu0 0
      %4096 = vmatprep.subr.bf16.mxu0 0
      %4097 = vmatpush1.bf16.msra.mxu0 0
      %4098 = vmatprep.subr.bf16.mxu0 0
      %4099 = vmatpush1.bf16.msra.mxu0 0
      %4100 = vmatprep.mubr.bf16.mxu0 0
      %4101 = vmatmul.mubr.bf16.gmra.mrb[0].mxu0 %v3861
      %v4102 = vpop.f32.mrb[0].mxu0
      %v4103 = vadd.f32 %v3663, %v4102
      %v4104 = vpop.f32.mrb[0].mxu0
      %v4105 = vadd.f32 %v3667, %v4104
      %v4106 = vpop.f32.mrb[0].mxu0
      %v4107 = vpop.f32.mrb[0].mxu0
      %4108 = vdwg.mxu0
      %4109 = vmatprep.subr.bf16.mxu0 %v3809
      %4110 = vmatpush1.bf16.msra.mxu0 %v3808
      %4111 = vmatprep.subr.bf16.mxu0 %v3825
      %4112 = vmatpush1.bf16.msra.mxu0 %v3824
      %4113 = vmatprep.subr.bf16.mxu0 0
      %4114 = vmatpush1.bf16.msra.mxu0 0
      %4115 = vmatprep.subr.bf16.mxu0 0
      %4116 = vmatpush1.bf16.msra.mxu0 0
      %4117 = vmatprep.subr.bf16.mxu0 0
      %4118 = vmatpush1.bf16.msra.mxu0 0
      %4119 = vmatprep.subr.bf16.mxu0 0
      %4120 = vmatpush1.bf16.msra.mxu0 0
      %4121 = vmatprep.subr.bf16.mxu0 0
      %4122 = vmatpush1.bf16.msra.mxu0 0
      %4123 = vmatprep.subr.bf16.mxu0 0
      %4124 = vmatpush1.bf16.msra.mxu0 0
      %4125 = vmatprep.subr.bf16.mxu0 0
      %4126 = vmatpush1.bf16.msra.mxu0 0
      %4127 = vmatprep.subr.bf16.mxu0 0
      %4128 = vmatpush1.bf16.msra.mxu0 0
      %4129 = vmatprep.subr.bf16.mxu0 0
      %4130 = vmatpush1.bf16.msra.mxu0 0
      %4131 = vmatprep.subr.bf16.mxu0 0
      %4132 = vmatpush1.bf16.msra.mxu0 0
      %4133 = vmatprep.subr.bf16.mxu0 0
      %4134 = vmatpush1.bf16.msra.mxu0 0
      %4135 = vmatprep.subr.bf16.mxu0 0
      %4136 = vmatpush1.bf16.msra.mxu0 0
      %4137 = vmatprep.subr.bf16.mxu0 0
      %4138 = vmatpush1.bf16.msra.mxu0 0
      %4139 = vmatprep.subr.bf16.mxu0 0
      %4140 = vmatpush1.bf16.msra.mxu0 0
      %4141 = vmatprep.mubr.bf16.mxu0 0
      %4142 = vmatmul.mubr.bf16.gmra.mrb[0].mxu0 %v3861
      %v4143 = vpop.f32.mrb[0].mxu0
      %v4144 = vadd.f32 %v3671, %v4143
      %v4145 = vpop.f32.mrb[0].mxu0
      %v4146 = vadd.f32 %v3675, %v4145
      %v4147 = vpop.f32.mrb[0].mxu0
      %v4148 = vpop.f32.mrb[0].mxu0
      %4149 = vdwg.mxu0
      %4150 = vmatprep.subr.bf16.mxu0 %v3811
      %4151 = vmatpush1.bf16.msra.mxu0 %v3810
      %4152 = vmatprep.subr.bf16.mxu0 %v3827
      %4153 = vmatpush1.bf16.msra.mxu0 %v3826
      %4154 = vmatprep.subr.bf16.mxu0 0
      %4155 = vmatpush1.bf16.msra.mxu0 0
      %4156 = vmatprep.subr.bf16.mxu0 0
      %4157 = vmatpush1.bf16.msra.mxu0 0
      %4158 = vmatprep.subr.bf16.mxu0 0
      %4159 = vmatpush1.bf16.msra.mxu0 0
      %4160 = vmatprep.subr.bf16.mxu0 0
      %4161 = vmatpush1.bf16.msra.mxu0 0
      %4162 = vmatprep.subr.bf16.mxu0 0
      %4163 = vmatpush1.bf16.msra.mxu0 0
      %4164 = vmatprep.subr.bf16.mxu0 0
      %4165 = vmatpush1.bf16.msra.mxu0 0
      %4166 = vmatprep.subr.bf16.mxu0 0
      %4167 = vmatpush1.bf16.msra.mxu0 0
      %4168 = vmatprep.subr.bf16.mxu0 0
      %4169 = vmatpush1.bf16.msra.mxu0 0
      %4170 = vmatprep.subr.bf16.mxu0 0
      %4171 = vmatpush1.bf16.msra.mxu0 0
      %4172 = vmatprep.subr.bf16.mxu0 0
      %4173 = vmatpush1.bf16.msra.mxu0 0
      %4174 = vmatprep.subr.bf16.mxu0 0
      %4175 = vmatpush1.bf16.msra.mxu0 0
      %4176 = vmatprep.subr.bf16.mxu0 0
      %4177 = vmatpush1.bf16.msra.mxu0 0
      %4178 = vmatprep.subr.bf16.mxu0 0
      %4179 = vmatpush1.bf16.msra.mxu0 0
      %4180 = vmatprep.subr.bf16.mxu0 0
      %4181 = vmatpush1.bf16.msra.mxu0 0
      %4182 = vmatprep.mubr.bf16.mxu0 0
      %4183 = vmatmul.mubr.bf16.gmra.mrb[0].mxu0 %v3861
      %v4184 = vpop.f32.mrb[0].mxu0
      %v4185 = vadd.f32 %v3679, %v4184
      %v4186 = vpop.f32.mrb[0].mxu0
      %v4187 = vadd.f32 %v3683, %v4186
      %v4188 = vpop.f32.mrb[0].mxu0
      %v4189 = vpop.f32.mrb[0].mxu0
      %4190 = vdwg.mxu0
      %v4191 = vmax.f32 %v3898, 0.0
      %v4192 = vmax.f32 %v3900, 0.0
      %v4193 = vmax.f32 %v3939, 0.0
      %v4194 = vmax.f32 %v3941, 0.0
      %v4195 = vmax.f32 %v3980, 0.0
      %v4196 = vmax.f32 %v3982, 0.0
      %v4197 = vmax.f32 %v4021, 0.0
      %v4198 = vmax.f32 %v4023, 0.0
      %v4199 = vmax.f32 %v4062, 0.0
      %v4200 = vmax.f32 %v4064, 0.0
      %v4201 = vmax.f32 %v4103, 0.0
      %v4202 = vmax.f32 %v4105, 0.0
      %v4203 = vmax.f32 %v4144, 0.0
      %v4204 = vmax.f32 %v4146, 0.0
      %v4205 = vmax.f32 %v4185, 0.0
      %v4206 = vmax.f32 %v4187, 0.0
      %v4207 = vpack.c.bf16 %v4191, %v4191
      %v4208 = vpack.c.bf16 %v4192, %v4192
      %v4209 = vpack.c.bf16 %v4193, %v4193
      %v4210 = vpack.c.bf16 %v4194, %v4194
      %v4211 = vpack.c.bf16 %v4195, %v4195
      %v4212 = vpack.c.bf16 %v4196, %v4196
      %v4213 = vpack.c.bf16 %v4197, %v4197
      %v4214 = vpack.c.bf16 %v4198, %v4198
      %v4215 = vpack.c.bf16 %v4199, %v4199
      %v4216 = vpack.c.bf16 %v4200, %v4200
      %v4217 = vpack.c.bf16 %v4201, %v4201
      %v4218 = vpack.c.bf16 %v4202, %v4202
      %v4219 = vpack.c.bf16 %v4203, %v4203
      %v4220 = vpack.c.bf16 %v4204, %v4204
      %v4221 = vpack.c.bf16 %v4205, %v4205
      %v4222 = vpack.c.bf16 %v4206, %v4206
      %s4223 = scalar_lea.vmem %s16, 1024
      %v4224 = vld [vmem:[%s4223] sm:$0xf]
      %v4225 = vld [vmem:[%s4223 + $0x4] sm:$0xf]
      %v4226 = vld [vmem:[%s4223 + $0x8] sm:$0xf]
      %v4227 = vld [vmem:[%s4223 + $0xc] sm:$0xf]
      %v4228 = vld [vmem:[%s4223 + $0x10] sm:$0xf]
      %v4229 = vld [vmem:[%s4223 + $0x14] sm:$0xf]
      %v4230 = vld [vmem:[%s4223 + $0x18] sm:$0xf]
      %v4231 = vld [vmem:[%s4223 + $0x1c] sm:$0xf]
      %v4232 = vld [vmem:[%s4223 + $0x20] sm:$0xf]
      %v4233 = vld [vmem:[%s4223 + $0x24] sm:$0xf]
      %v4234 = vld [vmem:[%s4223 + $0x28] sm:$0xf]
      %v4235 = vld [vmem:[%s4223 + $0x2c] sm:$0xf]
      %v4236 = vld [vmem:[%s4223 + $0x30] sm:$0xf]
      %v4237 = vld [vmem:[%s4223 + $0x34] sm:$0xf]
      %v4238 = vld [vmem:[%s4223 + $0x38] sm:$0xf]
      %v4239 = vld [vmem:[%s4223 + $0x3c] sm:$0xf]
      %v4240 = vld [vmem:[%s4223 + $0x40] sm:$0xf]
      %v4241 = vld [vmem:[%s4223 + $0x44] sm:$0xf]
      %v4242 = vld [vmem:[%s4223 + $0x48] sm:$0xf]
      %v4243 = vld [vmem:[%s4223 + $0x4c] sm:$0xf]
      %v4244 = vld [vmem:[%s4223 + $0x50] sm:$0xf]
      %v4245 = vld [vmem:[%s4223 + $0x54] sm:$0xf]
      %v4246 = vld [vmem:[%s4223 + $0x58] sm:$0xf]
      %v4247 = vld [vmem:[%s4223 + $0x5c] sm:$0xf]
      %v4248 = vld [vmem:[%s4223 + $0x60] sm:$0xf]
      %v4249 = vld [vmem:[%s4223 + $0x64] sm:$0xf]
      %v4250 = vld [vmem:[%s4223 + $0x68] sm:$0xf]
      %v4251 = vld [vmem:[%s4223 + $0x6c] sm:$0xf]
      %v4252 = vld [vmem:[%s4223 + $0x70] sm:$0xf]
      %v4253 = vld [vmem:[%s4223 + $0x74] sm:$0xf]
      %v4254 = vld [vmem:[%s4223 + $0x78] sm:$0xf]
      %v4255 = vld [vmem:[%s4223 + $0x7c] sm:$0xf]
      %v4256 = vld [vmem:[%s4223 + $0x80] sm:$0xf]
      %v4257 = vld [vmem:[%s4223 + $0x84] sm:$0xf]
      %v4258 = vld [vmem:[%s4223 + $0x88] sm:$0xf]
      %v4259 = vld [vmem:[%s4223 + $0x8c] sm:$0xf]
      %v4260 = vld [vmem:[%s4223 + $0x90] sm:$0xf]
      %v4261 = vld [vmem:[%s4223 + $0x94] sm:$0xf]
      %v4262 = vld [vmem:[%s4223 + $0x98] sm:$0xf]
      %v4263 = vld [vmem:[%s4223 + $0x9c] sm:$0xf]
      %v4264 = vld [vmem:[%s4223 + $0xa0] sm:$0xf]
      %v4265 = vld [vmem:[%s4223 + $0xa4] sm:$0xf]
      %v4266 = vld [vmem:[%s4223 + $0xa8] sm:$0xf]
      %v4267 = vld [vmem:[%s4223 + $0xac] sm:$0xf]
      %v4268 = vld [vmem:[%s4223 + $0xb0] sm:$0xf]
      %v4269 = vld [vmem:[%s4223 + $0xb4] sm:$0xf]
      %v4270 = vld [vmem:[%s4223 + $0xb8] sm:$0xf]
      %v4271 = vld [vmem:[%s4223 + $0xbc] sm:$0xf]
      %v4272 = vld [vmem:[%s4223 + $0xc0] sm:$0xf]
      %v4273 = vld [vmem:[%s4223 + $0xc4] sm:$0xf]
      %v4274 = vld [vmem:[%s4223 + $0xc8] sm:$0xf]
      %v4275 = vld [vmem:[%s4223 + $0xcc] sm:$0xf]
      %v4276 = vld [vmem:[%s4223 + $0xd0] sm:$0xf]
      %v4277 = vld [vmem:[%s4223 + $0xd4] sm:$0xf]
      %v4278 = vld [vmem:[%s4223 + $0xd8] sm:$0xf]
      %v4279 = vld [vmem:[%s4223 + $0xdc] sm:$0xf]
      %v4280 = vld [vmem:[%s4223 + $0xe0] sm:$0xf]
      %v4281 = vld [vmem:[%s4223 + $0xe4] sm:$0xf]
      %v4282 = vld [vmem:[%s4223 + $0xe8] sm:$0xf]
      %v4283 = vld [vmem:[%s4223 + $0xec] sm:$0xf]
      %v4284 = vld [vmem:[%s4223 + $0xf0] sm:$0xf]
      %v4285 = vld [vmem:[%s4223 + $0xf4] sm:$0xf]
      %v4286 = vld [vmem:[%s4223 + $0xf8] sm:$0xf]
      %v4287 = vld [vmem:[%s4223 + $0xfc] sm:$0xf]
      %v4288 = vld [vmem:[%s4223 + $0x100] sm:$0xf]
      %v4289 = vld [vmem:[%s4223 + $0x104] sm:$0xf]
      %v4290 = vld [vmem:[%s4223 + $0x108] sm:$0xf]
      %v4291 = vld [vmem:[%s4223 + $0x10c] sm:$0xf]
      %v4292 = vld [vmem:[%s4223 + $0x110] sm:$0xf]
      %v4293 = vld [vmem:[%s4223 + $0x114] sm:$0xf]
      %v4294 = vld [vmem:[%s4223 + $0x118] sm:$0xf]
      %v4295 = vld [vmem:[%s4223 + $0x11c] sm:$0xf]
      %v4296 = vld [vmem:[%s4223 + $0x120] sm:$0xf]
      %v4297 = vld [vmem:[%s4223 + $0x124] sm:$0xf]
      %v4298 = vld [vmem:[%s4223 + $0x128] sm:$0xf]
      %v4299 = vld [vmem:[%s4223 + $0x12c] sm:$0xf]
      %v4300 = vld [vmem:[%s4223 + $0x130] sm:$0xf]
      %v4301 = vld [vmem:[%s4223 + $0x134] sm:$0xf]
      %v4302 = vld [vmem:[%s4223 + $0x138] sm:$0xf]
      %v4303 = vld [vmem:[%s4223 + $0x13c] sm:$0xf]
      %v4304 = vld [vmem:[%s4223 + $0x140] sm:$0xf]
      %v4305 = vld [vmem:[%s4223 + $0x144] sm:$0xf]
      %v4306 = vld [vmem:[%s4223 + $0x148] sm:$0xf]
      %v4307 = vld [vmem:[%s4223 + $0x14c] sm:$0xf]
      %v4308 = vld [vmem:[%s4223 + $0x150] sm:$0xf]
      %v4309 = vld [vmem:[%s4223 + $0x154] sm:$0xf]
      %v4310 = vld [vmem:[%s4223 + $0x158] sm:$0xf]
      %v4311 = vld [vmem:[%s4223 + $0x15c] sm:$0xf]
      %v4312 = vld [vmem:[%s4223 + $0x160] sm:$0xf]
      %v4313 = vld [vmem:[%s4223 + $0x164] sm:$0xf]
      %v4314 = vld [vmem:[%s4223 + $0x168] sm:$0xf]
      %v4315 = vld [vmem:[%s4223 + $0x16c] sm:$0xf]
      %v4316 = vld [vmem:[%s4223 + $0x170] sm:$0xf]
      %v4317 = vld [vmem:[%s4223 + $0x174] sm:$0xf]
      %v4318 = vld [vmem:[%s4223 + $0x178] sm:$0xf]
      %v4319 = vld [vmem:[%s4223 + $0x17c] sm:$0xf]
      %v4320 = vld [vmem:[%s4223 + $0x180] sm:$0xf]
      %v4321 = vld [vmem:[%s4223 + $0x184] sm:$0xf]
      %v4322 = vld [vmem:[%s4223 + $0x188] sm:$0xf]
      %v4323 = vld [vmem:[%s4223 + $0x18c] sm:$0xf]
      %v4324 = vld [vmem:[%s4223 + $0x190] sm:$0xf]
      %v4325 = vld [vmem:[%s4223 + $0x194] sm:$0xf]
      %v4326 = vld [vmem:[%s4223 + $0x198] sm:$0xf]
      %v4327 = vld [vmem:[%s4223 + $0x19c] sm:$0xf]
      %v4328 = vld [vmem:[%s4223 + $0x1a0] sm:$0xf]
      %v4329 = vld [vmem:[%s4223 + $0x1a4] sm:$0xf]
      %v4330 = vld [vmem:[%s4223 + $0x1a8] sm:$0xf]
      %v4331 = vld [vmem:[%s4223 + $0x1ac] sm:$0xf]
      %v4332 = vld [vmem:[%s4223 + $0x1b0] sm:$0xf]
      %v4333 = vld [vmem:[%s4223 + $0x1b4] sm:$0xf]
      %v4334 = vld [vmem:[%s4223 + $0x1b8] sm:$0xf]
      %v4335 = vld [vmem:[%s4223 + $0x1bc] sm:$0xf]
      %v4336 = vld [vmem:[%s4223 + $0x1c0] sm:$0xf]
      %v4337 = vld [vmem:[%s4223 + $0x1c4] sm:$0xf]
      %v4338 = vld [vmem:[%s4223 + $0x1c8] sm:$0xf]
      %v4339 = vld [vmem:[%s4223 + $0x1cc] sm:$0xf]
      %v4340 = vld [vmem:[%s4223 + $0x1d0] sm:$0xf]
      %v4341 = vld [vmem:[%s4223 + $0x1d4] sm:$0xf]
      %v4342 = vld [vmem:[%s4223 + $0x1d8] sm:$0xf]
      %v4343 = vld [vmem:[%s4223 + $0x1dc] sm:$0xf]
      %v4344 = vld [vmem:[%s4223 + $0x1e0] sm:$0xf]
      %v4345 = vld [vmem:[%s4223 + $0x1e4] sm:$0xf]
      %v4346 = vld [vmem:[%s4223 + $0x1e8] sm:$0xf]
      %v4347 = vld [vmem:[%s4223 + $0x1ec] sm:$0xf]
      %v4348 = vld [vmem:[%s4223 + $0x1f0] sm:$0xf]
      %v4349 = vld [vmem:[%s4223 + $0x1f4] sm:$0xf]
      %v4350 = vld [vmem:[%s4223 + $0x1f8] sm:$0xf]
      %v4351 = vld [vmem:[%s4223 + $0x1fc] sm:$0xf]
      %v4352 = vld [vmem:[%s4223 + $0x200] sm:$0xf]
      %v4353 = vld [vmem:[%s4223 + $0x204] sm:$0xf]
      %v4354 = vld [vmem:[%s4223 + $0x208] sm:$0xf]
      %v4355 = vld [vmem:[%s4223 + $0x20c] sm:$0xf]
      %v4356 = vld [vmem:[%s4223 + $0x210] sm:$0xf]
      %v4357 = vld [vmem:[%s4223 + $0x214] sm:$0xf]
      %v4358 = vld [vmem:[%s4223 + $0x218] sm:$0xf]
      %v4359 = vld [vmem:[%s4223 + $0x21c] sm:$0xf]
      %v4360 = vld [vmem:[%s4223 + $0x220] sm:$0xf]
      %v4361 = vld [vmem:[%s4223 + $0x224] sm:$0xf]
      %v4362 = vld [vmem:[%s4223 + $0x228] sm:$0xf]
      %v4363 = vld [vmem:[%s4223 + $0x22c] sm:$0xf]
      %v4364 = vld [vmem:[%s4223 + $0x230] sm:$0xf]
      %v4365 = vld [vmem:[%s4223 + $0x234] sm:$0xf]
      %v4366 = vld [vmem:[%s4223 + $0x238] sm:$0xf]
      %v4367 = vld [vmem:[%s4223 + $0x23c] sm:$0xf]
      %v4368 = vld [vmem:[%s4223 + $0x240] sm:$0xf]
      %v4369 = vld [vmem:[%s4223 + $0x244] sm:$0xf]
      %v4370 = vld [vmem:[%s4223 + $0x248] sm:$0xf]
      %v4371 = vld [vmem:[%s4223 + $0x24c] sm:$0xf]
      %v4372 = vld [vmem:[%s4223 + $0x250] sm:$0xf]
      %v4373 = vld [vmem:[%s4223 + $0x254] sm:$0xf]
      %v4374 = vld [vmem:[%s4223 + $0x258] sm:$0xf]
      %v4375 = vld [vmem:[%s4223 + $0x25c] sm:$0xf]
      %v4376 = vld [vmem:[%s4223 + $0x260] sm:$0xf]
      %v4377 = vld [vmem:[%s4223 + $0x264] sm:$0xf]
      %v4378 = vld [vmem:[%s4223 + $0x268] sm:$0xf]
      %v4379 = vld [vmem:[%s4223 + $0x26c] sm:$0xf]
      %v4380 = vld [vmem:[%s4223 + $0x270] sm:$0xf]
      %v4381 = vld [vmem:[%s4223 + $0x274] sm:$0xf]
      %v4382 = vld [vmem:[%s4223 + $0x278] sm:$0xf]
      %v4383 = vld [vmem:[%s4223 + $0x27c] sm:$0xf]
      %v4384 = vld [vmem:[%s4223 + $0x280] sm:$0xf]
      %v4385 = vld [vmem:[%s4223 + $0x284] sm:$0xf]
      %v4386 = vld [vmem:[%s4223 + $0x288] sm:$0xf]
      %v4387 = vld [vmem:[%s4223 + $0x28c] sm:$0xf]
      %v4388 = vld [vmem:[%s4223 + $0x290] sm:$0xf]
      %v4389 = vld [vmem:[%s4223 + $0x294] sm:$0xf]
      %v4390 = vld [vmem:[%s4223 + $0x298] sm:$0xf]
      %v4391 = vld [vmem:[%s4223 + $0x29c] sm:$0xf]
      %v4392 = vld [vmem:[%s4223 + $0x2a0] sm:$0xf]
      %v4393 = vld [vmem:[%s4223 + $0x2a4] sm:$0xf]
      %v4394 = vld [vmem:[%s4223 + $0x2a8] sm:$0xf]
      %v4395 = vld [vmem:[%s4223 + $0x2ac] sm:$0xf]
      %v4396 = vld [vmem:[%s4223 + $0x2b0] sm:$0xf]
      %v4397 = vld [vmem:[%s4223 + $0x2b4] sm:$0xf]
      %v4398 = vld [vmem:[%s4223 + $0x2b8] sm:$0xf]
      %v4399 = vld [vmem:[%s4223 + $0x2bc] sm:$0xf]
      %v4400 = vld [vmem:[%s4223 + $0x2c0] sm:$0xf]
      %v4401 = vld [vmem:[%s4223 + $0x2c4] sm:$0xf]
      %v4402 = vld [vmem:[%s4223 + $0x2c8] sm:$0xf]
      %v4403 = vld [vmem:[%s4223 + $0x2cc] sm:$0xf]
      %v4404 = vld [vmem:[%s4223 + $0x2d0] sm:$0xf]
      %v4405 = vld [vmem:[%s4223 + $0x2d4] sm:$0xf]
      %v4406 = vld [vmem:[%s4223 + $0x2d8] sm:$0xf]
      %v4407 = vld [vmem:[%s4223 + $0x2dc] sm:$0xf]
      %v4408 = vld [vmem:[%s4223 + $0x2e0] sm:$0xf]
      %v4409 = vld [vmem:[%s4223 + $0x2e4] sm:$0xf]
      %v4410 = vld [vmem:[%s4223 + $0x2e8] sm:$0xf]
      %v4411 = vld [vmem:[%s4223 + $0x2ec] sm:$0xf]
      %v4412 = vld [vmem:[%s4223 + $0x2f0] sm:$0xf]
      %v4413 = vld [vmem:[%s4223 + $0x2f4] sm:$0xf]
      %v4414 = vld [vmem:[%s4223 + $0x2f8] sm:$0xf]
      %v4415 = vld [vmem:[%s4223 + $0x2fc] sm:$0xf]
      %v4416 = vld [vmem:[%s4223 + $0x300] sm:$0xf]
      %v4417 = vld [vmem:[%s4223 + $0x304] sm:$0xf]
      %v4418 = vld [vmem:[%s4223 + $0x308] sm:$0xf]
      %v4419 = vld [vmem:[%s4223 + $0x30c] sm:$0xf]
      %v4420 = vld [vmem:[%s4223 + $0x310] sm:$0xf]
      %v4421 = vld [vmem:[%s4223 + $0x314] sm:$0xf]
      %v4422 = vld [vmem:[%s4223 + $0x318] sm:$0xf]
      %v4423 = vld [vmem:[%s4223 + $0x31c] sm:$0xf]
      %v4424 = vld [vmem:[%s4223 + $0x320] sm:$0xf]
      %v4425 = vld [vmem:[%s4223 + $0x324] sm:$0xf]
      %v4426 = vld [vmem:[%s4223 + $0x328] sm:$0xf]
      %v4427 = vld [vmem:[%s4223 + $0x32c] sm:$0xf]
      %v4428 = vld [vmem:[%s4223 + $0x330] sm:$0xf]
      %v4429 = vld [vmem:[%s4223 + $0x334] sm:$0xf]
      %v4430 = vld [vmem:[%s4223 + $0x338] sm:$0xf]
      %v4431 = vld [vmem:[%s4223 + $0x33c] sm:$0xf]
      %v4432 = vld [vmem:[%s4223 + $0x340] sm:$0xf]
      %v4433 = vld [vmem:[%s4223 + $0x344] sm:$0xf]
      %v4434 = vld [vmem:[%s4223 + $0x348] sm:$0xf]
      %v4435 = vld [vmem:[%s4223 + $0x34c] sm:$0xf]
      %v4436 = vld [vmem:[%s4223 + $0x350] sm:$0xf]
      %v4437 = vld [vmem:[%s4223 + $0x354] sm:$0xf]
      %v4438 = vld [vmem:[%s4223 + $0x358] sm:$0xf]
      %v4439 = vld [vmem:[%s4223 + $0x35c] sm:$0xf]
      %v4440 = vld [vmem:[%s4223 + $0x360] sm:$0xf]
      %v4441 = vld [vmem:[%s4223 + $0x364] sm:$0xf]
      %v4442 = vld [vmem:[%s4223 + $0x368] sm:$0xf]
      %v4443 = vld [vmem:[%s4223 + $0x36c] sm:$0xf]
      %v4444 = vld [vmem:[%s4223 + $0x370] sm:$0xf]
      %v4445 = vld [vmem:[%s4223 + $0x374] sm:$0xf]
      %v4446 = vld [vmem:[%s4223 + $0x378] sm:$0xf]
      %v4447 = vld [vmem:[%s4223 + $0x37c] sm:$0xf]
      %v4448 = vld [vmem:[%s4223 + $0x380] sm:$0xf]
      %v4449 = vld [vmem:[%s4223 + $0x384] sm:$0xf]
      %v4450 = vld [vmem:[%s4223 + $0x388] sm:$0xf]
      %v4451 = vld [vmem:[%s4223 + $0x38c] sm:$0xf]
      %v4452 = vld [vmem:[%s4223 + $0x390] sm:$0xf]
      %v4453 = vld [vmem:[%s4223 + $0x394] sm:$0xf]
      %v4454 = vld [vmem:[%s4223 + $0x398] sm:$0xf]
      %v4455 = vld [vmem:[%s4223 + $0x39c] sm:$0xf]
      %v4456 = vld [vmem:[%s4223 + $0x3a0] sm:$0xf]
      %v4457 = vld [vmem:[%s4223 + $0x3a4] sm:$0xf]
      %v4458 = vld [vmem:[%s4223 + $0x3a8] sm:$0xf]
      %v4459 = vld [vmem:[%s4223 + $0x3ac] sm:$0xf]
      %v4460 = vld [vmem:[%s4223 + $0x3b0] sm:$0xf]
      %v4461 = vld [vmem:[%s4223 + $0x3b4] sm:$0xf]
      %v4462 = vld [vmem:[%s4223 + $0x3b8] sm:$0xf]
      %v4463 = vld [vmem:[%s4223 + $0x3bc] sm:$0xf]
      %v4464 = vld [vmem:[%s4223 + $0x3c0] sm:$0xf]
      %v4465 = vld [vmem:[%s4223 + $0x3c4] sm:$0xf]
      %v4466 = vld [vmem:[%s4223 + $0x3c8] sm:$0xf]
      %v4467 = vld [vmem:[%s4223 + $0x3cc] sm:$0xf]
      %v4468 = vld [vmem:[%s4223 + $0x3d0] sm:$0xf]
      %v4469 = vld [vmem:[%s4223 + $0x3d4] sm:$0xf]
      %v4470 = vld [vmem:[%s4223 + $0x3d8] sm:$0xf]
      %v4471 = vld [vmem:[%s4223 + $0x3dc] sm:$0xf]
      %v4472 = vld [vmem:[%s4223 + $0x3e0] sm:$0xf]
      %v4473 = vld [vmem:[%s4223 + $0x3e4] sm:$0xf]
      %v4474 = vld [vmem:[%s4223 + $0x3e8] sm:$0xf]
      %v4475 = vld [vmem:[%s4223 + $0x3ec] sm:$0xf]
      %v4476 = vld [vmem:[%s4223 + $0x3f0] sm:$0xf]
      %v4477 = vld [vmem:[%s4223 + $0x3f4] sm:$0xf]
      %v4478 = vld [vmem:[%s4223 + $0x3f8] sm:$0xf]
      %v4479 = vld [vmem:[%s4223 + $0x3fc] sm:$0xf]
      %s4480 = scalar_lea.vmem %s17, 1
      %v4481 = vld [vmem:[%s4480] sm:$0x1]
      %v4483 = vlaneseq
      %v4484 = vshrl.u32 %v4483, 7
      %v4485 = vsub.s32 0, %v4484
      %v4486 = vrot.slane %v4481, %v4485
      %v4744 = vunpack.c.l.b16 %v4224
      %v4745 = vunpack.c.l.b16 %v4225
      %v4746 = vunpack.c.l.b16 %v4226
      %v4747 = vunpack.c.l.b16 %v4227
      %v4748 = vunpack.c.l.b16 %v4228
      %v4749 = vunpack.c.l.b16 %v4229
      %v4750 = vunpack.c.l.b16 %v4230
      %v4751 = vunpack.c.l.b16 %v4231
      %v4752 = vunpack.c.l.b16 %v4232
      %v4753 = vunpack.c.l.b16 %v4233
      %v4754 = vunpack.c.l.b16 %v4234
      %v4755 = vunpack.c.l.b16 %v4235
      %v4756 = vunpack.c.l.b16 %v4236
      %v4757 = vunpack.c.l.b16 %v4237
      %v4758 = vunpack.c.l.b16 %v4238
      %v4759 = vunpack.c.l.b16 %v4239
      %v4760 = vunpack.c.l.b16 %v4240
      %v4761 = vunpack.c.l.b16 %v4241
      %v4762 = vunpack.c.l.b16 %v4242
      %v4763 = vunpack.c.l.b16 %v4243
      %v4764 = vunpack.c.l.b16 %v4244
      %v4765 = vunpack.c.l.b16 %v4245
      %v4766 = vunpack.c.l.b16 %v4246
      %v4767 = vunpack.c.l.b16 %v4247
      %v4768 = vunpack.c.l.b16 %v4248
      %v4769 = vunpack.c.l.b16 %v4249
      %v4770 = vunpack.c.l.b16 %v4250
      %v4771 = vunpack.c.l.b16 %v4251
      %v4772 = vunpack.c.l.b16 %v4252
      %v4773 = vunpack.c.l.b16 %v4253
      %v4774 = vunpack.c.l.b16 %v4254
      %v4775 = vunpack.c.l.b16 %v4255
      %v4776 = vunpack.c.l.b16 %v4256
      %v4777 = vunpack.c.l.b16 %v4257
      %v4778 = vunpack.c.l.b16 %v4258
      %v4779 = vunpack.c.l.b16 %v4259
      %v4780 = vunpack.c.l.b16 %v4260
      %v4781 = vunpack.c.l.b16 %v4261
      %v4782 = vunpack.c.l.b16 %v4262
      %v4783 = vunpack.c.l.b16 %v4263
      %v4784 = vunpack.c.l.b16 %v4264
      %v4785 = vunpack.c.l.b16 %v4265
      %v4786 = vunpack.c.l.b16 %v4266
      %v4787 = vunpack.c.l.b16 %v4267
      %v4788 = vunpack.c.l.b16 %v4268
      %v4789 = vunpack.c.l.b16 %v4269
      %v4790 = vunpack.c.l.b16 %v4270
      %v4791 = vunpack.c.l.b16 %v4271
      %v4792 = vunpack.c.l.b16 %v4272
      %v4793 = vunpack.c.l.b16 %v4273
      %v4794 = vunpack.c.l.b16 %v4274
      %v4795 = vunpack.c.l.b16 %v4275
      %v4796 = vunpack.c.l.b16 %v4276
      %v4797 = vunpack.c.l.b16 %v4277
      %v4798 = vunpack.c.l.b16 %v4278
      %v4799 = vunpack.c.l.b16 %v4279
      %v4800 = vunpack.c.l.b16 %v4280
      %v4801 = vunpack.c.l.b16 %v4281
      %v4802 = vunpack.c.l.b16 %v4282
      %v4803 = vunpack.c.l.b16 %v4283
      %v4804 = vunpack.c.l.b16 %v4284
      %v4805 = vunpack.c.l.b16 %v4285
      %v4806 = vunpack.c.l.b16 %v4286
      %v4807 = vunpack.c.l.b16 %v4287
      %v4808 = vunpack.c.l.b16 %v4288
      %v4809 = vunpack.c.l.b16 %v4289
      %v4810 = vunpack.c.l.b16 %v4290
      %v4811 = vunpack.c.l.b16 %v4291
      %v4812 = vunpack.c.l.b16 %v4292
      %v4813 = vunpack.c.l.b16 %v4293
      %v4814 = vunpack.c.l.b16 %v4294
      %v4815 = vunpack.c.l.b16 %v4295
      %v4816 = vunpack.c.l.b16 %v4296
      %v4817 = vunpack.c.l.b16 %v4297
      %v4818 = vunpack.c.l.b16 %v4298
      %v4819 = vunpack.c.l.b16 %v4299
      %v4820 = vunpack.c.l.b16 %v4300
      %v4821 = vunpack.c.l.b16 %v4301
      %v4822 = vunpack.c.l.b16 %v4302
      %v4823 = vunpack.c.l.b16 %v4303
      %v4824 = vunpack.c.l.b16 %v4304
      %v4825 = vunpack.c.l.b16 %v4305
      %v4826 = vunpack.c.l.b16 %v4306
      %v4827 = vunpack.c.l.b16 %v4307
      %v4828 = vunpack.c.l.b16 %v4308
      %v4829 = vunpack.c.l.b16 %v4309
      %v4830 = vunpack.c.l.b16 %v4310
      %v4831 = vunpack.c.l.b16 %v4311
      %v4832 = vunpack.c.l.b16 %v4312
      %v4833 = vunpack.c.l.b16 %v4313
      %v4834 = vunpack.c.l.b16 %v4314
      %v4835 = vunpack.c.l.b16 %v4315
      %v4836 = vunpack.c.l.b16 %v4316
      %v4837 = vunpack.c.l.b16 %v4317
      %v4838 = vunpack.c.l.b16 %v4318
      %v4839 = vunpack.c.l.b16 %v4319
      %v4840 = vunpack.c.l.b16 %v4320
      %v4841 = vunpack.c.l.b16 %v4321
      %v4842 = vunpack.c.l.b16 %v4322
      %v4843 = vunpack.c.l.b16 %v4323
      %v4844 = vunpack.c.l.b16 %v4324
      %v4845 = vunpack.c.l.b16 %v4325
      %v4846 = vunpack.c.l.b16 %v4326
      %v4847 = vunpack.c.l.b16 %v4327
      %v4848 = vunpack.c.l.b16 %v4328
      %v4849 = vunpack.c.l.b16 %v4329
      %v4850 = vunpack.c.l.b16 %v4330
      %v4851 = vunpack.c.l.b16 %v4331
      %v4852 = vunpack.c.l.b16 %v4332
      %v4853 = vunpack.c.l.b16 %v4333
      %v4854 = vunpack.c.l.b16 %v4334
      %v4855 = vunpack.c.l.b16 %v4335
      %v4856 = vunpack.c.l.b16 %v4336
      %v4857 = vunpack.c.l.b16 %v4337
      %v4858 = vunpack.c.l.b16 %v4338
      %v4859 = vunpack.c.l.b16 %v4339
      %v4860 = vunpack.c.l.b16 %v4340
      %v4861 = vunpack.c.l.b16 %v4341
      %v4862 = vunpack.c.l.b16 %v4342
      %v4863 = vunpack.c.l.b16 %v4343
      %v4864 = vunpack.c.l.b16 %v4344
      %v4865 = vunpack.c.l.b16 %v4345
      %v4866 = vunpack.c.l.b16 %v4346
      %v4867 = vunpack.c.l.b16 %v4347
      %v4868 = vunpack.c.l.b16 %v4348
      %v4869 = vunpack.c.l.b16 %v4349
      %v4870 = vunpack.c.l.b16 %v4350
      %v4871 = vunpack.c.l.b16 %v4351
      %v4872 = vunpack.c.l.b16 %v4352
      %v4873 = vunpack.c.l.b16 %v4353
      %v4874 = vunpack.c.l.b16 %v4354
      %v4875 = vunpack.c.l.b16 %v4355
      %v4876 = vunpack.c.l.b16 %v4356
      %v4877 = vunpack.c.l.b16 %v4357
      %v4878 = vunpack.c.l.b16 %v4358
      %v4879 = vunpack.c.l.b16 %v4359
      %v4880 = vunpack.c.l.b16 %v4360
      %v4881 = vunpack.c.l.b16 %v4361
      %v4882 = vunpack.c.l.b16 %v4362
      %v4883 = vunpack.c.l.b16 %v4363
      %v4884 = vunpack.c.l.b16 %v4364
      %v4885 = vunpack.c.l.b16 %v4365
      %v4886 = vunpack.c.l.b16 %v4366
      %v4887 = vunpack.c.l.b16 %v4367
      %v4888 = vunpack.c.l.b16 %v4368
      %v4889 = vunpack.c.l.b16 %v4369
      %v4890 = vunpack.c.l.b16 %v4370
      %v4891 = vunpack.c.l.b16 %v4371
      %v4892 = vunpack.c.l.b16 %v4372
      %v4893 = vunpack.c.l.b16 %v4373
      %v4894 = vunpack.c.l.b16 %v4374
      %v4895 = vunpack.c.l.b16 %v4375
      %v4896 = vunpack.c.l.b16 %v4376
      %v4897 = vunpack.c.l.b16 %v4377
      %v4898 = vunpack.c.l.b16 %v4378
      %v4899 = vunpack.c.l.b16 %v4379
      %v4900 = vunpack.c.l.b16 %v4380
      %v4901 = vunpack.c.l.b16 %v4381
      %v4902 = vunpack.c.l.b16 %v4382
      %v4903 = vunpack.c.l.b16 %v4383
      %v4904 = vunpack.c.l.b16 %v4384
      %v4905 = vunpack.c.l.b16 %v4385
      %v4906 = vunpack.c.l.b16 %v4386
      %v4907 = vunpack.c.l.b16 %v4387
      %v4908 = vunpack.c.l.b16 %v4388
      %v4909 = vunpack.c.l.b16 %v4389
      %v4910 = vunpack.c.l.b16 %v4390
      %v4911 = vunpack.c.l.b16 %v4391
      %v4912 = vunpack.c.l.b16 %v4392
      %v4913 = vunpack.c.l.b16 %v4393
      %v4914 = vunpack.c.l.b16 %v4394
      %v4915 = vunpack.c.l.b16 %v4395
      %v4916 = vunpack.c.l.b16 %v4396
      %v4917 = vunpack.c.l.b16 %v4397
      %v4918 = vunpack.c.l.b16 %v4398
      %v4919 = vunpack.c.l.b16 %v4399
      %v4920 = vunpack.c.l.b16 %v4400
      %v4921 = vunpack.c.l.b16 %v4401
      %v4922 = vunpack.c.l.b16 %v4402
      %v4923 = vunpack.c.l.b16 %v4403
      %v4924 = vunpack.c.l.b16 %v4404
      %v4925 = vunpack.c.l.b16 %v4405
      %v4926 = vunpack.c.l.b16 %v4406
      %v4927 = vunpack.c.l.b16 %v4407
      %v4928 = vunpack.c.l.b16 %v4408
      %v4929 = vunpack.c.l.b16 %v4409
      %v4930 = vunpack.c.l.b16 %v4410
      %v4931 = vunpack.c.l.b16 %v4411
      %v4932 = vunpack.c.l.b16 %v4412
      %v4933 = vunpack.c.l.b16 %v4413
      %v4934 = vunpack.c.l.b16 %v4414
      %v4935 = vunpack.c.l.b16 %v4415
      %v4936 = vunpack.c.l.b16 %v4416
      %v4937 = vunpack.c.l.b16 %v4417
      %v4938 = vunpack.c.l.b16 %v4418
      %v4939 = vunpack.c.l.b16 %v4419
      %v4940 = vunpack.c.l.b16 %v4420
      %v4941 = vunpack.c.l.b16 %v4421
      %v4942 = vunpack.c.l.b16 %v4422
      %v4943 = vunpack.c.l.b16 %v4423
      %v4944 = vunpack.c.l.b16 %v4424
      %v4945 = vunpack.c.l.b16 %v4425
      %v4946 = vunpack.c.l.b16 %v4426
      %v4947 = vunpack.c.l.b16 %v4427
      %v4948 = vunpack.c.l.b16 %v4428
      %v4949 = vunpack.c.l.b16 %v4429
      %v4950 = vunpack.c.l.b16 %v4430
      %v4951 = vunpack.c.l.b16 %v4431
      %v4952 = vunpack.c.l.b16 %v4432
      %v4953 = vunpack.c.l.b16 %v4433
      %v4954 = vunpack.c.l.b16 %v4434
      %v4955 = vunpack.c.l.b16 %v4435
      %v4956 = vunpack.c.l.b16 %v4436
      %v4957 = vunpack.c.l.b16 %v4437
      %v4958 = vunpack.c.l.b16 %v4438
      %v4959 = vunpack.c.l.b16 %v4439
      %v4960 = vunpack.c.l.b16 %v4440
      %v4961 = vunpack.c.l.b16 %v4441
      %v4962 = vunpack.c.l.b16 %v4442
      %v4963 = vunpack.c.l.b16 %v4443
      %v4964 = vunpack.c.l.b16 %v4444
      %v4965 = vunpack.c.l.b16 %v4445
      %v4966 = vunpack.c.l.b16 %v4446
      %v4967 = vunpack.c.l.b16 %v4447
      %v4968 = vunpack.c.l.b16 %v4448
      %v4969 = vunpack.c.l.b16 %v4449
      %v4970 = vunpack.c.l.b16 %v4450
      %v4971 = vunpack.c.l.b16 %v4451
      %v4972 = vunpack.c.l.b16 %v4452
      %v4973 = vunpack.c.l.b16 %v4453
      %v4974 = vunpack.c.l.b16 %v4454
      %v4975 = vunpack.c.l.b16 %v4455
      %v4976 = vunpack.c.l.b16 %v4456
      %v4977 = vunpack.c.l.b16 %v4457
      %v4978 = vunpack.c.l.b16 %v4458
      %v4979 = vunpack.c.l.b16 %v4459
      %v4980 = vunpack.c.l.b16 %v4460
      %v4981 = vunpack.c.l.b16 %v4461
      %v4982 = vunpack.c.l.b16 %v4462
      %v4983 = vunpack.c.l.b16 %v4463
      %v4984 = vunpack.c.l.b16 %v4464
      %v4985 = vunpack.c.l.b16 %v4465
      %v4986 = vunpack.c.l.b16 %v4466
      %v4987 = vunpack.c.l.b16 %v4467
      %v4988 = vunpack.c.l.b16 %v4468
      %v4989 = vunpack.c.l.b16 %v4469
      %v4990 = vunpack.c.l.b16 %v4470
      %v4991 = vunpack.c.l.b16 %v4471
      %v4992 = vunpack.c.l.b16 %v4472
      %v4993 = vunpack.c.l.b16 %v4473
      %v4994 = vunpack.c.l.b16 %v4474
      %v4995 = vunpack.c.l.b16 %v4475
      %v4996 = vunpack.c.l.b16 %v4476
      %v4997 = vunpack.c.l.b16 %v4477
      %v4998 = vunpack.c.l.b16 %v4478
      %v4999 = vunpack.c.l.b16 %v4479
      %v5000 = vpack.c.b16 %v4745, %v4744
      %v5001 = vpack.c.b16 %v4747, %v4746
      %v5002 = vpack.c.b16 %v4749, %v4748
      %v5003 = vpack.c.b16 %v4751, %v4750
      %v5004 = vpack.c.b16 %v4753, %v4752
      %v5005 = vpack.c.b16 %v4755, %v4754
      %v5006 = vpack.c.b16 %v4757, %v4756
      %v5007 = vpack.c.b16 %v4759, %v4758
      %v5008 = vpack.c.b16 %v4761, %v4760
      %v5009 = vpack.c.b16 %v4763, %v4762
      %v5010 = vpack.c.b16 %v4765, %v4764
      %v5011 = vpack.c.b16 %v4767, %v4766
      %v5012 = vpack.c.b16 %v4769, %v4768
      %v5013 = vpack.c.b16 %v4771, %v4770
      %v5014 = vpack.c.b16 %v4773, %v4772
      %v5015 = vpack.c.b16 %v4775, %v4774
      %v5016 = vpack.c.b16 %v4777, %v4776
      %v5017 = vpack.c.b16 %v4779, %v4778
      %v5018 = vpack.c.b16 %v4781, %v4780
      %v5019 = vpack.c.b16 %v4783, %v4782
      %v5020 = vpack.c.b16 %v4785, %v4784
      %v5021 = vpack.c.b16 %v4787, %v4786
      %v5022 = vpack.c.b16 %v4789, %v4788
      %v5023 = vpack.c.b16 %v4791, %v4790
      %v5024 = vpack.c.b16 %v4793, %v4792
      %v5025 = vpack.c.b16 %v4795, %v4794
      %v5026 = vpack.c.b16 %v4797, %v4796
      %v5027 = vpack.c.b16 %v4799, %v4798
      %v5028 = vpack.c.b16 %v4801, %v4800
      %v5029 = vpack.c.b16 %v4803, %v4802
      %v5030 = vpack.c.b16 %v4805, %v4804
      %v5031 = vpack.c.b16 %v4807, %v4806
      %v5032 = vpack.c.b16 %v4809, %v4808
      %v5033 = vpack.c.b16 %v4811, %v4810
      %v5034 = vpack.c.b16 %v4813, %v4812
      %v5035 = vpack.c.b16 %v4815, %v4814
      %v5036 = vpack.c.b16 %v4817, %v4816
      %v5037 = vpack.c.b16 %v4819, %v4818
      %v5038 = vpack.c.b16 %v4821, %v4820
      %v5039 = vpack.c.b16 %v4823, %v4822
      %v5040 = vpack.c.b16 %v4825, %v4824
      %v5041 = vpack.c.b16 %v4827, %v4826
      %v5042 = vpack.c.b16 %v4829, %v4828
      %v5043 = vpack.c.b16 %v4831, %v4830
      %v5044 = vpack.c.b16 %v4833, %v4832
      %v5045 = vpack.c.b16 %v4835, %v4834
      %v5046 = vpack.c.b16 %v4837, %v4836
      %v5047 = vpack.c.b16 %v4839, %v4838
      %v5048 = vpack.c.b16 %v4841, %v4840
      %v5049 = vpack.c.b16 %v4843, %v4842
      %v5050 = vpack.c.b16 %v4845, %v4844
      %v5051 = vpack.c.b16 %v4847, %v4846
      %v5052 = vpack.c.b16 %v4849, %v4848
      %v5053 = vpack.c.b16 %v4851, %v4850
      %v5054 = vpack.c.b16 %v4853, %v4852
      %v5055 = vpack.c.b16 %v4855, %v4854
      %v5056 = vpack.c.b16 %v4857, %v4856
      %v5057 = vpack.c.b16 %v4859, %v4858
      %v5058 = vpack.c.b16 %v4861, %v4860
      %v5059 = vpack.c.b16 %v4863, %v4862
      %v5060 = vpack.c.b16 %v4865, %v4864
      %v5061 = vpack.c.b16 %v4867, %v4866
      %v5062 = vpack.c.b16 %v4869, %v4868
      %v5063 = vpack.c.b16 %v4871, %v4870
      %v5064 = vpack.c.b16 %v4873, %v4872
      %v5065 = vpack.c.b16 %v4875, %v4874
      %v5066 = vpack.c.b16 %v4877, %v4876
      %v5067 = vpack.c.b16 %v4879, %v4878
      %v5068 = vpack.c.b16 %v4881, %v4880
      %v5069 = vpack.c.b16 %v4883, %v4882
      %v5070 = vpack.c.b16 %v4885, %v4884
      %v5071 = vpack.c.b16 %v4887, %v4886
      %v5072 = vpack.c.b16 %v4889, %v4888
      %v5073 = vpack.c.b16 %v4891, %v4890
      %v5074 = vpack.c.b16 %v4893, %v4892
      %v5075 = vpack.c.b16 %v4895, %v4894
      %v5076 = vpack.c.b16 %v4897, %v4896
      %v5077 = vpack.c.b16 %v4899, %v4898
      %v5078 = vpack.c.b16 %v4901, %v4900
      %v5079 = vpack.c.b16 %v4903, %v4902
      %v5080 = vpack.c.b16 %v4905, %v4904
      %v5081 = vpack.c.b16 %v4907, %v4906
      %v5082 = vpack.c.b16 %v4909, %v4908
      %v5083 = vpack.c.b16 %v4911, %v4910
      %v5084 = vpack.c.b16 %v4913, %v4912
      %v5085 = vpack.c.b16 %v4915, %v4914
      %v5086 = vpack.c.b16 %v4917, %v4916
      %v5087 = vpack.c.b16 %v4919, %v4918
      %v5088 = vpack.c.b16 %v4921, %v4920
      %v5089 = vpack.c.b16 %v4923, %v4922
      %v5090 = vpack.c.b16 %v4925, %v4924
      %v5091 = vpack.c.b16 %v4927, %v4926
      %v5092 = vpack.c.b16 %v4929, %v4928
      %v5093 = vpack.c.b16 %v4931, %v4930
      %v5094 = vpack.c.b16 %v4933, %v4932
      %v5095 = vpack.c.b16 %v4935, %v4934
      %v5096 = vpack.c.b16 %v4937, %v4936
      %v5097 = vpack.c.b16 %v4939, %v4938
      %v5098 = vpack.c.b16 %v4941, %v4940
      %v5099 = vpack.c.b16 %v4943, %v4942
      %v5100 = vpack.c.b16 %v4945, %v4944
      %v5101 = vpack.c.b16 %v4947, %v4946
      %v5102 = vpack.c.b16 %v4949, %v4948
      %v5103 = vpack.c.b16 %v4951, %v4950
      %v5104 = vpack.c.b16 %v4953, %v4952
      %v5105 = vpack.c.b16 %v4955, %v4954
      %v5106 = vpack.c.b16 %v4957, %v4956
      %v5107 = vpack.c.b16 %v4959, %v4958
      %v5108 = vpack.c.b16 %v4961, %v4960
      %v5109 = vpack.c.b16 %v4963, %v4962
      %v5110 = vpack.c.b16 %v4965, %v4964
      %v5111 = vpack.c.b16 %v4967, %v4966
      %v5112 = vpack.c.b16 %v4969, %v4968
      %v5113 = vpack.c.b16 %v4971, %v4970
      %v5114 = vpack.c.b16 %v4973, %v4972
      %v5115 = vpack.c.b16 %v4975, %v4974
      %v5116 = vpack.c.b16 %v4977, %v4976
      %v5117 = vpack.c.b16 %v4979, %v4978
      %v5118 = vpack.c.b16 %v4981, %v4980
      %v5119 = vpack.c.b16 %v4983, %v4982
      %v5120 = vpack.c.b16 %v4985, %v4984
      %v5121 = vpack.c.b16 %v4987, %v4986
      %v5122 = vpack.c.b16 %v4989, %v4988
      %v5123 = vpack.c.b16 %v4991, %v4990
      %v5124 = vpack.c.b16 %v4993, %v4992
      %v5125 = vpack.c.b16 %v4995, %v4994
      %v5126 = vpack.c.b16 %v4997, %v4996
      %v5127 = vpack.c.b16 %v4999, %v4998
      %5256 = vmatprep.subr.bf16.mxu0 0
      %5257 = vmatpush1.bf16.msra.mxu0 %v5000
      %5258 = vmatprep.subr.bf16.mxu0 0
      %5259 = vmatpush1.bf16.msra.mxu0 %v5001
      %5260 = vmatprep.subr.bf16.mxu0 0
      %5261 = vmatpush1.bf16.msra.mxu0 %v5002
      %5262 = vmatprep.subr.bf16.mxu0 0
      %5263 = vmatpush1.bf16.msra.mxu0 %v5003
      %5264 = vmatprep.subr.bf16.mxu0 0
      %5265 = vmatpush1.bf16.msra.mxu0 %v5004
      %5266 = vmatprep.subr.bf16.mxu0 0
      %5267 = vmatpush1.bf16.msra.mxu0 %v5005
      %5268 = vmatprep.subr.bf16.mxu0 0
      %5269 = vmatpush1.bf16.msra.mxu0 %v5006
      %5270 = vmatprep.subr.bf16.mxu0 0
      %5271 = vmatpush1.bf16.msra.mxu0 %v5007
      %5272 = vmatprep.subr.bf16.mxu0 0
      %5273 = vmatpush1.bf16.msra.mxu0 %v5008
      %5274 = vmatprep.subr.bf16.mxu0 0
      %5275 = vmatpush1.bf16.msra.mxu0 %v5009
      %5276 = vmatprep.subr.bf16.mxu0 0
      %5277 = vmatpush1.bf16.msra.mxu0 %v5010
      %5278 = vmatprep.subr.bf16.mxu0 0
      %5279 = vmatpush1.bf16.msra.mxu0 %v5011
      %5280 = vmatprep.subr.bf16.mxu0 0
      %5281 = vmatpush1.bf16.msra.mxu0 %v5012
      %5282 = vmatprep.subr.bf16.mxu0 0
      %5283 = vmatpush1.bf16.msra.mxu0 %v5013
      %5284 = vmatprep.subr.bf16.mxu0 0
      %5285 = vmatpush1.bf16.msra.mxu0 %v5014
      %5286 = vmatprep.subr.bf16.mxu0 0
      %5287 = vmatpush1.bf16.msra.mxu0 %v5015
      %5288 = vmatprep.mubr.bf16.mxu0 %v4208
      %5289 = vmatmul.mubr.bf16.gmra.mrb[0].mxu0 %v4207
      %v5290 = vpop.f32.mrb[0].mxu0
      %v5291 = vadd.f32 %v4486, %v5290
      %v5292 = vpop.f32.mrb[0].mxu0
      %v5293 = vpop.f32.mrb[0].mxu0
      %v5294 = vpop.f32.mrb[0].mxu0
      %5295 = vdwg.mxu0
      %5296 = vmatprep.subr.bf16.mxu0 0
      %5297 = vmatpush1.bf16.msra.mxu0 %v5016
      %5298 = vmatprep.subr.bf16.mxu0 0
      %5299 = vmatpush1.bf16.msra.mxu0 %v5017
      %5300 = vmatprep.subr.bf16.mxu0 0
      %5301 = vmatpush1.bf16.msra.mxu0 %v5018
      %5302 = vmatprep.subr.bf16.mxu0 0
      %5303 = vmatpush1.bf16.msra.mxu0 %v5019
      %5304 = vmatprep.subr.bf16.mxu0 0
      %5305 = vmatpush1.bf16.msra.mxu0 %v5020
      %5306 = vmatprep.subr.bf16.mxu0 0
      %5307 = vmatpush1.bf16.msra.mxu0 %v5021
      %5308 = vmatprep.subr.bf16.mxu0 0
      %5309 = vmatpush1.bf16.msra.mxu0 %v5022
      %5310 = vmatprep.subr.bf16.mxu0 0
      %5311 = vmatpush1.bf16.msra.mxu0 %v5023
      %5312 = vmatprep.subr.bf16.mxu0 0
      %5313 = vmatpush1.bf16.msra.mxu0 %v5024
      %5314 = vmatprep.subr.bf16.mxu0 0
      %5315 = vmatpush1.bf16.msra.mxu0 %v5025
      %5316 = vmatprep.subr.bf16.mxu0 0
      %5317 = vmatpush1.bf16.msra.mxu0 %v5026
      %5318 = vmatprep.subr.bf16.mxu0 0
      %5319 = vmatpush1.bf16.msra.mxu0 %v5027
      %5320 = vmatprep.subr.bf16.mxu0 0
      %5321 = vmatpush1.bf16.msra.mxu0 %v5028
      %5322 = vmatprep.subr.bf16.mxu0 0
      %5323 = vmatpush1.bf16.msra.mxu0 %v5029
      %5324 = vmatprep.subr.bf16.mxu0 0
      %5325 = vmatpush1.bf16.msra.mxu0 %v5030
      %5326 = vmatprep.subr.bf16.mxu0 0
      %5327 = vmatpush1.bf16.msra.mxu0 %v5031
      %5328 = vmatprep.mubr.bf16.mxu0 %v4210
      %5329 = vmatmul.mubr.bf16.gmra.mrb[0].mxu0 %v4209
      %v5330 = vpop.f32.mrb[0].mxu0
      %v5331 = vadd.f32 %v5291, %v5330
      %v5332 = vpop.f32.mrb[0].mxu0
      %v5333 = vpop.f32.mrb[0].mxu0
      %v5334 = vpop.f32.mrb[0].mxu0
      %5335 = vdwg.mxu0
      %5336 = vmatprep.subr.bf16.mxu0 0
      %5337 = vmatpush1.bf16.msra.mxu0 %v5032
      %5338 = vmatprep.subr.bf16.mxu0 0
      %5339 = vmatpush1.bf16.msra.mxu0 %v5033
      %5340 = vmatprep.subr.bf16.mxu0 0
      %5341 = vmatpush1.bf16.msra.mxu0 %v5034
      %5342 = vmatprep.subr.bf16.mxu0 0
      %5343 = vmatpush1.bf16.msra.mxu0 %v5035
      %5344 = vmatprep.subr.bf16.mxu0 0
      %5345 = vmatpush1.bf16.msra.mxu0 %v5036
      %5346 = vmatprep.subr.bf16.mxu0 0
      %5347 = vmatpush1.bf16.msra.mxu0 %v5037
      %5348 = vmatprep.subr.bf16.mxu0 0
      %5349 = vmatpush1.bf16.msra.mxu0 %v5038
      %5350 = vmatprep.subr.bf16.mxu0 0
      %5351 = vmatpush1.bf16.msra.mxu0 %v5039
      %5352 = vmatprep.subr.bf16.mxu0 0
      %5353 = vmatpush1.bf16.msra.mxu0 %v5040
      %5354 = vmatprep.subr.bf16.mxu0 0
      %5355 = vmatpush1.bf16.msra.mxu0 %v5041
      %5356 = vmatprep.subr.bf16.mxu0 0
      %5357 = vmatpush1.bf16.msra.mxu0 %v5042
      %5358 = vmatprep.subr.bf16.mxu0 0
      %5359 = vmatpush1.bf16.msra.mxu0 %v5043
      %5360 = vmatprep.subr.bf16.mxu0 0
      %5361 = vmatpush1.bf16.msra.mxu0 %v5044
      %5362 = vmatprep.subr.bf16.mxu0 0
      %5363 = vmatpush1.bf16.msra.mxu0 %v5045
      %5364 = vmatprep.subr.bf16.mxu0 0
      %5365 = vmatpush1.bf16.msra.mxu0 %v5046
      %5366 = vmatprep.subr.bf16.mxu0 0
      %5367 = vmatpush1.bf16.msra.mxu0 %v5047
      %5368 = vmatprep.mubr.bf16.mxu0 %v4212
      %5369 = vmatmul.mubr.bf16.gmra.mrb[0].mxu0 %v4211
      %v5370 = vpop.f32.mrb[0].mxu0
      %v5371 = vadd.f32 %v5331, %v5370
      %v5372 = vpop.f32.mrb[0].mxu0
      %v5373 = vpop.f32.mrb[0].mxu0
      %v5374 = vpop.f32.mrb[0].mxu0
      %5375 = vdwg.mxu0
      %5376 = vmatprep.subr.bf16.mxu0 0
      %5377 = vmatpush1.bf16.msra.mxu0 %v5048
      %5378 = vmatprep.subr.bf16.mxu0 0
      %5379 = vmatpush1.bf16.msra.mxu0 %v5049
      %5380 = vmatprep.subr.bf16.mxu0 0
      %5381 = vmatpush1.bf16.msra.mxu0 %v5050
      %5382 = vmatprep.subr.bf16.mxu0 0
      %5383 = vmatpush1.bf16.msra.mxu0 %v5051
      %5384 = vmatprep.subr.bf16.mxu0 0
      %5385 = vmatpush1.bf16.msra.mxu0 %v5052
      %5386 = vmatprep.subr.bf16.mxu0 0
      %5387 = vmatpush1.bf16.msra.mxu0 %v5053
      %5388 = vmatprep.subr.bf16.mxu0 0
      %5389 = vmatpush1.bf16.msra.mxu0 %v5054
      %5390 = vmatprep.subr.bf16.mxu0 0
      %5391 = vmatpush1.bf16.msra.mxu0 %v5055
      %5392 = vmatprep.subr.bf16.mxu0 0
      %5393 = vmatpush1.bf16.msra.mxu0 %v5056
      %5394 = vmatprep.subr.bf16.mxu0 0
      %5395 = vmatpush1.bf16.msra.mxu0 %v5057
      %5396 = vmatprep.subr.bf16.mxu0 0
      %5397 = vmatpush1.bf16.msra.mxu0 %v5058
      %5398 = vmatprep.subr.bf16.mxu0 0
      %5399 = vmatpush1.bf16.msra.mxu0 %v5059
      %5400 = vmatprep.subr.bf16.mxu0 0
      %5401 = vmatpush1.bf16.msra.mxu0 %v5060
      %5402 = vmatprep.subr.bf16.mxu0 0
      %5403 = vmatpush1.bf16.msra.mxu0 %v5061
      %5404 = vmatprep.subr.bf16.mxu0 0
      %5405 = vmatpush1.bf16.msra.mxu0 %v5062
      %5406 = vmatprep.subr.bf16.mxu0 0
      %5407 = vmatpush1.bf16.msra.mxu0 %v5063
      %5408 = vmatprep.mubr.bf16.mxu0 %v4214
      %5409 = vmatmul.mubr.bf16.gmra.mrb[0].mxu0 %v4213
      %v5410 = vpop.f32.mrb[0].mxu0
      %v5411 = vadd.f32 %v5371, %v5410
      %v5412 = vpop.f32.mrb[0].mxu0
      %v5413 = vpop.f32.mrb[0].mxu0
      %v5414 = vpop.f32.mrb[0].mxu0
      %5415 = vdwg.mxu0
      %5416 = vmatprep.subr.bf16.mxu0 0
      %5417 = vmatpush1.bf16.msra.mxu0 %v5064
      %5418 = vmatprep.subr.bf16.mxu0 0
      %5419 = vmatpush1.bf16.msra.mxu0 %v5065
      %5420 = vmatprep.subr.bf16.mxu0 0
      %5421 = vmatpush1.bf16.msra.mxu0 %v5066
      %5422 = vmatprep.subr.bf16.mxu0 0
      %5423 = vmatpush1.bf16.msra.mxu0 %v5067
      %5424 = vmatprep.subr.bf16.mxu0 0
      %5425 = vmatpush1.bf16.msra.mxu0 %v5068
      %5426 = vmatprep.subr.bf16.mxu0 0
      %5427 = vmatpush1.bf16.msra.mxu0 %v5069
      %5428 = vmatprep.subr.bf16.mxu0 0
      %5429 = vmatpush1.bf16.msra.mxu0 %v5070
      %5430 = vmatprep.subr.bf16.mxu0 0
      %5431 = vmatpush1.bf16.msra.mxu0 %v5071
      %5432 = vmatprep.subr.bf16.mxu0 0
      %5433 = vmatpush1.bf16.msra.mxu0 %v5072
      %5434 = vmatprep.subr.bf16.mxu0 0
      %5435 = vmatpush1.bf16.msra.mxu0 %v5073
      %5436 = vmatprep.subr.bf16.mxu0 0
      %5437 = vmatpush1.bf16.msra.mxu0 %v5074
      %5438 = vmatprep.subr.bf16.mxu0 0
      %5439 = vmatpush1.bf16.msra.mxu0 %v5075
      %5440 = vmatprep.subr.bf16.mxu0 0
      %5441 = vmatpush1.bf16.msra.mxu0 %v5076
      %5442 = vmatprep.subr.bf16.mxu0 0
      %5443 = vmatpush1.bf16.msra.mxu0 %v5077
      %5444 = vmatprep.subr.bf16.mxu0 0
      %5445 = vmatpush1.bf16.msra.mxu0 %v5078
      %5446 = vmatprep.subr.bf16.mxu0 0
      %5447 = vmatpush1.bf16.msra.mxu0 %v5079
      %5448 = vmatprep.mubr.bf16.mxu0 %v4216
      %5449 = vmatmul.mubr.bf16.gmra.mrb[0].mxu0 %v4215
      %v5450 = vpop.f32.mrb[0].mxu0
      %v5451 = vadd.f32 %v5411, %v5450
      %v5452 = vpop.f32.mrb[0].mxu0
      %v5453 = vpop.f32.mrb[0].mxu0
      %v5454 = vpop.f32.mrb[0].mxu0
      %5455 = vdwg.mxu0
      %5456 = vmatprep.subr.bf16.mxu0 0
      %5457 = vmatpush1.bf16.msra.mxu0 %v5080
      %5458 = vmatprep.subr.bf16.mxu0 0
      %5459 = vmatpush1.bf16.msra.mxu0 %v5081
      %5460 = vmatprep.subr.bf16.mxu0 0
      %5461 = vmatpush1.bf16.msra.mxu0 %v5082
      %5462 = vmatprep.subr.bf16.mxu0 0
      %5463 = vmatpush1.bf16.msra.mxu0 %v5083
      %5464 = vmatprep.subr.bf16.mxu0 0
      %5465 = vmatpush1.bf16.msra.mxu0 %v5084
      %5466 = vmatprep.subr.bf16.mxu0 0
      %5467 = vmatpush1.bf16.msra.mxu0 %v5085
      %5468 = vmatprep.subr.bf16.mxu0 0
      %5469 = vmatpush1.bf16.msra.mxu0 %v5086
      %5470 = vmatprep.subr.bf16.mxu0 0
      %5471 = vmatpush1.bf16.msra.mxu0 %v5087
      %5472 = vmatprep.subr.bf16.mxu0 0
      %5473 = vmatpush1.bf16.msra.mxu0 %v5088
      %5474 = vmatprep.subr.bf16.mxu0 0
      %5475 = vmatpush1.bf16.msra.mxu0 %v5089
      %5476 = vmatprep.subr.bf16.mxu0 0
      %5477 = vmatpush1.bf16.msra.mxu0 %v5090
      %5478 = vmatprep.subr.bf16.mxu0 0
      %5479 = vmatpush1.bf16.msra.mxu0 %v5091
      %5480 = vmatprep.subr.bf16.mxu0 0
      %5481 = vmatpush1.bf16.msra.mxu0 %v5092
      %5482 = vmatprep.subr.bf16.mxu0 0
      %5483 = vmatpush1.bf16.msra.mxu0 %v5093
      %5484 = vmatprep.subr.bf16.mxu0 0
      %5485 = vmatpush1.bf16.msra.mxu0 %v5094
      %5486 = vmatprep.subr.bf16.mxu0 0
      %5487 = vmatpush1.bf16.msra.mxu0 %v5095
      %5488 = vmatprep.mubr.bf16.mxu0 %v4218
      %5489 = vmatmul.mubr.bf16.gmra.mrb[0].mxu0 %v4217
      %v5490 = vpop.f32.mrb[0].mxu0
      %v5491 = vadd.f32 %v5451, %v5490
      %v5492 = vpop.f32.mrb[0].mxu0
      %v5493 = vpop.f32.mrb[0].mxu0
      %v5494 = vpop.f32.mrb[0].mxu0
      %5495 = vdwg.mxu0
      %5496 = vmatprep.subr.bf16.mxu0 0
      %5497 = vmatpush1.bf16.msra.mxu0 %v5096
      %5498 = vmatprep.subr.bf16.mxu0 0
      %5499 = vmatpush1.bf16.msra.mxu0 %v5097
      %5500 = vmatprep.subr.bf16.mxu0 0
      %5501 = vmatpush1.bf16.msra.mxu0 %v5098
      %5502 = vmatprep.subr.bf16.mxu0 0
      %5503 = vmatpush1.bf16.msra.mxu0 %v5099
      %5504 = vmatprep.subr.bf16.mxu0 0
      %5505 = vmatpush1.bf16.msra.mxu0 %v5100
      %5506 = vmatprep.subr.bf16.mxu0 0
      %5507 = vmatpush1.bf16.msra.mxu0 %v5101
      %5508 = vmatprep.subr.bf16.mxu0 0
      %5509 = vmatpush1.bf16.msra.mxu0 %v5102
      %5510 = vmatprep.subr.bf16.mxu0 0
      %5511 = vmatpush1.bf16.msra.mxu0 %v5103
      %5512 = vmatprep.subr.bf16.mxu0 0
      %5513 = vmatpush1.bf16.msra.mxu0 %v5104
      %5514 = vmatprep.subr.bf16.mxu0 0
      %5515 = vmatpush1.bf16.msra.mxu0 %v5105
      %5516 = vmatprep.subr.bf16.mxu0 0
      %5517 = vmatpush1.bf16.msra.mxu0 %v5106
      %5518 = vmatprep.subr.bf16.mxu0 0
      %5519 = vmatpush1.bf16.msra.mxu0 %v5107
      %5520 = vmatprep.subr.bf16.mxu0 0
      %5521 = vmatpush1.bf16.msra.mxu0 %v5108
      %5522 = vmatprep.subr.bf16.mxu0 0
      %5523 = vmatpush1.bf16.msra.mxu0 %v5109
      %5524 = vmatprep.subr.bf16.mxu0 0
      %5525 = vmatpush1.bf16.msra.mxu0 %v5110
      %5526 = vmatprep.subr.bf16.mxu0 0
      %5527 = vmatpush1.bf16.msra.mxu0 %v5111
      %5528 = vmatprep.mubr.bf16.mxu0 %v4220
      %5529 = vmatmul.mubr.bf16.gmra.mrb[0].mxu0 %v4219
      %v5530 = vpop.f32.mrb[0].mxu0
      %v5531 = vadd.f32 %v5491, %v5530
      %v5532 = vpop.f32.mrb[0].mxu0
      %v5533 = vpop.f32.mrb[0].mxu0
      %v5534 = vpop.f32.mrb[0].mxu0
      %5535 = vdwg.mxu0
      %5536 = vmatprep.subr.bf16.mxu0 0
      %5537 = vmatpush1.bf16.msra.mxu0 %v5112
      %5538 = vmatprep.subr.bf16.mxu0 0
      %5539 = vmatpush1.bf16.msra.mxu0 %v5113
      %5540 = vmatprep.subr.bf16.mxu0 0
      %5541 = vmatpush1.bf16.msra.mxu0 %v5114
      %5542 = vmatprep.subr.bf16.mxu0 0
      %5543 = vmatpush1.bf16.msra.mxu0 %v5115
      %5544 = vmatprep.subr.bf16.mxu0 0
      %5545 = vmatpush1.bf16.msra.mxu0 %v5116
      %5546 = vmatprep.subr.bf16.mxu0 0
      %5547 = vmatpush1.bf16.msra.mxu0 %v5117
      %5548 = vmatprep.subr.bf16.mxu0 0
      %5549 = vmatpush1.bf16.msra.mxu0 %v5118
      %5550 = vmatprep.subr.bf16.mxu0 0
      %5551 = vmatpush1.bf16.msra.mxu0 %v5119
      %5552 = vmatprep.subr.bf16.mxu0 0
      %5553 = vmatpush1.bf16.msra.mxu0 %v5120
      %5554 = vmatprep.subr.bf16.mxu0 0
      %5555 = vmatpush1.bf16.msra.mxu0 %v5121
      %5556 = vmatprep.subr.bf16.mxu0 0
      %5557 = vmatpush1.bf16.msra.mxu0 %v5122
      %5558 = vmatprep.subr.bf16.mxu0 0
      %5559 = vmatpush1.bf16.msra.mxu0 %v5123
      %5560 = vmatprep.subr.bf16.mxu0 0
      %5561 = vmatpush1.bf16.msra.mxu0 %v5124
      %5562 = vmatprep.subr.bf16.mxu0 0
      %5563 = vmatpush1.bf16.msra.mxu0 %v5125
      %5564 = vmatprep.subr.bf16.mxu0 0
      %5565 = vmatpush1.bf16.msra.mxu0 %v5126
      %5566 = vmatprep.subr.bf16.mxu0 0
      %5567 = vmatpush1.bf16.msra.mxu0 %v5127
      %5568 = vmatprep.mubr.bf16.mxu0 %v4222
      %5569 = vmatmul.mubr.bf16.gmra.mrb[0].mxu0 %v4221
      %v5570 = vpop.f32.mrb[0].mxu0
      %v5571 = vadd.f32 %v5531, %v5570
      %v5572 = vpop.f32.mrb[0].mxu0
      %v5573 = vpop.f32.mrb[0].mxu0
      %v5574 = vpop.f32.mrb[0].mxu0
      %5575 = vdwg.mxu0
      %v5576 = vadd.f32 %v3580, %v5571
      %s5577 = scalar_lea.vmem %s18, 1
      %v5578 = vld [vmem:[%s5577] sm:$0x1]
      %s5579 = scalar_lea.vmem %s19, 1
      %v5580 = vld [vmem:[%s5579] sm:$0x1]
      %v5581 = vsel %vm705, %v5576, 0.0
      %5582 = vadd.xlane.f32.xlu0 %v5581
      %v5583 = vpop.xlane.xlu0 %5582
      %v5584 = vmul.f32 %v5583, %v1127
      %v5585 = vsub.f32 %v5576, %v5584
      %v5586 = vmul.f32 %v5585, %v5585
      %v5587 = vsel %vm705, %v5586, 0.0
      %5588 = vadd.xlane.f32.xlu0 %v5587
      %v5589 = vpop.xlane.xlu0 %5588
      %v5590 = vmul.f32 %v5589, %v1127
      %v5591 = vadd.f32 %v5590, 1e-05
      %v5592 = vrsqrt.pop %v5591
      %v5593 = vmul.f32 %v5585, %v5592
      %v5595 = vlaneseq
      %v5596 = vshrl.u32 %v5595, 7
      %v5597 = vsub.s32 0, %v5596
      %v5598 = vrot.slane %v5578, %v5597
      %v5600 = vmul.f32 %v5593, %v5598
      %v5602 = vlaneseq
      %v5603 = vshrl.u32 %v5602, 7
      %v5604 = vsub.s32 0, %v5603
      %v5605 = vrot.slane %v5580, %v5604
      %v5607 = vadd.f32 %v5600, %v5605
      %v5608 = vpack.c.bf16 %v5607, %v5607
      %v5609 = vld [vmem:[%s20] sm:$0xf]
      %v5610 = vld [vmem:[%s20 + $0x4] sm:$0xf]
      %v5611 = vld [vmem:[%s20 + $0x8] sm:$0xf]
      %v5612 = vld [vmem:[%s20 + $0xc] sm:$0xf]
      %v5613 = vld [vmem:[%s21] sm:$0x1]
      %v5615 = vlaneseq
      %v5616 = vshrl.u32 %v5615, 7
      %v5617 = vsub.s32 0, %v5616
      %v5618 = vrot.slane %v5613, %v5617
      %v5624 = vunpack.c.l.b16 %v5609
      %v5625 = vunpack.c.l.b16 %v5610
      %v5626 = vunpack.c.l.b16 %v5611
      %v5627 = vunpack.c.l.b16 %v5612
      %v5628 = vpack.c.b16 %v5625, %v5624
      %v5629 = vpack.c.b16 %v5627, %v5626
      %v5633 = vsel %vm705, %v5608, 0
      %5635 = vmatprep.subr.bf16.mxu0 0
      %5636 = vmatpush1.bf16.msra.mxu0 %v5628
      %5637 = vmatprep.subr.bf16.mxu0 0
      %5638 = vmatpush1.bf16.msra.mxu0 %v5629
      %5639 = vmatprep.subr.bf16.mxu0 0
      %5640 = vmatpush1.bf16.msra.mxu0 0
      %5641 = vmatprep.subr.bf16.mxu0 0
      %5642 = vmatpush1.bf16.msra.mxu0 0
      %5643 = vmatprep.subr.bf16.mxu0 0
      %5644 = vmatpush1.bf16.msra.mxu0 0
      %5645 = vmatprep.subr.bf16.mxu0 0
      %5646 = vmatpush1.bf16.msra.mxu0 0
      %5647 = vmatprep.subr.bf16.mxu0 0
      %5648 = vmatpush1.bf16.msra.mxu0 0
      %5649 = vmatprep.subr.bf16.mxu0 0
      %5650 = vmatpush1.bf16.msra.mxu0 0
      %5651 = vmatprep.subr.bf16.mxu0 0
      %5652 = vmatpush1.bf16.msra.mxu0 0
      %5653 = vmatprep.subr.bf16.mxu0 0
      %5654 = vmatpush1.bf16.msra.mxu0 0
      %5655 = vmatprep.subr.bf16.mxu0 0
      %5656 = vmatpush1.bf16.msra.mxu0 0
      %5657 = vmatprep.subr.bf16.mxu0 0
      %5658 = vmatpush1.bf16.msra.mxu0 0
      %5659 = vmatprep.subr.bf16.mxu0 0
      %5660 = vmatpush1.bf16.msra.mxu0 0
      %5661 = vmatprep.subr.bf16.mxu0 0
      %5662 = vmatpush1.bf16.msra.mxu0 0
      %5663 = vmatprep.subr.bf16.mxu0 0
      %5664 = vmatpush1.bf16.msra.mxu0 0
      %5665 = vmatprep.subr.bf16.mxu0 0
      %5666 = vmatpush1.bf16.msra.mxu0 0
      %5667 = vmatprep.mubr.bf16.mxu0 0
      %5668 = vmatmul.mubr.bf16.gmra.mrb[0].mxu0 %v5633
      %v5669 = vpop.f32.mrb[0].mxu0
      %v5670 = vadd.f32 %v5618, %v5669
      %v5671 = vpop.f32.mrb[0].mxu0
      %v5672 = vpop.f32.mrb[0].mxu0
      %v5673 = vpop.f32.mrb[0].mxu0
      %5674 = vdwg.mxu0
      %vm5675 = vcmask 31744
      %5676 = vst.msk [vmem:[%s678] sm:$0xff] %vm5675, %v5670
      %p5677 = scmp.lt.s32.totalorder %s33, 1
      %s5678 = scalar_select %p5677, %s33, 1
      %s5679 = smul.addr %s5678, 8
      %s5680 = scalar_lea.vmem %s22, %s5679
      // Predicated region
      $region109: #{model_forward.1} parent=107 // pred_check
        %p5681 = pneg %p518
      $region110: #{model_forward.1} parent=107 // pred_check_branch
        %5683 = sbr.rel (%p5681) target = $region112
      $region111: #{model_forward.1} parent=107 // pred_region
        _
      $region112: #{model_forward.1} parent=107 // pred_fallthru
        _
    $region108: #{model_forward.1} parent=5 // pred_fallthru
      _
    %p5684 = scmp.le.s32.totalorder 2, %s28
    // Predicated region
    $region113: #{model_forward.1} parent=5 // pred_check
      %p5685 = pneg %p5684
    $region114: #{model_forward.1} parent=5 // pred_check_branch
      %5687 = sbr.rel (%p5685) target = $region116
    $region115: #{model_forward.1} parent=5 // pred_region
      %s5688 = ssub.s32 %s28, 2
      // Predicated region
      $region117: #{model_forward.1} parent=115 // pred_check
        %p5689 = pneg %p524
      $region118: #{model_forward.1} parent=115 // pred_check_branch
        %5691 = sbr.rel (%p5689) target = $region120
      $region119: #{model_forward.1} parent=115 // pred_region
        %p5692 = scmp.lt.s32.totalorder %s34, 1
        %s5693 = scalar_select %p5692, %s34, 1
        %s5694 = smul.addr %s5693, 8
        %s5695 = scalar_lea.vmem %s22, %s5694
      $region120: #{model_forward.1} parent=115 // pred_fallthru
        _
    $region116: #{model_forward.1} parent=5 // pred_fallthru
      _
  $region6: #{model_forward.1} parent=0 // loop_footer
    %s32 = sadd.s32 1, %s28
  $region7: #{model_forward.1} parent=0 // loop_footer_branch
    %27 = sbr.rel target = $region3
  $region8: #{model_forward.1} parent=0 // loop_exit
    _

</llo_original>
